<compile_context>
chip_gen: v7x
topology: tpu7x:2x2x1
jax: 0.10.0
libtpu: 0.0.40
codegen_flags: <defaults>
</compile_context>

<pallas_src>
import functools

import jax
import jax.numpy as jnp
from jax.experimental import pallas as pl
from jax.experimental.pallas import tpu as pltpu

# ----------------------------- model hyper-params -----------------------------
B = 2            # batch
IN_CHANS = 3     # image channels
IMG = 16         # image height/width
PATCH = 8        # patch size -> 2x2 = 4 patches
D = 128          # backbone.out_dim (lane-dense hidden width)
DEPTH = 2        # transformer blocks in the synthetic backbone
HEADS = 2        # attention heads (head_dim = 64)
MLP_RATIO = 4    # MLP hidden = 512
NUM_CLASSES = 10

MM_DTYPE = jnp.bfloat16   # MXU operand dtype (f32 accumulation via preferred_element_type)


# ------------------------------ in-kernel helpers ------------------------------
def _mm(a, w):
    """2-D matmul on the MXU: bf16 operands, f32 accumulation."""
    return jnp.dot(a.astype(MM_DTYPE), w.astype(MM_DTYPE),
                   preferred_element_type=jnp.float32)


def _ln(x, g, b, eps=1e-5):
    """LayerNorm over the last axis, f32 math. g/b are (1, D) and broadcast."""
    x = x.astype(jnp.float32)
    mu = jnp.mean(x, axis=-1, keepdims=True)
    var = jnp.mean(jnp.square(x - mu), axis=-1, keepdims=True)
    return (x - mu) * jax.lax.rsqrt(var + eps) * g + b


def _erf(x):
    """Abramowitz & Stegun 7.1.26 erf approximation (|err| < 1.5e-7), Mosaic-safe ops."""
    ax = jnp.abs(x)
    t = 1.0 / (1.0 + 0.3275911 * ax)
    poly = ((((1.061405429 * t - 1.453152027) * t + 1.421413741) * t
             - 0.284496736) * t + 0.254829592) * t
    y = 1.0 - poly * jnp.exp(-ax * ax)
    return jnp.where(x < 0, -y, y)


def _gelu_exact(x):
    """Exact-erf GELU to match PyTorch nn.GELU() default numerics."""
    return 0.5 * x * (1.0 + _erf(x * 0.7071067811865476))


# ------------------------------- fused kernel ----------------------------------
def _fused_forward_kernel(
        patches_ref, patch_w, patch_b, cls_ref, pos_ref,
        ln1_g, ln1_b, qkv_w, qkv_b, proj_w, proj_b,
        ln2_g, ln2_b, fc1_w, fc1_b, fc2_w, fc2_b,
        norm_g, norm_b, p1_g, p1_b, p2_g, p2_b, head_w, head_b,
        o_ref, tok_ref, *, heads):
    """Whole forward for one batch element, one transformer block per grid step.

    grid = (B, DEPTH): axis 0 = batch (parallel), axis 1 = depth (arbitrary carry).
    tok_ref is the resident (T, D) f32 activation carry in VMEM scratch.
    """
    d = pl.program_id(1)
    T, Dm = tok_ref.shape
    Dh = Dm // heads
    scale = Dh ** -0.5

    # ---------- d == 0: patch embedding + CLS token + positional embedding ----------
    @pl.when(d == 0)
    def _():
        p = patches_ref[...]                                     # (N, C*P*P)
        emb = _mm(p, patch_w[...]) + patch_b[...]                # (N, D) f32
        pos = pos_ref[0].astype(jnp.float32)                     # (T, D)
        # write CLS row and patch rows into disjoint sublane slices (no concat)
        tok_ref[0:1, :] = cls_ref[0].astype(jnp.float32) + pos[0:1, :]
        tok_ref[1:, :] = emb + pos[1:, :]

    # ---------- transformer block d (pre-LN ViT block) ----------
    x = tok_ref[...]                                             # (T, D) f32

    # attention branch
    h = _ln(x, ln1_g[...], ln1_b[...])
    qkv = _mm(h, qkv_w[...]) + qkv_b[...]                        # (T, 3D) f32
    qkv = qkv.astype(MM_DTYPE)                                   # single bf16 cast
    attn = jnp.zeros((T, Dm), jnp.float32)
    for hd in range(heads):                                      # static unroll
        q = qkv[:, hd * Dh:(hd + 1) * Dh]                        # (T, Dh) bf16
        k = qkv[:, Dm + hd * Dh: Dm + (hd + 1) * Dh]
        v = qkv[:, 2 * Dm + hd * Dh: 2 * Dm + (hd + 1) * Dh]
        s = jnp.einsum('qd,kd->qk', q, k,
                       preferred_element_type=jnp.float32) * scale
        s = s - jnp.max(s, axis=-1, keepdims=True)
        p_ = jnp.exp(s)
        p_ = p_ * pl.reciprocal(jnp.sum(p_, axis=-1, keepdims=True), approx=True)
        oh = jnp.einsum('qk,kd->qd', p_.astype(MM_DTYPE), v,
                        preferred_element_type=jnp.float32)      # (T, Dh)
        # fold head output straight into the output projection:
        #   concat_h(o_h) @ proj_w  ==  sum_h  o_h @ proj_w[h*Dh:(h+1)*Dh, :]
        # (avoids the lane-axis concat, keeps the output lane-dense at D wide)
        attn = attn + _mm(oh, proj_w[hd * Dh:(hd + 1) * Dh, :])
    x = x + attn + proj_b[...]                                   # residual 1

    # MLP branch
    h2 = _ln(x, ln2_g[...], ln2_b[...])
    m = _mm(h2, fc1_w[...]) + fc1_b[...]
    m = _gelu_exact(m)
    m = _mm(m, fc2_w[...]) + fc2_b[...]
    x = x + m                                                    # residual 2
    tok_ref[...] = x

    # ---------- d == DEPTH-1: final LN -> drop CLS -> Post_vit -> mean -> head ----------
    @pl.when(d == pl.num_programs(1) - 1)
    def _():
        xf = _ln(x, norm_g[...], norm_b[...])                    # backbone final norm
        t = xf[1:, :]                                            # drop CLS (f_mode=='frt')
        t = _ln(t, p1_g[...], p1_b[...])                         # post.norm1
        # TODO(synk): FRT class body (build_FR -> FRT(...)) is not provided in the
        # reference source; the FRT token-refinement layers are treated as identity.
        t = _ln(t, p2_g[...], p2_b[...])                         # post.norm2
        feat = jnp.sum(t, axis=0, keepdims=True) * (1.0 / t.shape[0])   # token mean (1, D)
        logits = _mm(feat, head_w[...]) + head_b[...]            # (1, C)
        o_ref[...] = logits[None].astype(o_ref.dtype)            # (1, 1, C)


# ------------------------------- kernel wrapper ---------------------------------
def fused_forward(patches, p):
    """One pallas_call for the whole forward. patches: (B, N, C*P*P) f32."""
    Bn, N, Pd = patches.shape
    T = p["pos"].shape[1]
    Dm = p["patch_w"].shape[1]
    C = p["head_w"].shape[1]
    Dmlp = MLP_RATIO * Dm

    depth_w = lambda b, d: (d, 0, 0)     # stacked per-block weights, streamed over depth
    const2 = lambda b, d: (0, 0)         # resident whole-array 2-D params
    const3 = lambda b, d: (0, 0, 0)      # resident whole-array 3-D params

    in_specs = [
        pl.BlockSpec((None, N, Pd), lambda b, d: (b, 0, 0)),   # patches (per batch elem)
        pl.BlockSpec((Pd, Dm), const2),                        # patch_w
        pl.BlockSpec((1, Dm), const2),                         # patch_b
        pl.BlockSpec((1, 1, Dm), const3),                      # cls
        pl.BlockSpec((1, T, Dm), const3),                      # pos
        pl.BlockSpec((None, 1, Dm), depth_w),                  # ln1_g
        pl.BlockSpec((None, 1, Dm), depth_w),                  # ln1_b
        pl.BlockSpec((None, Dm, 3 * Dm), depth_w),             # qkv_w
        pl.BlockSpec((None, 1, 3 * Dm), depth_w),              # qkv_b
        pl.BlockSpec((None, Dm, Dm), depth_w),                 # proj_w
        pl.BlockSpec((None, 1, Dm), depth_w),                  # proj_b
        pl.BlockSpec((None, 1, Dm), depth_w),                  # ln2_g
        pl.BlockSpec((None, 1, Dm), depth_w),                  # ln2_b
        pl.BlockSpec((None, Dm, Dmlp), depth_w),               # fc1_w
        pl.BlockSpec((None, 1, Dmlp), depth_w),                # fc1_b
        pl.BlockSpec((None, Dmlp, Dm), depth_w),               # fc2_w
        pl.BlockSpec((None, 1, Dm), depth_w),                  # fc2_b
        pl.BlockSpec((1, Dm), const2),                         # norm_g
        pl.BlockSpec((1, Dm), const2),                         # norm_b
        pl.BlockSpec((1, Dm), const2),                         # post_norm1_g
        pl.BlockSpec((1, Dm), const2),                         # post_norm1_b
        pl.BlockSpec((1, Dm), const2),                         # post_norm2_g
        pl.BlockSpec((1, Dm), const2),                         # post_norm2_b
        pl.BlockSpec((Dm, C), const2),                         # head_w
        pl.BlockSpec((1, C), const2),                          # head_b
    ]
    out_spec = pl.BlockSpec((1, 1, C), lambda b, d: (b, 0, 0))

    args = (patches,
            p["patch_w"], p["patch_b"], p["cls"], p["pos"],
            p["ln1_g"], p["ln1_b"], p["qkv_w"], p["qkv_b"], p["proj_w"], p["proj_b"],
            p["ln2_g"], p["ln2_b"], p["fc1_w"], p["fc1_b"], p["fc2_w"], p["fc2_b"],
            p["norm_g"], p["norm_b"],
            p["post_norm1_g"], p["post_norm1_b"], p["post_norm2_g"], p["post_norm2_b"],
            p["head_w"], p["head_b"])

    # advisory cost estimate (helps XLA schedule around the custom call)
    flops_block = (2 * T * Dm * 3 * Dm + 4 * T * T * Dm + 2 * T * Dm * Dm
                   + 4 * T * Dm * Dmlp)
    flops = int(Bn * (2 * N * Pd * Dm + DEPTH * flops_block + 2 * Dm * C))
    transcendentals = int(Bn * DEPTH * (HEADS * T * T + T * Dmlp))
    bytes_accessed = int(sum(int(a.size) * a.dtype.itemsize for a in args)
                         + Bn * C * 4)

    logits = pl.pallas_call(
        functools.partial(_fused_forward_kernel, heads=HEADS),
        out_shape=jax.ShapeDtypeStruct((Bn, 1, C), jnp.float32),
        grid_spec=pltpu.PrefetchScalarGridSpec(
            num_scalar_prefetch=0,
            grid=(Bn, DEPTH),
            in_specs=in_specs,
            out_specs=out_spec,
            scratch_shapes=[pltpu.VMEM((T, Dm), jnp.float32)],   # resident token carry
        ),
        compiler_params=pltpu.CompilerParams(
            # batch axis parallel -> uses both TensorCores on v7x; depth is a carry.
            dimension_semantics=("parallel", "arbitrary")),
        cost_estimate=pl.CostEstimate(flops=flops,
                                      transcendentals=transcendentals,
                                      bytes_accessed=bytes_accessed),
    )(*args)
    return logits[:, 0, :]


# ------------------------------- parameter init --------------------------------
def init_params(key):
    ks = iter(jax.random.split(key, 16))

    def w(shape, scale=0.02, dtype=MM_DTYPE):
        # matmul weights stored bf16 (halves DMA bytes); LN params / biases stay f32
        return (scale * jax.random.normal(next(ks), shape)).astype(dtype)

    patch_dim = IN_CHANS * PATCH * PATCH
    n_tok = (IMG // PATCH) * (IMG // PATCH) + 1

    return {
        # patch embedding
        "patch_w": w((patch_dim, D)),
        "patch_b": jnp.zeros((1, D), jnp.float32),
        "cls": w((1, 1, D), dtype=jnp.float32),
        "pos": w((1, n_tok, D), dtype=jnp.float32),
        # transformer blocks, stacked along a leading DEPTH axis (streamed by the grid)
        "ln1_g": jnp.ones((DEPTH, 1, D), jnp.float32),
        "ln1_b": jnp.zeros((DEPTH, 1, D), jnp.float32),
        "qkv_w": w((DEPTH, D, 3 * D)),
        "qkv_b": jnp.zeros((DEPTH, 1, 3 * D), jnp.float32),
        "proj_w": w((DEPTH, D, D)),
        "proj_b": jnp.zeros((DEPTH, 1, D), jnp.float32),
        "ln2_g": jnp.ones((DEPTH, 1, D), jnp.float32),
        "ln2_b": jnp.zeros((DEPTH, 1, D), jnp.float32),
        "fc1_w": w((DEPTH, D, MLP_RATIO * D)),
        "fc1_b": jnp.zeros((DEPTH, 1, MLP_RATIO * D), jnp.float32),
        "fc2_w": w((DEPTH, MLP_RATIO * D, D)),
        "fc2_b": jnp.zeros((DEPTH, 1, D), jnp.float32),
        # backbone final norm
        "norm_g": jnp.ones((1, D), jnp.float32),
        "norm_b": jnp.zeros((1, D), jnp.float32),
        # Post_vit
        "post_norm1_g": jnp.ones((1, D), jnp.float32),
        "post_norm1_b": jnp.zeros((1, D), jnp.float32),
        "post_norm2_g": jnp.ones((1, D), jnp.float32),
        "post_norm2_b": jnp.zeros((1, D), jnp.float32),
        # classification head
        "head_w": w((D, NUM_CLASSES)),
        "head_b": jnp.zeros((1, NUM_CLASSES), jnp.float32),
    }


# --------------------------------- forward pass --------------------------------
def frt_clip_vit_forward(x_nchw, params):
    """x: (B, C, H, W) -> logits (B, num_classes)."""
    Bn, C, H, W = x_nchw.shape
    nh, nw = H // PATCH, W // PATCH
    # im2col (pure layout glue in XLA): NCHW -> (B, num_patches, C*P*P);
    # patch pixel order matches the conv-weight flatten order (C, P, P) of the
    # PyTorch conv patch embed.
    patches = x_nchw.reshape(Bn, C, nh, PATCH, nw, PATCH)
    patches = jnp.transpose(patches, (0, 2, 4, 1, 3, 5)).reshape(
        Bn, nh * nw, C * PATCH * PATCH)
    return fused_forward(patches, params)


# ------------------------------------ main --------------------------------------
if __name__ == "__main__":
    key = jax.random.PRNGKey(0)
    k_param, k_x = jax.random.split(key)
    params = init_params(k_param)
    x = jax.random.normal(k_x, (B, IN_CHANS, IMG, IMG), dtype=jnp.float32)

    fwd = jax.jit(frt_clip_vit_forward)
    out = fwd(x, params)
    out = jax.block_until_ready(out)
    assert out.shape == (B, NUM_CLASSES), out.shape
    assert jnp.all(jnp.isfinite(out))
    print("KERNEL_OK")
</pallas_src>

<mosaic_0001>
module attributes {stable_mosaic.version = 11 : i64} {
  func.func @_fused_forward_kernel(%arg0: i32, %arg1: i32, %arg2: memref<1x4x192xf32, #tpu.memory_space<vmem>>, %arg3: memref<192x128xbf16, #tpu.memory_space<vmem>>, %arg4: memref<1x128xf32, #tpu.memory_space<vmem>>, %arg5: memref<1x1x128xf32, #tpu.memory_space<vmem>>, %arg6: memref<1x5x128xf32, #tpu.memory_space<vmem>>, %arg7: memref<1x1x128xf32, #tpu.memory_space<vmem>>, %arg8: memref<1x1x128xf32, #tpu.memory_space<vmem>>, %arg9: memref<1x128x384xbf16, #tpu.memory_space<vmem>>, %arg10: memref<1x1x384xf32, #tpu.memory_space<vmem>>, %arg11: memref<1x128x128xbf16, #tpu.memory_space<vmem>>, %arg12: memref<1x1x128xf32, #tpu.memory_space<vmem>>, %arg13: memref<1x1x128xf32, #tpu.memory_space<vmem>>, %arg14: memref<1x1x128xf32, #tpu.memory_space<vmem>>, %arg15: memref<1x128x512xbf16, #tpu.memory_space<vmem>>, %arg16: memref<1x1x512xf32, #tpu.memory_space<vmem>>, %arg17: memref<1x512x128xbf16, #tpu.memory_space<vmem>>, %arg18: memref<1x1x128xf32, #tpu.memory_space<vmem>>, %arg19: memref<1x128xf32, #tpu.memory_space<vmem>>, %arg20: memref<1x128xf32, #tpu.memory_space<vmem>>, %arg21: memref<1x128xf32, #tpu.memory_space<vmem>>, %arg22: memref<1x128xf32, #tpu.memory_space<vmem>>, %arg23: memref<1x128xf32, #tpu.memory_space<vmem>>, %arg24: memref<1x128xf32, #tpu.memory_space<vmem>>, %arg25: memref<128x10xbf16, #tpu.memory_space<vmem>>, %arg26: memref<1x10xf32, #tpu.memory_space<vmem>>, %arg27: memref<1x1x10xf32, #tpu.memory_space<vmem>>, %arg28: memref<5x128xf32, #tpu.memory_space<vmem>>) attributes {dimension_semantics = [#tpu.dimension_semantics<parallel>, #tpu.dimension_semantics<arbitrary>], iteration_bounds = array<i64: 2, 2>, scalar_prefetch = 0 : i64, scratch_operands = 1 : i64, tpu.core_type = #tpu.core_type<tc>, window_params = [{transform_indices = @transform_0, window_bounds = array<i64: 1, 4, 192>}, {pipeline_mode = #tpu.pipeline_mode<synchronous>, transform_indices = @transform_1, window_bounds = array<i64: 192, 128>}, {pipeline_mode = #tpu.pipeline_mode<synchronous>, transform_indices = @transform_2, window_bounds = array<i64: 1, 128>}, {pipeline_mode = #tpu.pipeline_mode<synchronous>, transform_indices = @transform_3, window_bounds = array<i64: 1, 1, 128>}, {pipeline_mode = #tpu.pipeline_mode<synchronous>, transform_indices = @transform_4, window_bounds = array<i64: 1, 5, 128>}, {transform_indices = @transform_5, window_bounds = array<i64: 1, 1, 128>}, {transform_indices = @transform_6, window_bounds = array<i64: 1, 1, 128>}, {transform_indices = @transform_7, window_bounds = array<i64: 1, 128, 384>}, {transform_indices = @transform_8, window_bounds = array<i64: 1, 1, 384>}, {transform_indices = @transform_9, window_bounds = array<i64: 1, 128, 128>}, {transform_indices = @transform_10, window_bounds = array<i64: 1, 1, 128>}, {transform_indices = @transform_11, window_bounds = array<i64: 1, 1, 128>}, {transform_indices = @transform_12, window_bounds = array<i64: 1, 1, 128>}, {transform_indices = @transform_13, window_bounds = array<i64: 1, 128, 512>}, {transform_indices = @transform_14, window_bounds = array<i64: 1, 1, 512>}, {transform_indices = @transform_15, window_bounds = array<i64: 1, 512, 128>}, {transform_indices = @transform_16, window_bounds = array<i64: 1, 1, 128>}, {pipeline_mode = #tpu.pipeline_mode<synchronous>, transform_indices = @transform_17, window_bounds = array<i64: 1, 128>}, {pipeline_mode = #tpu.pipeline_mode<synchronous>, transform_indices = @transform_18, window_bounds = array<i64: 1, 128>}, {pipeline_mode = #tpu.pipeline_mode<synchronous>, transform_indices = @transform_19, window_bounds = array<i64: 1, 128>}, {pipeline_mode = #tpu.pipeline_mode<synchronous>, transform_indices = @transform_20, window_bounds = array<i64: 1, 128>}, {pipeline_mode = #tpu.pipeline_mode<synchronous>, transform_indices = @transform_21, window_bounds = array<i64: 1, 128>}, {pipeline_mode = #tpu.pipeline_mode<synchronous>, transform_indices = @transform_22, window_bounds = array<i64: 1, 128>}, {pipeline_mode = #tpu.pipeline_mode<synchronous>, transform_indices = @transform_23, window_bounds = array<i64: 128, 10>}, {pipeline_mode = #tpu.pipeline_mode<synchronous>, transform_indices = @transform_24, window_bounds = array<i64: 1, 10>}, {transform_indices = @transform_25, window_bounds = array<i64: 1, 1, 10>}]} {
    %c0_i32 = arith.constant 0 : i32
    %0 = arith.cmpi eq, %arg1, %c0_i32 : i32
    %1 = arith.extui %0 : i1 to i32
    %c0_i32_0 = arith.constant 0 : i32
    %2 = arith.cmpi ne, %1, %c0_i32_0 : i32
    scf.if %2 {
      %c0_83 = arith.constant 0 : index
      %c0_84 = arith.constant 0 : index
      %c0_85 = arith.constant 0 : index
      %178 = vector.load %arg2[%c0_83, %c0_84, %c0_85] : memref<1x4x192xf32, #tpu.memory_space<vmem>>, vector<1x4x192xf32>
      %179 = vector.shape_cast %178 : vector<1x4x192xf32> to vector<4x192xf32>
      %c0_86 = arith.constant 0 : index
      %c0_87 = arith.constant 0 : index
      %180 = vector.load %arg3[%c0_86, %c0_87] : memref<192x128xbf16, #tpu.memory_space<vmem>>, vector<192x128xbf16>
      %181 = arith.truncf %179 : vector<4x192xf32> to vector<4x192xbf16>
      %cst_88 = arith.constant dense<0.000000e+00> : vector<4x128xf32>
      %182 = tpu.matmul %181, %180, %cst_88 {dimension_numbers = #tpu.dot_dimension_numbers<[1], [0], [0], [1], [0, 0, 1, 1], [], []>} : vector<4x192xbf16>, vector<192x128xbf16>, vector<4x128xf32> -> vector<4x128xf32>
      %c0_89 = arith.constant 0 : index
      %c0_90 = arith.constant 0 : index
      %183 = vector.load %arg4[%c0_89, %c0_90] : memref<1x128xf32, #tpu.memory_space<vmem>>, vector<1x128xf32>
      %184 = vector.broadcast %183 : vector<1x128xf32> to vector<4x128xf32>
      %185 = arith.addf %182, %184 : vector<4x128xf32>
      %c0_91 = arith.constant 0 : index
      %c0_92 = arith.constant 0 : index
      %c0_93 = arith.constant 0 : index
      %186 = vector.load %arg6[%c0_91, %c0_92, %c0_93] : memref<1x5x128xf32, #tpu.memory_space<vmem>>, vector<1x5x128xf32>
      %187 = vector.shape_cast %186 : vector<1x5x128xf32> to vector<5x128xf32>
      %c0_94 = arith.constant 0 : index
      %c0_95 = arith.constant 0 : index
      %c0_96 = arith.constant 0 : index
      %188 = vector.load %arg5[%c0_94, %c0_95, %c0_96] : memref<1x1x128xf32, #tpu.memory_space<vmem>>, vector<1x1x128xf32>
      %189 = vector.shape_cast %188 : vector<1x1x128xf32> to vector<1x128xf32>
      %190 = vector.extract_strided_slice %187 {offsets = [0, 0], sizes = [1, 128], strides = [1, 1]} : vector<5x128xf32> to vector<1x128xf32>
      %191 = arith.addf %189, %190 : vector<1x128xf32>
      %c0_97 = arith.constant 0 : index
      %c0_98 = arith.constant 0 : index
      %192 = vector.load %arg28[%c0_97, %c0_98] : memref<5x128xf32, #tpu.memory_space<vmem>>, vector<1x128xf32>
      tpu.vector_store %arg28[%c0_97, %c0_98], %191 {strides = array<i32>} : memref<5x128xf32, #tpu.memory_space<vmem>>, vector<1x128xf32>,
      %193 = vector.extract_strided_slice %187 {offsets = [1, 0], sizes = [4, 128], strides = [1, 1]} : vector<5x128xf32> to vector<4x128xf32>
      %194 = arith.addf %185, %193 : vector<4x128xf32>
      %c1 = arith.constant 1 : index
      %c0_99 = arith.constant 0 : index
      %195 = vector.load %arg28[%c1, %c0_99] : memref<5x128xf32, #tpu.memory_space<vmem>>, vector<4x128xf32>
      tpu.vector_store %arg28[%c1, %c0_99], %194 {strides = array<i32>} : memref<5x128xf32, #tpu.memory_space<vmem>>, vector<4x128xf32>,
    } else {
    }
    %c0 = arith.constant 0 : index
    %c0_1 = arith.constant 0 : index
    %3 = vector.load %arg28[%c0, %c0_1] : memref<5x128xf32, #tpu.memory_space<vmem>>, vector<5x128xf32>
    %c0_2 = arith.constant 0 : index
    %c0_3 = arith.constant 0 : index
    %c0_4 = arith.constant 0 : index
    %4 = vector.load %arg7[%c0_2, %c0_3, %c0_4] : memref<1x1x128xf32, #tpu.memory_space<vmem>>, vector<1x1x128xf32>
    %5 = vector.shape_cast %4 : vector<1x1x128xf32> to vector<1x128xf32>
    %c0_5 = arith.constant 0 : index
    %c0_6 = arith.constant 0 : index
    %c0_7 = arith.constant 0 : index
    %6 = vector.load %arg8[%c0_5, %c0_6, %c0_7] : memref<1x1x128xf32, #tpu.memory_space<vmem>>, vector<1x1x128xf32>
    %7 = vector.shape_cast %6 : vector<1x1x128xf32> to vector<1x128xf32>
    %cst = arith.constant dense<0.000000e+00> : vector<5xf32>
    %8 = vector.multi_reduction <add>, %3, %cst [1] : vector<5x128xf32> to vector<5xf32>
    %9 = vector.shape_cast %8 : vector<5xf32> to vector<5x1xf32>
    %cst_8 = arith.constant 1.280000e+02 : f32
    %10 = vector.broadcast %cst_8 : f32 to vector<5x1xf32>
    %11 = arith.divf %9, %10 : vector<5x1xf32>
    %12 = vector.broadcast %11 : vector<5x1xf32> to vector<5x128xf32>
    %13 = arith.subf %3, %12 : vector<5x128xf32>
    %14 = arith.mulf %13, %13 : vector<5x128xf32>
    %cst_9 = arith.constant dense<0.000000e+00> : vector<5xf32>
    %15 = vector.multi_reduction <add>, %14, %cst_9 [1] : vector<5x128xf32> to vector<5xf32>
    %16 = vector.shape_cast %15 : vector<5xf32> to vector<5x1xf32>
    %cst_10 = arith.constant 1.280000e+02 : f32
    %17 = vector.broadcast %cst_10 : f32 to vector<5x1xf32>
    %18 = arith.divf %16, %17 : vector<5x1xf32>
    %19 = vector.broadcast %11 : vector<5x1xf32> to vector<5x128xf32>
    %20 = arith.subf %3, %19 : vector<5x128xf32>
    %cst_11 = arith.constant 9.99999974E-6 : f32
    %21 = vector.broadcast %cst_11 : f32 to vector<5x1xf32>
    %22 = arith.addf %18, %21 : vector<5x1xf32>
    %23 = math.rsqrt %22 : vector<5x1xf32>
    %24 = vector.broadcast %23 : vector<5x1xf32> to vector<5x128xf32>
    %25 = arith.mulf %20, %24 : vector<5x128xf32>
    %26 = vector.broadcast %5 : vector<1x128xf32> to vector<5x128xf32>
    %27 = arith.mulf %25, %26 : vector<5x128xf32>
    %28 = vector.broadcast %7 : vector<1x128xf32> to vector<5x128xf32>
    %29 = arith.addf %27, %28 : vector<5x128xf32>
    %c0_12 = arith.constant 0 : index
    %c0_13 = arith.constant 0 : index
    %c0_14 = arith.constant 0 : index
    %30 = vector.load %arg9[%c0_12, %c0_13, %c0_14] : memref<1x128x384xbf16, #tpu.memory_space<vmem>>, vector<1x128x384xbf16>
    %31 = vector.shape_cast %30 : vector<1x128x384xbf16> to vector<128x384xbf16>
    %32 = arith.truncf %29 : vector<5x128xf32> to vector<5x128xbf16>
    %cst_15 = arith.constant dense<0.000000e+00> : vector<5x384xf32>
    %33 = tpu.matmul %32, %31, %cst_15 {dimension_numbers = #tpu.dot_dimension_numbers<[1], [0], [0], [1], [0, 0, 1, 1], [], []>} : vector<5x128xbf16>, vector<128x384xbf16>, vector<5x384xf32> -> vector<5x384xf32>
    %c0_16 = arith.constant 0 : index
    %c0_17 = arith.constant 0 : index
    %c0_18 = arith.constant 0 : index
    %34 = vector.load %arg10[%c0_16, %c0_17, %c0_18] : memref<1x1x384xf32, #tpu.memory_space<vmem>>, vector<1x1x384xf32>
    %35 = vector.shape_cast %34 : vector<1x1x384xf32> to vector<1x384xf32>
    %36 = vector.broadcast %35 : vector<1x384xf32> to vector<5x384xf32>
    %37 = arith.addf %33, %36 : vector<5x384xf32>
    %38 = arith.truncf %37 : vector<5x384xf32> to vector<5x384xbf16>
    %cst_19 = arith.constant 0.000000e+00 : f32
    %39 = vector.broadcast %cst_19 : f32 to vector<5x128xf32>
    %40 = vector.extract_strided_slice %38 {offsets = [0, 0], sizes = [5, 64], strides = [1, 1]} : vector<5x384xbf16> to vector<5x64xbf16>
    %41 = vector.extract_strided_slice %38 {offsets = [0, 128], sizes = [5, 64], strides = [1, 1]} : vector<5x384xbf16> to vector<5x64xbf16>
    %42 = vector.extract_strided_slice %38 {offsets = [0, 256], sizes = [5, 64], strides = [1, 1]} : vector<5x384xbf16> to vector<5x64xbf16>
    "tpu.trace_start"() <{level = 10 : i32, message = "qd,kd->qk"}> : () -> ()
    %cst_20 = arith.constant dense<0.000000e+00> : vector<5x5xf32>
    %43 = tpu.matmul %40, %41, %cst_20 {dimension_numbers = #tpu.dot_dimension_numbers<[1], [1], [0], [0], [0, 0, 1, 0], [], []>} : vector<5x64xbf16>, vector<5x64xbf16>, vector<5x5xf32> -> vector<5x5xf32>
    "tpu.trace_stop"() : () -> ()
    %cst_21 = arith.constant 1.250000e-01 : f32
    %44 = vector.broadcast %cst_21 : f32 to vector<5x5xf32>
    %45 = arith.mulf %43, %44 : vector<5x5xf32>
    %cst_22 = arith.constant dense<0xFF800000> : vector<5xf32>
    %46 = vector.multi_reduction <maximumf>, %45, %cst_22 [1] : vector<5x5xf32> to vector<5xf32>
    %47 = vector.shape_cast %46 : vector<5xf32> to vector<5x1xf32>
    %48 = vector.broadcast %47 : vector<5x1xf32> to vector<5x5xf32>
    %49 = arith.subf %45, %48 : vector<5x5xf32>
    %50 = math.exp %49 : vector<5x5xf32>
    %cst_23 = arith.constant dense<0.000000e+00> : vector<5xf32>
    %51 = vector.multi_reduction <add>, %50, %cst_23 [1] : vector<5x5xf32> to vector<5xf32>
    %52 = vector.shape_cast %51 : vector<5xf32> to vector<5x1xf32>
    %53 = tpu.reciprocal %52 {approx = true} : vector<5x1xf32> -> vector<5x1xf32>
    %54 = vector.broadcast %53 : vector<5x1xf32> to vector<5x5xf32>
    %55 = arith.mulf %50, %54 : vector<5x5xf32>
    %56 = arith.truncf %55 : vector<5x5xf32> to vector<5x5xbf16>
    "tpu.trace_start"() <{level = 10 : i32, message = "qk,kd->qd"}> : () -> ()
    %cst_24 = arith.constant dense<0.000000e+00> : vector<5x64xf32>
    %57 = tpu.matmul %56, %42, %cst_24 {dimension_numbers = #tpu.dot_dimension_numbers<[1], [0], [0], [1], [0, 0, 1, 1], [], []>} : vector<5x5xbf16>, vector<5x64xbf16>, vector<5x64xf32> -> vector<5x64xf32>
    "tpu.trace_stop"() : () -> ()
    %c0_25 = arith.constant 0 : index
    %c0_26 = arith.constant 0 : index
    %c0_27 = arith.constant 0 : index
    %58 = vector.load %arg11[%c0_25, %c0_26, %c0_27] : memref<1x128x128xbf16, #tpu.memory_space<vmem>>, vector<1x64x128xbf16>
    %59 = vector.shape_cast %58 : vector<1x64x128xbf16> to vector<64x128xbf16>
    %60 = arith.truncf %57 : vector<5x64xf32> to vector<5x64xbf16>
    %cst_28 = arith.constant dense<0.000000e+00> : vector<5x128xf32>
    %61 = tpu.matmul %60, %59, %cst_28 {dimension_numbers = #tpu.dot_dimension_numbers<[1], [0], [0], [1], [0, 0, 1, 1], [], []>} : vector<5x64xbf16>, vector<64x128xbf16>, vector<5x128xf32> -> vector<5x128xf32>
    %62 = arith.addf %39, %61 : vector<5x128xf32>
    %63 = vector.extract_strided_slice %38 {offsets = [0, 64], sizes = [5, 64], strides = [1, 1]} : vector<5x384xbf16> to vector<5x64xbf16>
    %64 = vector.extract_strided_slice %38 {offsets = [0, 192], sizes = [5, 64], strides = [1, 1]} : vector<5x384xbf16> to vector<5x64xbf16>
    %65 = vector.extract_strided_slice %38 {offsets = [0, 320], sizes = [5, 64], strides = [1, 1]} : vector<5x384xbf16> to vector<5x64xbf16>
    "tpu.trace_start"() <{level = 10 : i32, message = "qd,kd->qk"}> : () -> ()
    %cst_29 = arith.constant dense<0.000000e+00> : vector<5x5xf32>
    %66 = tpu.matmul %63, %64, %cst_29 {dimension_numbers = #tpu.dot_dimension_numbers<[1], [1], [0], [0], [0, 0, 1, 0], [], []>} : vector<5x64xbf16>, vector<5x64xbf16>, vector<5x5xf32> -> vector<5x5xf32>
    "tpu.trace_stop"() : () -> ()
    %cst_30 = arith.constant 1.250000e-01 : f32
    %67 = vector.broadcast %cst_30 : f32 to vector<5x5xf32>
    %68 = arith.mulf %66, %67 : vector<5x5xf32>
    %cst_31 = arith.constant dense<0xFF800000> : vector<5xf32>
    %69 = vector.multi_reduction <maximumf>, %68, %cst_31 [1] : vector<5x5xf32> to vector<5xf32>
    %70 = vector.shape_cast %69 : vector<5xf32> to vector<5x1xf32>
    %71 = vector.broadcast %70 : vector<5x1xf32> to vector<5x5xf32>
    %72 = arith.subf %68, %71 : vector<5x5xf32>
    %73 = math.exp %72 : vector<5x5xf32>
    %cst_32 = arith.constant dense<0.000000e+00> : vector<5xf32>
    %74 = vector.multi_reduction <add>, %73, %cst_32 [1] : vector<5x5xf32> to vector<5xf32>
    %75 = vector.shape_cast %74 : vector<5xf32> to vector<5x1xf32>
    %76 = tpu.reciprocal %75 {approx = true} : vector<5x1xf32> -> vector<5x1xf32>
    %77 = vector.broadcast %76 : vector<5x1xf32> to vector<5x5xf32>
    %78 = arith.mulf %73, %77 : vector<5x5xf32>
    %79 = arith.truncf %78 : vector<5x5xf32> to vector<5x5xbf16>
    "tpu.trace_start"() <{level = 10 : i32, message = "qk,kd->qd"}> : () -> ()
    %cst_33 = arith.constant dense<0.000000e+00> : vector<5x64xf32>
    %80 = tpu.matmul %79, %65, %cst_33 {dimension_numbers = #tpu.dot_dimension_numbers<[1], [0], [0], [1], [0, 0, 1, 1], [], []>} : vector<5x5xbf16>, vector<5x64xbf16>, vector<5x64xf32> -> vector<5x64xf32>
    "tpu.trace_stop"() : () -> ()
    %c0_34 = arith.constant 0 : index
    %c64 = arith.constant 64 : index
    %c0_35 = arith.constant 0 : index
    %81 = vector.load %arg11[%c0_34, %c64, %c0_35] : memref<1x128x128xbf16, #tpu.memory_space<vmem>>, vector<1x64x128xbf16>
    %82 = vector.shape_cast %81 : vector<1x64x128xbf16> to vector<64x128xbf16>
    %83 = arith.truncf %80 : vector<5x64xf32> to vector<5x64xbf16>
    %cst_36 = arith.constant dense<0.000000e+00> : vector<5x128xf32>
    %84 = tpu.matmul %83, %82, %cst_36 {dimension_numbers = #tpu.dot_dimension_numbers<[1], [0], [0], [1], [0, 0, 1, 1], [], []>} : vector<5x64xbf16>, vector<64x128xbf16>, vector<5x128xf32> -> vector<5x128xf32>
    %85 = arith.addf %62, %84 : vector<5x128xf32>
    %86 = arith.addf %3, %85 : vector<5x128xf32>
    %c0_37 = arith.constant 0 : index
    %c0_38 = arith.constant 0 : index
    %c0_39 = arith.constant 0 : index
    %87 = vector.load %arg12[%c0_37, %c0_38, %c0_39] : memref<1x1x128xf32, #tpu.memory_space<vmem>>, vector<1x1x128xf32>
    %88 = vector.shape_cast %87 : vector<1x1x128xf32> to vector<1x128xf32>
    %89 = vector.broadcast %88 : vector<1x128xf32> to vector<5x128xf32>
    %90 = arith.addf %86, %89 : vector<5x128xf32>
    %c0_40 = arith.constant 0 : index
    %c0_41 = arith.constant 0 : index
    %c0_42 = arith.constant 0 : index
    %91 = vector.load %arg13[%c0_40, %c0_41, %c0_42] : memref<1x1x128xf32, #tpu.memory_space<vmem>>, vector<1x1x128xf32>
    %92 = vector.shape_cast %91 : vector<1x1x128xf32> to vector<1x128xf32>
    %c0_43 = arith.constant 0 : index
    %c0_44 = arith.constant 0 : index
    %c0_45 = arith.constant 0 : index
    %93 = vector.load %arg14[%c0_43, %c0_44, %c0_45] : memref<1x1x128xf32, #tpu.memory_space<vmem>>, vector<1x1x128xf32>
    %94 = vector.shape_cast %93 : vector<1x1x128xf32> to vector<1x128xf32>
    %cst_46 = arith.constant dense<0.000000e+00> : vector<5xf32>
    %95 = vector.multi_reduction <add>, %90, %cst_46 [1] : vector<5x128xf32> to vector<5xf32>
    %96 = vector.shape_cast %95 : vector<5xf32> to vector<5x1xf32>
    %cst_47 = arith.constant 1.280000e+02 : f32
    %97 = vector.broadcast %cst_47 : f32 to vector<5x1xf32>
    %98 = arith.divf %96, %97 : vector<5x1xf32>
    %99 = vector.broadcast %98 : vector<5x1xf32> to vector<5x128xf32>
    %100 = arith.subf %90, %99 : vector<5x128xf32>
    %101 = arith.mulf %100, %100 : vector<5x128xf32>
    %cst_48 = arith.constant dense<0.000000e+00> : vector<5xf32>
    %102 = vector.multi_reduction <add>, %101, %cst_48 [1] : vector<5x128xf32> to vector<5xf32>
    %103 = vector.shape_cast %102 : vector<5xf32> to vector<5x1xf32>
    %cst_49 = arith.constant 1.280000e+02 : f32
    %104 = vector.broadcast %cst_49 : f32 to vector<5x1xf32>
    %105 = arith.divf %103, %104 : vector<5x1xf32>
    %106 = vector.broadcast %98 : vector<5x1xf32> to vector<5x128xf32>
    %107 = arith.subf %90, %106 : vector<5x128xf32>
    %cst_50 = arith.constant 9.99999974E-6 : f32
    %108 = vector.broadcast %cst_50 : f32 to vector<5x1xf32>
    %109 = arith.addf %105, %108 : vector<5x1xf32>
    %110 = math.rsqrt %109 : vector<5x1xf32>
    %111 = vector.broadcast %110 : vector<5x1xf32> to vector<5x128xf32>
    %112 = arith.mulf %107, %111 : vector<5x128xf32>
    %113 = vector.broadcast %92 : vector<1x128xf32> to vector<5x128xf32>
    %114 = arith.mulf %112, %113 : vector<5x128xf32>
    %115 = vector.broadcast %94 : vector<1x128xf32> to vector<5x128xf32>
    %116 = arith.addf %114, %115 : vector<5x128xf32>
    %c0_51 = arith.constant 0 : index
    %c0_52 = arith.constant 0 : index
    %c0_53 = arith.constant 0 : index
    %117 = vector.load %arg15[%c0_51, %c0_52, %c0_53] : memref<1x128x512xbf16, #tpu.memory_space<vmem>>, vector<1x128x512xbf16>
    %118 = vector.shape_cast %117 : vector<1x128x512xbf16> to vector<128x512xbf16>
    %119 = arith.truncf %116 : vector<5x128xf32> to vector<5x128xbf16>
    %cst_54 = arith.constant dense<0.000000e+00> : vector<5x512xf32>
    %120 = tpu.matmul %119, %118, %cst_54 {dimension_numbers = #tpu.dot_dimension_numbers<[1], [0], [0], [1], [0, 0, 1, 1], [], []>} : vector<5x128xbf16>, vector<128x512xbf16>, vector<5x512xf32> -> vector<5x512xf32>
    %c0_55 = arith.constant 0 : index
    %c0_56 = arith.constant 0 : index
    %c0_57 = arith.constant 0 : index
    %121 = vector.load %arg16[%c0_55, %c0_56, %c0_57] : memref<1x1x512xf32, #tpu.memory_space<vmem>>, vector<1x1x512xf32>
    %122 = vector.shape_cast %121 : vector<1x1x512xf32> to vector<1x512xf32>
    %123 = vector.broadcast %122 : vector<1x512xf32> to vector<5x512xf32>
    %124 = arith.addf %120, %123 : vector<5x512xf32>
    %cst_58 = arith.constant 5.000000e-01 : f32
    %125 = vector.broadcast %cst_58 : f32 to vector<5x512xf32>
    %126 = arith.mulf %125, %124 : vector<5x512xf32>
    %cst_59 = arith.constant 0.707106769 : f32
    %127 = vector.broadcast %cst_59 : f32 to vector<5x512xf32>
    %128 = arith.mulf %124, %127 : vector<5x512xf32>
    %129 = math.absf %128 : vector<5x512xf32>
    %cst_60 = arith.constant 0.327591091 : f32
    %130 = vector.broadcast %cst_60 : f32 to vector<5x512xf32>
    %131 = arith.mulf %130, %129 : vector<5x512xf32>
    %cst_61 = arith.constant 1.000000e+00 : f32
    %132 = vector.broadcast %cst_61 : f32 to vector<5x512xf32>
    %133 = arith.addf %132, %131 : vector<5x512xf32>
    %cst_62 = arith.constant 1.000000e+00 : f32
    %134 = vector.broadcast %cst_62 : f32 to vector<5x512xf32>
    %135 = arith.divf %134, %133 : vector<5x512xf32>
    %cst_63 = arith.constant 1.06140542 : f32
    %136 = vector.broadcast %cst_63 : f32 to vector<5x512xf32>
    %137 = arith.mulf %136, %135 : vector<5x512xf32>
    %cst_64 = arith.constant 1.45315206 : f32
    %138 = vector.broadcast %cst_64 : f32 to vector<5x512xf32>
    %139 = arith.subf %137, %138 : vector<5x512xf32>
    %140 = arith.mulf %139, %135 : vector<5x512xf32>
    %cst_65 = arith.constant 1.42141378 : f32
    %141 = vector.broadcast %cst_65 : f32 to vector<5x512xf32>
    %142 = arith.addf %140, %141 : vector<5x512xf32>
    %143 = arith.mulf %142, %135 : vector<5x512xf32>
    %cst_66 = arith.constant 0.284496725 : f32
    %144 = vector.broadcast %cst_66 : f32 to vector<5x512xf32>
    %145 = arith.subf %143, %144 : vector<5x512xf32>
    %146 = arith.mulf %145, %135 : vector<5x512xf32>
    %cst_67 = arith.constant 0.254829586 : f32
    %147 = vector.broadcast %cst_67 : f32 to vector<5x512xf32>
    %148 = arith.addf %146, %147 : vector<5x512xf32>
    %149 = arith.mulf %148, %135 : vector<5x512xf32>
    %cst_68 = arith.constant 0.000000e+00 : f32
    %150 = vector.broadcast %cst_68 : f32 to vector<5x512xf32>
    %151 = arith.subf %150, %129 : vector<5x512xf32>
    %152 = arith.mulf %151, %129 : vector<5x512xf32>
    %153 = math.exp %152 : vector<5x512xf32>
    %154 = arith.mulf %149, %153 : vector<5x512xf32>
    %cst_69 = arith.constant 1.000000e+00 : f32
    %155 = vector.broadcast %cst_69 : f32 to vector<5x512xf32>
    %156 = arith.subf %155, %154 : vector<5x512xf32>
    %cst_70 = arith.constant 0.000000e+00 : f32
    %157 = vector.broadcast %cst_70 : f32 to vector<5x512xf32>
    %158 = arith.cmpf olt, %128, %157 : vector<5x512xf32>
    %cst_71 = arith.constant 0.000000e+00 : f32
    %159 = vector.broadcast %cst_71 : f32 to vector<5x512xf32>
    %160 = arith.subf %159, %156 : vector<5x512xf32>
    %161 = arith.select %158, %160, %156 : vector<5x512xi1>, vector<5x512xf32>
    %cst_72 = arith.constant 1.000000e+00 : f32
    %162 = vector.broadcast %cst_72 : f32 to vector<5x512xf32>
    %163 = arith.addf %162, %161 : vector<5x512xf32>
    %164 = arith.mulf %126, %163 : vector<5x512xf32>
    %c0_73 = arith.constant 0 : index
    %c0_74 = arith.constant 0 : index
    %c0_75 = arith.constant 0 : index
    %165 = vector.load %arg17[%c0_73, %c0_74, %c0_75] : memref<1x512x128xbf16, #tpu.memory_space<vmem>>, vector<1x512x128xbf16>
    %166 = vector.shape_cast %165 : vector<1x512x128xbf16> to vector<512x128xbf16>
    %167 = arith.truncf %164 : vector<5x512xf32> to vector<5x512xbf16>
    %cst_76 = arith.constant dense<0.000000e+00> : vector<5x128xf32>
    %168 = tpu.matmul %167, %166, %cst_76 {dimension_numbers = #tpu.dot_dimension_numbers<[1], [0], [0], [1], [0, 0, 1, 1], [], []>} : vector<5x512xbf16>, vector<512x128xbf16>, vector<5x128xf32> -> vector<5x128xf32>
    %c0_77 = arith.constant 0 : index
    %c0_78 = arith.constant 0 : index
    %c0_79 = arith.constant 0 : index
    %169 = vector.load %arg18[%c0_77, %c0_78, %c0_79] : memref<1x1x128xf32, #tpu.memory_space<vmem>>, vector<1x1x128xf32>
    %170 = vector.shape_cast %169 : vector<1x1x128xf32> to vector<1x128xf32>
    %171 = vector.broadcast %170 : vector<1x128xf32> to vector<5x128xf32>
    %172 = arith.addf %168, %171 : vector<5x128xf32>
    %173 = arith.addf %90, %172 : vector<5x128xf32>
    %c0_80 = arith.constant 0 : index
    %c0_81 = arith.constant 0 : index
    %174 = vector.load %arg28[%c0_80, %c0_81] : memref<5x128xf32, #tpu.memory_space<vmem>>, vector<5x128xf32>
    tpu.vector_store %arg28[%c0_80, %c0_81], %173 {strides = array<i32>} : memref<5x128xf32, #tpu.memory_space<vmem>>, vector<5x128xf32>,
    %c1_i32 = arith.constant 1 : i32
    %175 = arith.cmpi eq, %arg1, %c1_i32 : i32
    %176 = arith.extui %175 : i1 to i32
    %c0_i32_82 = arith.constant 0 : i32
    %177 = arith.cmpi ne, %176, %c0_i32_82 : i32
    scf.if %177 {
      %c0_83 = arith.constant 0 : index
      %c0_84 = arith.constant 0 : index
      %178 = vector.load %arg19[%c0_83, %c0_84] : memref<1x128xf32, #tpu.memory_space<vmem>>, vector<1x128xf32>
      %c0_85 = arith.constant 0 : index
      %c0_86 = arith.constant 0 : index
      %179 = vector.load %arg20[%c0_85, %c0_86] : memref<1x128xf32, #tpu.memory_space<vmem>>, vector<1x128xf32>
      %cst_87 = arith.constant dense<0.000000e+00> : vector<5xf32>
      %180 = vector.multi_reduction <add>, %173, %cst_87 [1] : vector<5x128xf32> to vector<5xf32>
      %181 = vector.shape_cast %180 : vector<5xf32> to vector<5x1xf32>
      %cst_88 = arith.constant 1.280000e+02 : f32
      %182 = vector.broadcast %cst_88 : f32 to vector<5x1xf32>
      %183 = arith.divf %181, %182 : vector<5x1xf32>
      %184 = vector.broadcast %183 : vector<5x1xf32> to vector<5x128xf32>
      %185 = arith.subf %173, %184 : vector<5x128xf32>
      %186 = arith.mulf %185, %185 : vector<5x128xf32>
      %cst_89 = arith.constant dense<0.000000e+00> : vector<5xf32>
      %187 = vector.multi_reduction <add>, %186, %cst_89 [1] : vector<5x128xf32> to vector<5xf32>
      %188 = vector.shape_cast %187 : vector<5xf32> to vector<5x1xf32>
      %cst_90 = arith.constant 1.280000e+02 : f32
      %189 = vector.broadcast %cst_90 : f32 to vector<5x1xf32>
      %190 = arith.divf %188, %189 : vector<5x1xf32>
      %191 = vector.broadcast %183 : vector<5x1xf32> to vector<5x128xf32>
      %192 = arith.subf %173, %191 : vector<5x128xf32>
      %cst_91 = arith.constant 9.99999974E-6 : f32
      %193 = vector.broadcast %cst_91 : f32 to vector<5x1xf32>
      %194 = arith.addf %190, %193 : vector<5x1xf32>
      %195 = math.rsqrt %194 : vector<5x1xf32>
      %196 = vector.broadcast %195 : vector<5x1xf32> to vector<5x128xf32>
      %197 = arith.mulf %192, %196 : vector<5x128xf32>
      %198 = vector.broadcast %178 : vector<1x128xf32> to vector<5x128xf32>
      %199 = arith.mulf %197, %198 : vector<5x128xf32>
      %200 = vector.broadcast %179 : vector<1x128xf32> to vector<5x128xf32>
      %201 = arith.addf %199, %200 : vector<5x128xf32>
      %202 = vector.extract_strided_slice %201 {offsets = [1, 0], sizes = [4, 128], strides = [1, 1]} : vector<5x128xf32> to vector<4x128xf32>
      %c0_92 = arith.constant 0 : index
      %c0_93 = arith.constant 0 : index
      %203 = vector.load %arg21[%c0_92, %c0_93] : memref<1x128xf32, #tpu.memory_space<vmem>>, vector<1x128xf32>
      %c0_94 = arith.constant 0 : index
      %c0_95 = arith.constant 0 : index
      %204 = vector.load %arg22[%c0_94, %c0_95] : memref<1x128xf32, #tpu.memory_space<vmem>>, vector<1x128xf32>
      %cst_96 = arith.constant dense<0.000000e+00> : vector<4xf32>
      %205 = vector.multi_reduction <add>, %202, %cst_96 [1] : vector<4x128xf32> to vector<4xf32>
      %206 = vector.shape_cast %205 : vector<4xf32> to vector<4x1xf32>
      %cst_97 = arith.constant 1.280000e+02 : f32
      %207 = vector.broadcast %cst_97 : f32 to vector<4x1xf32>
      %208 = arith.divf %206, %207 : vector<4x1xf32>
      %209 = vector.broadcast %208 : vector<4x1xf32> to vector<4x128xf32>
      %210 = arith.subf %202, %209 : vector<4x128xf32>
      %211 = arith.mulf %210, %210 : vector<4x128xf32>
      %cst_98 = arith.constant dense<0.000000e+00> : vector<4xf32>
      %212 = vector.multi_reduction <add>, %211, %cst_98 [1] : vector<4x128xf32> to vector<4xf32>
      %213 = vector.shape_cast %212 : vector<4xf32> to vector<4x1xf32>
      %cst_99 = arith.constant 1.280000e+02 : f32
      %214 = vector.broadcast %cst_99 : f32 to vector<4x1xf32>
      %215 = arith.divf %213, %214 : vector<4x1xf32>
      %216 = vector.broadcast %208 : vector<4x1xf32> to vector<4x128xf32>
      %217 = arith.subf %202, %216 : vector<4x128xf32>
      %cst_100 = arith.constant 9.99999974E-6 : f32
      %218 = vector.broadcast %cst_100 : f32 to vector<4x1xf32>
      %219 = arith.addf %215, %218 : vector<4x1xf32>
      %220 = math.rsqrt %219 : vector<4x1xf32>
      %221 = vector.broadcast %220 : vector<4x1xf32> to vector<4x128xf32>
      %222 = arith.mulf %217, %221 : vector<4x128xf32>
      %223 = vector.broadcast %203 : vector<1x128xf32> to vector<4x128xf32>
      %224 = arith.mulf %222, %223 : vector<4x128xf32>
      %225 = vector.broadcast %204 : vector<1x128xf32> to vector<4x128xf32>
      %226 = arith.addf %224, %225 : vector<4x128xf32>
      %c0_101 = arith.constant 0 : index
      %c0_102 = arith.constant 0 : index
      %227 = vector.load %arg23[%c0_101, %c0_102] : memref<1x128xf32, #tpu.memory_space<vmem>>, vector<1x128xf32>
      %c0_103 = arith.constant 0 : index
      %c0_104 = arith.constant 0 : index
      %228 = vector.load %arg24[%c0_103, %c0_104] : memref<1x128xf32, #tpu.memory_space<vmem>>, vector<1x128xf32>
      %cst_105 = arith.constant dense<0.000000e+00> : vector<4xf32>
      %229 = vector.multi_reduction <add>, %226, %cst_105 [1] : vector<4x128xf32> to vector<4xf32>
      %230 = vector.shape_cast %229 : vector<4xf32> to vector<4x1xf32>
      %cst_106 = arith.constant 1.280000e+02 : f32
      %231 = vector.broadcast %cst_106 : f32 to vector<4x1xf32>
      %232 = arith.divf %230, %231 : vector<4x1xf32>
      %233 = vector.broadcast %232 : vector<4x1xf32> to vector<4x128xf32>
      %234 = arith.subf %226, %233 : vector<4x128xf32>
      %235 = arith.mulf %234, %234 : vector<4x128xf32>
      %cst_107 = arith.constant dense<0.000000e+00> : vector<4xf32>
      %236 = vector.multi_reduction <add>, %235, %cst_107 [1] : vector<4x128xf32> to vector<4xf32>
      %237 = vector.shape_cast %236 : vector<4xf32> to vector<4x1xf32>
      %cst_108 = arith.constant 1.280000e+02 : f32
      %238 = vector.broadcast %cst_108 : f32 to vector<4x1xf32>
      %239 = arith.divf %237, %238 : vector<4x1xf32>
      %240 = vector.broadcast %232 : vector<4x1xf32> to vector<4x128xf32>
      %241 = arith.subf %226, %240 : vector<4x128xf32>
      %cst_109 = arith.constant 9.99999974E-6 : f32
      %242 = vector.broadcast %cst_109 : f32 to vector<4x1xf32>
      %243 = arith.addf %239, %242 : vector<4x1xf32>
      %244 = math.rsqrt %243 : vector<4x1xf32>
      %245 = vector.broadcast %244 : vector<4x1xf32> to vector<4x128xf32>
      %246 = arith.mulf %241, %245 : vector<4x128xf32>
      %247 = vector.broadcast %227 : vector<1x128xf32> to vector<4x128xf32>
      %248 = arith.mulf %246, %247 : vector<4x128xf32>
      %249 = vector.broadcast %228 : vector<1x128xf32> to vector<4x128xf32>
      %250 = arith.addf %248, %249 : vector<4x128xf32>
      %cst_110 = arith.constant dense<0.000000e+00> : vector<128xf32>
      %251 = vector.multi_reduction <add>, %250, %cst_110 [0] : vector<4x128xf32> to vector<128xf32>
      %252 = vector.shape_cast %251 : vector<128xf32> to vector<1x128xf32>
      %cst_111 = arith.constant 2.500000e-01 : f32
      %253 = vector.broadcast %cst_111 : f32 to vector<1x128xf32>
      %254 = arith.mulf %252, %253 : vector<1x128xf32>
      %c0_112 = arith.constant 0 : index
      %c0_113 = arith.constant 0 : index
      %255 = vector.load %arg25[%c0_112, %c0_113] : memref<128x10xbf16, #tpu.memory_space<vmem>>, vector<128x10xbf16>
      %256 = arith.truncf %254 : vector<1x128xf32> to vector<1x128xbf16>
      %cst_114 = arith.constant dense<0.000000e+00> : vector<1x10xf32>
      %257 = tpu.matmul %256, %255, %cst_114 {dimension_numbers = #tpu.dot_dimension_numbers<[1], [0], [0], [1], [0, 0, 1, 1], [], []>} : vector<1x128xbf16>, vector<128x10xbf16>, vector<1x10xf32> -> vector<1x10xf32>
      %c0_115 = arith.constant 0 : index
      %c0_116 = arith.constant 0 : index
      %258 = vector.load %arg26[%c0_115, %c0_116] : memref<1x10xf32, #tpu.memory_space<vmem>>, vector<1x10xf32>
      %259 = arith.addf %257, %258 : vector<1x10xf32>
      %260 = vector.shape_cast %259 : vector<1x10xf32> to vector<1x1x10xf32>
      %c0_117 = arith.constant 0 : index
      %c0_118 = arith.constant 0 : index
      %c0_119 = arith.constant 0 : index
      %261 = vector.load %arg27[%c0_117, %c0_118, %c0_119] : memref<1x1x10xf32, #tpu.memory_space<vmem>>, vector<1x1x10xf32>
      tpu.vector_store %arg27[%c0_117, %c0_118, %c0_119], %260 {strides = array<i32>} : memref<1x1x10xf32, #tpu.memory_space<vmem>>, vector<1x1x10xf32>,
    } else {
    }
    return
  }
  func.func @transform_0(%arg0: i32, %arg1: i32) -> (i32, i32, i32) {
    %c0_i32 = arith.constant 0 : i32
    %c0_i32_0 = arith.constant 0 : i32
    %c0_i32_1 = arith.constant 0 : i32
    return %arg0, %c0_i32, %c0_i32_0 : i32, i32, i32
  }
  func.func @transform_1(%arg0: i32, %arg1: i32) -> (i32, i32) {
    %c0_i32 = arith.constant 0 : i32
    %c0_i32_0 = arith.constant 0 : i32
    %c0_i32_1 = arith.constant 0 : i32
    return %c0_i32, %c0_i32_0 : i32, i32
  }
  func.func @transform_2(%arg0: i32, %arg1: i32) -> (i32, i32) {
    %c0_i32 = arith.constant 0 : i32
    %c0_i32_0 = arith.constant 0 : i32
    %c0_i32_1 = arith.constant 0 : i32
    return %c0_i32, %c0_i32_0 : i32, i32
  }
  func.func @transform_3(%arg0: i32, %arg1: i32) -> (i32, i32, i32) {
    %c0_i32 = arith.constant 0 : i32
    %c0_i32_0 = arith.constant 0 : i32
    %c0_i32_1 = arith.constant 0 : i32
    %c0_i32_2 = arith.constant 0 : i32
    return %c0_i32, %c0_i32_0, %c0_i32_1 : i32, i32, i32
  }
  func.func @transform_4(%arg0: i32, %arg1: i32) -> (i32, i32, i32) {
    %c0_i32 = arith.constant 0 : i32
    %c0_i32_0 = arith.constant 0 : i32
    %c0_i32_1 = arith.constant 0 : i32
    %c0_i32_2 = arith.constant 0 : i32
    return %c0_i32, %c0_i32_0, %c0_i32_1 : i32, i32, i32
  }
  func.func @transform_5(%arg0: i32, %arg1: i32) -> (i32, i32, i32) {
    %c0_i32 = arith.constant 0 : i32
    %c0_i32_0 = arith.constant 0 : i32
    %c0_i32_1 = arith.constant 0 : i32
    return %arg1, %c0_i32, %c0_i32_0 : i32, i32, i32
  }
  func.func @transform_6(%arg0: i32, %arg1: i32) -> (i32, i32, i32) {
    %c0_i32 = arith.constant 0 : i32
    %c0_i32_0 = arith.constant 0 : i32
    %c0_i32_1 = arith.constant 0 : i32
    return %arg1, %c0_i32, %c0_i32_0 : i32, i32, i32
  }
  func.func @transform_7(%arg0: i32, %arg1: i32) -> (i32, i32, i32) {
    %c0_i32 = arith.constant 0 : i32
    %c0_i32_0 = arith.constant 0 : i32
    %c0_i32_1 = arith.constant 0 : i32
    return %arg1, %c0_i32, %c0_i32_0 : i32, i32, i32
  }
  func.func @transform_8(%arg0: i32, %arg1: i32) -> (i32, i32, i32) {
    %c0_i32 = arith.constant 0 : i32
    %c0_i32_0 = arith.constant 0 : i32
    %c0_i32_1 = arith.constant 0 : i32
    return %arg1, %c0_i32, %c0_i32_0 : i32, i32, i32
  }
  func.func @transform_9(%arg0: i32, %arg1: i32) -> (i32, i32, i32) {
    %c0_i32 = arith.constant 0 : i32
    %c0_i32_0 = arith.constant 0 : i32
    %c0_i32_1 = arith.constant 0 : i32
    return %arg1, %c0_i32, %c0_i32_0 : i32, i32, i32
  }
  func.func @transform_10(%arg0: i32, %arg1: i32) -> (i32, i32, i32) {
    %c0_i32 = arith.constant 0 : i32
    %c0_i32_0 = arith.constant 0 : i32
    %c0_i32_1 = arith.constant 0 : i32
    return %arg1, %c0_i32, %c0_i32_0 : i32, i32, i32
  }
  func.func @transform_11(%arg0: i32, %arg1: i32) -> (i32, i32, i32) {
    %c0_i32 = arith.constant 0 : i32
    %c0_i32_0 = arith.constant 0 : i32
    %c0_i32_1 = arith.constant 0 : i32
    return %arg1, %c0_i32, %c0_i32_0 : i32, i32, i32
  }
  func.func @transform_12(%arg0: i32, %arg1: i32) -> (i32, i32, i32) {
    %c0_i32 = arith.constant 0 : i32
    %c0_i32_0 = arith.constant 0 : i32
    %c0_i32_1 = arith.constant 0 : i32
    return %arg1, %c0_i32, %c0_i32_0 : i32, i32, i32
  }
  func.func @transform_13(%arg0: i32, %arg1: i32) -> (i32, i32, i32) {
    %c0_i32 = arith.constant 0 : i32
    %c0_i32_0 = arith.constant 0 : i32
    %c0_i32_1 = arith.constant 0 : i32
    return %arg1, %c0_i32, %c0_i32_0 : i32, i32, i32
  }
  func.func @transform_14(%arg0: i32, %arg1: i32) -> (i32, i32, i32) {
    %c0_i32 = arith.constant 0 : i32
    %c0_i32_0 = arith.constant 0 : i32
    %c0_i32_1 = arith.constant 0 : i32
    return %arg1, %c0_i32, %c0_i32_0 : i32, i32, i32
  }
  func.func @transform_15(%arg0: i32, %arg1: i32) -> (i32, i32, i32) {
    %c0_i32 = arith.constant 0 : i32
    %c0_i32_0 = arith.constant 0 : i32
    %c0_i32_1 = arith.constant 0 : i32
    return %arg1, %c0_i32, %c0_i32_0 : i32, i32, i32
  }
  func.func @transform_16(%arg0: i32, %arg1: i32) -> (i32, i32, i32) {
    %c0_i32 = arith.constant 0 : i32
    %c0_i32_0 = arith.constant 0 : i32
    %c0_i32_1 = arith.constant 0 : i32
    return %arg1, %c0_i32, %c0_i32_0 : i32, i32, i32
  }
  func.func @transform_17(%arg0: i32, %arg1: i32) -> (i32, i32) {
    %c0_i32 = arith.constant 0 : i32
    %c0_i32_0 = arith.constant 0 : i32
    %c0_i32_1 = arith.constant 0 : i32
    return %c0_i32, %c0_i32_0 : i32, i32
  }
  func.func @transform_18(%arg0: i32, %arg1: i32) -> (i32, i32) {
    %c0_i32 = arith.constant 0 : i32
    %c0_i32_0 = arith.constant 0 : i32
    %c0_i32_1 = arith.constant 0 : i32
    return %c0_i32, %c0_i32_0 : i32, i32
  }
  func.func @transform_19(%arg0: i32, %arg1: i32) -> (i32, i32) {
    %c0_i32 = arith.constant 0 : i32
    %c0_i32_0 = arith.constant 0 : i32
    %c0_i32_1 = arith.constant 0 : i32
    return %c0_i32, %c0_i32_0 : i32, i32
  }
  func.func @transform_20(%arg0: i32, %arg1: i32) -> (i32, i32) {
    %c0_i32 = arith.constant 0 : i32
    %c0_i32_0 = arith.constant 0 : i32
    %c0_i32_1 = arith.constant 0 : i32
    return %c0_i32, %c0_i32_0 : i32, i32
  }
  func.func @transform_21(%arg0: i32, %arg1: i32) -> (i32, i32) {
    %c0_i32 = arith.constant 0 : i32
    %c0_i32_0 = arith.constant 0 : i32
    %c0_i32_1 = arith.constant 0 : i32
    return %c0_i32, %c0_i32_0 : i32, i32
  }
  func.func @transform_22(%arg0: i32, %arg1: i32) -> (i32, i32) {
    %c0_i32 = arith.constant 0 : i32
    %c0_i32_0 = arith.constant 0 : i32
    %c0_i32_1 = arith.constant 0 : i32
    return %c0_i32, %c0_i32_0 : i32, i32
  }
  func.func @transform_23(%arg0: i32, %arg1: i32) -> (i32, i32) {
    %c0_i32 = arith.constant 0 : i32
    %c0_i32_0 = arith.constant 0 : i32
    %c0_i32_1 = arith.constant 0 : i32
    return %c0_i32, %c0_i32_0 : i32, i32
  }
  func.func @transform_24(%arg0: i32, %arg1: i32) -> (i32, i32) {
    %c0_i32 = arith.constant 0 : i32
    %c0_i32_0 = arith.constant 0 : i32
    %c0_i32_1 = arith.constant 0 : i32
    return %c0_i32, %c0_i32_0 : i32, i32
  }
  func.func @transform_25(%arg0: i32, %arg1: i32) -> (i32, i32, i32) {
    %c0_i32 = arith.constant 0 : i32
    %c0_i32_0 = arith.constant 0 : i32
    %c0_i32_1 = arith.constant 0 : i32
    return %arg0, %c0_i32, %c0_i32_0 : i32, i32, i32
  }
}

</mosaic_0001>

<llo_original>
// kernel: frt_clip_vit_forward.1
$region0: #{frt_clip_vit_forward.1}
  #allocation0 [shape = 'u32[]', space=smem, size = 0x4, offset = 0x4, fixed_abs, tag = 'smem constant byte address 0x4 - core index']
  #allocation1 [shape = 'u32[144,128]{1,0:T(1,128)}', space=vmem, size = 0x12000, scoped, tag = 'internal scratch']
  #allocation2 [shape = 'f32[5,128]{1,0:T(8,128)}', space=vmem, size = 0x1000, scoped, tag = 'scratch operand']
  %s0 = inlined_call_operand.vmem [shape: f32[2,4,192], index: 0, kind: input, shape index: {}]
  %s1 = inlined_call_operand.hbm [shape: bf16[192,128], index: 1, kind: input, shape index: {}]
  %s2 = inlined_call_operand.vmem [shape: f32[1,128], index: 2, kind: input, shape index: {}]
  %s3 = inlined_call_operand.vmem [shape: f32[1,1,128], index: 3, kind: input, shape index: {}]
  %s4 = inlined_call_operand.vmem [shape: f32[1,5,128], index: 4, kind: input, shape index: {}]
  %s5 = inlined_call_operand.hbm [shape: f32[2,1,128], index: 5, kind: input, shape index: {}]
  %s6 = inlined_call_operand.hbm [shape: f32[2,1,128], index: 6, kind: input, shape index: {}]
  %s7 = inlined_call_operand.hbm [shape: bf16[2,128,384], index: 7, kind: input, shape index: {}]
  %s8 = inlined_call_operand.hbm [shape: f32[2,1,384], index: 8, kind: input, shape index: {}]
  %s9 = inlined_call_operand.hbm [shape: bf16[2,128,128], index: 9, kind: input, shape index: {}]
  %s10 = inlined_call_operand.hbm [shape: f32[2,1,128], index: 10, kind: input, shape index: {}]
  %s11 = inlined_call_operand.hbm [shape: f32[2,1,128], index: 11, kind: input, shape index: {}]
  %s12 = inlined_call_operand.hbm [shape: f32[2,1,128], index: 12, kind: input, shape index: {}]
  %s13 = inlined_call_operand.vmem [shape: bf16[2,128,512], index: 13, kind: input, shape index: {}]
  %s14 = inlined_call_operand.vmem [shape: f32[2,1,512], index: 14, kind: input, shape index: {}]
  %s15 = inlined_call_operand.vmem [shape: bf16[2,512,128], index: 15, kind: input, shape index: {}]
  %s16 = inlined_call_operand.hbm [shape: f32[2,1,128], index: 16, kind: input, shape index: {}]
  %s17 = inlined_call_operand.hbm [shape: f32[1,128], index: 17, kind: input, shape index: {}]
  %s18 = inlined_call_operand.hbm [shape: f32[1,128], index: 18, kind: input, shape index: {}]
  %s19 = inlined_call_operand.hbm [shape: f32[1,128], index: 19, kind: input, shape index: {}]
  %s20 = inlined_call_operand.hbm [shape: f32[1,128], index: 20, kind: input, shape index: {}]
  %s21 = inlined_call_operand.hbm [shape: f32[1,128], index: 21, kind: input, shape index: {}]
  %s22 = inlined_call_operand.hbm [shape: f32[1,128], index: 22, kind: input, shape index: {}]
  %s23 = inlined_call_operand.vmem [shape: bf16[128,10], index: 23, kind: input, shape index: {}]
  %s24 = inlined_call_operand.hbm [shape: f32[1,10], index: 24, kind: input, shape index: {}]
  %s25 = inlined_call_operand.hbm [shape: f32[2,1,10], index: 25, kind: output, shape index: {}]
  %s26 = sld [smem:[#allocation0]]
  $region209: #{frt_clip_vit_forward.1} parent=0
    _
  %s28 = ssub.s32 1, %s26
  %s29 = scalar_select 0, %s28, %s26
  $region1: #{frt_clip_vit_forward.1} parent=0
    #allocation3 [shape = 'u8[49152]{0}', space=vmem, size = 0xc000, scoped, tag = 'input window, operand 1, single buffered']
    #allocation4 [shape = 's32[2]{0}', space=sflag, size = 0x8, scoped, tag = 'scoped memory for frt_clip_vit_forward.1']
    #allocation5 [shape = 's32[2]{0}', space=sflag, size = 0x8, scoped, tag = 'scoped memory for frt_clip_vit_forward.1']
    #allocation6 [shape = 'u8[1024]{0}', space=vmem, size = 0x400, scoped, tag = 'input window, operand 5']
    #allocation7 [shape = 's32[2]{0}', space=sflag, size = 0x8, scoped, tag = 'scoped memory for frt_clip_vit_forward.1']
    #allocation8 [shape = 'u8[1024]{0}', space=vmem, size = 0x400, scoped, tag = 'input window, operand 6']
    #allocation9 [shape = 'u8[196608]{0}', space=vmem, size = 0x30000, scoped, tag = 'input window, operand 7']
    #allocation10 [shape = 's32[2]{0}', space=sflag, size = 0x8, scoped, tag = 'scoped memory for frt_clip_vit_forward.1']
    #allocation11 [shape = 'u8[3072]{0}', space=vmem, size = 0xc00, scoped, tag = 'input window, operand 8']
    #allocation12 [shape = 'u8[65536]{0}', space=vmem, size = 0x10000, scoped, tag = 'input window, operand 9']
    #allocation13 [shape = 's32[2]{0}', space=sflag, size = 0x8, scoped, tag = 'scoped memory for frt_clip_vit_forward.1']
    #allocation14 [shape = 'u8[1024]{0}', space=vmem, size = 0x400, scoped, tag = 'input window, operand 10']
    #allocation15 [shape = 'u8[1024]{0}', space=vmem, size = 0x400, scoped, tag = 'input window, operand 11']
    #allocation16 [shape = 's32[2]{0}', space=sflag, size = 0x8, scoped, tag = 'scoped memory for frt_clip_vit_forward.1']
    #allocation17 [shape = 'u8[1024]{0}', space=vmem, size = 0x400, scoped, tag = 'input window, operand 12']
    #allocation18 [shape = 'u8[1024]{0}', space=vmem, size = 0x400, scoped, tag = 'input window, operand 16']
    #allocation19 [shape = 's32[2]{0}', space=sflag, size = 0x8, scoped, tag = 'scoped memory for frt_clip_vit_forward.1']
    #allocation20 [shape = 'u8[512]{0}', space=vmem, size = 0x400, scoped, tag = 'input window, operand 17, single buffered']
    #allocation21 [shape = 'u8[512]{0}', space=vmem, size = 0x400, scoped, tag = 'input window, operand 18, single buffered']
    #allocation22 [shape = 's32[1]{0}', space=sflag, size = 0x4, scoped, tag = 'scoped memory for frt_clip_vit_forward.1']
    #allocation23 [shape = 'u8[512]{0}', space=vmem, size = 0x400, scoped, tag = 'input window, operand 19, single buffered']
    #allocation24 [shape = 'u8[512]{0}', space=vmem, size = 0x400, scoped, tag = 'input window, operand 20, single buffered']
    #allocation25 [shape = 's32[1]{0}', space=sflag, size = 0x4, scoped, tag = 'scoped memory for frt_clip_vit_forward.1']
    #allocation26 [shape = 'u8[512]{0}', space=vmem, size = 0x400, scoped, tag = 'input window, operand 21, single buffered']
    #allocation27 [shape = 'u8[512]{0}', space=vmem, size = 0x400, scoped, tag = 'input window, operand 22, single buffered']
    #allocation28 [shape = 's32[1]{0}', space=sflag, size = 0x4, scoped, tag = 'scoped memory for frt_clip_vit_forward.1']
    #allocation29 [shape = 'u8[512]{0}', space=vmem, size = 0x400, scoped, tag = 'input window, operand 24, single buffered']
    #allocation30 [shape = 'u8[1024]{0}', space=vmem, size = 0x400, scoped, tag = 'output window, operand 0']
    %30 = vsyncpa [#allocation4], 0
    %31 = vsyncpa [#allocation7], 0
    %s32 = scalar_lea.sflag [#allocation7], 1
    %33 = vsyncpa %s32, 0
    %34 = vsyncpa [#allocation10], 0
    %s35 = scalar_lea.sflag [#allocation10], 1
    %36 = vsyncpa %s35, 0
    %37 = vsyncpa [#allocation13], 0
    %s38 = scalar_lea.sflag [#allocation13], 1
    %39 = vsyncpa %s38, 0
    %40 = vsyncpa [#allocation16], 0
    %s41 = scalar_lea.sflag [#allocation16], 1
    %42 = vsyncpa %s41, 0
    %43 = vsyncpa [#allocation19], 0
    %s44 = scalar_lea.sflag [#allocation19], 1
    %45 = vsyncpa %s44, 0
    %46 = vsyncpa [#allocation22], 0
    %47 = vsyncpa [#allocation25], 0
    %48 = vsyncpa [#allocation28], 0
    %49 = vsyncpa [#allocation5], 0
    %s50 = scalar_lea.sflag [#allocation5], 1
    %51 = vsyncpa %s50, 0
    loop: start=0, step=1, limit=6
    $region2: #{frt_clip_vit_forward.1} parent=1 // loop_pre_header
      _
    $region3: #{frt_clip_vit_forward.1} parent=1 // loop_header
      %s53 = sphi 0, %s57
      %p54 = scmp.ge.s32.totalorder %s53, 6
      %s60 = sphi 0, %s72
      %s61 = sphi 0, %s68
      %s62 = sphi 0, %s60
      %s63 = sphi 0, %s61
      %s64 = sphi 0, %s62
      %s65 = sphi 0, %s63
      %s75 = sphi 0, %s77
      %s78 = sphi 0, %s75
      %s79 = sphi 0, %s78
      %s95 = sphi 0, %s79
      %s99 = sphi 0, %s99
      %s101 = sphi 0, %s99
      %s102 = sphi 0, %s101
      %s116 = sphi 0, %s102
      %s120 = sphi 0, %s120
      %s122 = sphi 0, %s120
      %s123 = sphi 0, %s122
      %s137 = sphi 0, %s123
      %s141 = sphi 0, %s141
      %s143 = sphi 0, %s141
      %s144 = sphi 0, %s143
      %s158 = sphi 0, %s144
      %s162 = sphi 0, %s162
      %s164 = sphi 0, %s162
      %s165 = sphi 0, %s164
      %s179 = sphi 0, %s165
      %s185 = sphi 0, %s187
      %s188 = sphi 0, %s185
      %s189 = sphi 0, %s188
      %s205 = sphi 0, %s189
      %s211 = sphi 0, %s213
      %s214 = sphi 0, %s211
      %s215 = sphi 0, %s214
      %s231 = sphi 0, %s215
      %s237 = sphi 0, %s239
      %s240 = sphi 0, %s237
      %s241 = sphi 0, %s240
      %s257 = sphi 0, %s241
      %s263 = sphi 0, %s265
      %s266 = sphi 0, %s263
      %s267 = sphi 0, %s266
      %s283 = sphi 0, %s267
      %s289 = sphi 0, %s291
      %s292 = sphi 0, %s289
      %s293 = sphi 0, %s292
      %s309 = sphi 0, %s293
      %s315 = sphi 0, %s317
      %s318 = sphi 0, %s315
      %s319 = sphi 0, %s318
      %s335 = sphi 0, %s319
      %s341 = sphi 0, %s343
      %s344 = sphi 0, %s341
      %s345 = sphi 0, %s344
      %s361 = sphi 0, %s345
      %s367 = sphi 0, %s369
      %s370 = sphi 0, %s367
      %s371 = sphi 0, %s370
      %s387 = sphi 0, %s371
      %s393 = sphi 0, %s395
      %s396 = sphi 0, %s393
      %s397 = sphi 0, %s396
      %s413 = sphi 0, %s397
      %s419 = sphi 0, %s421
      %s422 = sphi 0, %s419
      %s423 = sphi 0, %s422
      %s439 = sphi 0, %s423
      %s445 = sphi 0, %s447
      %s448 = sphi 0, %s445
      %s449 = sphi 0, %s448
      %s465 = sphi 0, %s449
      %s471 = sphi 0, %s473
      %s474 = sphi 0, %s471
      %s475 = sphi 0, %s474
      %s491 = sphi 0, %s475
      %s495 = sphi 0, %s495
      %s497 = sphi 0, %s495
      %s498 = sphi 0, %s497
      %s512 = sphi 0, %s498
      %s516 = sphi 0, %s516
      %s518 = sphi 0, %s516
      %s519 = sphi 0, %s518
      %s533 = sphi 0, %s519
      %s537 = sphi 0, %s537
      %s539 = sphi 0, %s537
      %s540 = sphi 0, %s539
      %s554 = sphi 0, %s540
      %s558 = sphi 0, %s558
      %s560 = sphi 0, %s558
      %s561 = sphi 0, %s560
      %s575 = sphi 0, %s561
      %s579 = sphi 0, %s579
      %s581 = sphi 0, %s579
      %s582 = sphi 0, %s581
      %s596 = sphi 0, %s582
      %s600 = sphi 0, %s600
      %s602 = sphi 0, %s600
      %s603 = sphi 0, %s602
      %s617 = sphi 0, %s603
      %s621 = sphi 0, %s621
      %s623 = sphi 0, %s621
      %s624 = sphi 0, %s623
      %s638 = sphi 0, %s624
      %s642 = sphi 0, %s642
      %s644 = sphi 0, %s642
      %s645 = sphi 0, %s644
      %s659 = sphi 0, %s645
      %s665 = sphi 0, %s667
      %s668 = sphi 0, %s665
      %s669 = sphi 0, %s668
      %s685 = sphi 0, %s669
    $region4: #{frt_clip_vit_forward.1} parent=1 // loop_header_branch
      %56 = sbr.rel (%p54) target = $region8
    $region5: #{frt_clip_vit_forward.1} parent=1 // loop_body
      %s58 = ssub.s32 %s53, 1
      %s59 = ssub.s32 %s53, 2
      %s66 = sadd.s32 1, %s61
      %p67 = scmp.ge.s32.totalorder %s66, 2
      %s68 = scalar_select %p67, 0, %s66
      %s69 = sadd.s32 1, %s60
      %s70 = scalar_select %p67, %s69, %s60
      %p71 = scmp.ge.s32.totalorder %s70, 2
      %s72 = scalar_select %p71, 0, %s70
      %s73 = ssub.s32 %s60, %s72
      %p74 = scmp.eq.s32.totalorder %s73, 0
      %s76 = sadd.s32 %s75, 1
      %s77 = scalar_select %p74, %s75, %s76
      %p80 = pneg %p74
      %p81 = scmp.eq.s32.totalorder %s53, 3
      %p82 = por %p80, %p81
      %p83 = scmp.ne.s32.totalorder %s75, %s78
      %p84 = scmp.eq.s32.totalorder %s53, 0
      %p85 = por %p83, %p84
      %p86 = scmp.ne.s32.totalorder %s75, %s78
      %p87 = scmp.eq.s32.totalorder %s58, 3
      %p88 = por %p86, %p87
      %p89 = scmp.ne.s32.totalorder %s78, %s79
      %p90 = scmp.eq.s32.totalorder %s58, 0
      %p91 = por %p89, %p90
      %p92 = scmp.ne.s32.totalorder %s78, %s79
      %p93 = scmp.eq.s32.totalorder %s59, 3
      %p94 = por %p92, %p93
      %p96 = scmp.ne.s32.totalorder %s79, %s95
      %p97 = scmp.eq.s32.totalorder %s59, 0
      %p98 = por %p96, %p97
      %s100 = sadd.s32 %s99, 1
      %p103 = scmp.eq.s32.totalorder %s53, 3
      %p104 = scmp.ne.s32.totalorder %s99, %s101
      %p105 = scmp.eq.s32.totalorder %s53, 0
      %p106 = por %p104, %p105
      %p107 = scmp.ne.s32.totalorder %s99, %s101
      %p108 = scmp.eq.s32.totalorder %s58, 3
      %p109 = por %p107, %p108
      %p110 = scmp.ne.s32.totalorder %s101, %s102
      %p111 = scmp.eq.s32.totalorder %s58, 0
      %p112 = por %p110, %p111
      %p113 = scmp.ne.s32.totalorder %s101, %s102
      %p114 = scmp.eq.s32.totalorder %s59, 3
      %p115 = por %p113, %p114
      %p117 = scmp.ne.s32.totalorder %s102, %s116
      %p118 = scmp.eq.s32.totalorder %s59, 0
      %p119 = por %p117, %p118
      %s121 = sadd.s32 %s120, 1
      %p124 = scmp.eq.s32.totalorder %s53, 3
      %p125 = scmp.ne.s32.totalorder %s120, %s122
      %p126 = scmp.eq.s32.totalorder %s53, 0
      %p127 = por %p125, %p126
      %p128 = scmp.ne.s32.totalorder %s120, %s122
      %p129 = scmp.eq.s32.totalorder %s58, 3
      %p130 = por %p128, %p129
      %p131 = scmp.ne.s32.totalorder %s122, %s123
      %p132 = scmp.eq.s32.totalorder %s58, 0
      %p133 = por %p131, %p132
      %p134 = scmp.ne.s32.totalorder %s122, %s123
      %p135 = scmp.eq.s32.totalorder %s59, 3
      %p136 = por %p134, %p135
      %p138 = scmp.ne.s32.totalorder %s123, %s137
      %p139 = scmp.eq.s32.totalorder %s59, 0
      %p140 = por %p138, %p139
      %s142 = sadd.s32 %s141, 1
      %p145 = scmp.eq.s32.totalorder %s53, 3
      %p146 = scmp.ne.s32.totalorder %s141, %s143
      %p147 = scmp.eq.s32.totalorder %s53, 0
      %p148 = por %p146, %p147
      %p149 = scmp.ne.s32.totalorder %s141, %s143
      %p150 = scmp.eq.s32.totalorder %s58, 3
      %p151 = por %p149, %p150
      %p152 = scmp.ne.s32.totalorder %s143, %s144
      %p153 = scmp.eq.s32.totalorder %s58, 0
      %p154 = por %p152, %p153
      %p155 = scmp.ne.s32.totalorder %s143, %s144
      %p156 = scmp.eq.s32.totalorder %s59, 3
      %p157 = por %p155, %p156
      %p159 = scmp.ne.s32.totalorder %s144, %s158
      %p160 = scmp.eq.s32.totalorder %s59, 0
      %p161 = por %p159, %p160
      %s163 = sadd.s32 %s162, 1
      %p166 = scmp.eq.s32.totalorder %s53, 3
      %p167 = scmp.ne.s32.totalorder %s162, %s164
      %p168 = scmp.eq.s32.totalorder %s53, 0
      %p169 = por %p167, %p168
      %p170 = scmp.ne.s32.totalorder %s162, %s164
      %p171 = scmp.eq.s32.totalorder %s58, 3
      %p172 = por %p170, %p171
      %p173 = scmp.ne.s32.totalorder %s164, %s165
      %p174 = scmp.eq.s32.totalorder %s58, 0
      %p175 = por %p173, %p174
      %p176 = scmp.ne.s32.totalorder %s164, %s165
      %p177 = scmp.eq.s32.totalorder %s59, 3
      %p178 = por %p176, %p177
      %p180 = scmp.ne.s32.totalorder %s165, %s179
      %p181 = scmp.eq.s32.totalorder %s59, 0
      %p182 = por %p180, %p181
      %s183 = ssub.s32 %s61, %s68
      %p184 = scmp.eq.s32.totalorder %s183, 0
      %s186 = sadd.s32 %s185, 1
      %s187 = scalar_select %p184, %s185, %s186
      %p190 = pneg %p184
      %p191 = scmp.eq.s32.totalorder %s53, 3
      %p192 = por %p190, %p191
      %p193 = scmp.ne.s32.totalorder %s185, %s188
      %p194 = scmp.eq.s32.totalorder %s53, 0
      %p195 = por %p193, %p194
      %p196 = scmp.ne.s32.totalorder %s185, %s188
      %p197 = scmp.eq.s32.totalorder %s58, 3
      %p198 = por %p196, %p197
      %p199 = scmp.ne.s32.totalorder %s188, %s189
      %p200 = scmp.eq.s32.totalorder %s58, 0
      %p201 = por %p199, %p200
      %p202 = scmp.ne.s32.totalorder %s188, %s189
      %p203 = scmp.eq.s32.totalorder %s59, 3
      %p204 = por %p202, %p203
      %p206 = scmp.ne.s32.totalorder %s189, %s205
      %p207 = scmp.eq.s32.totalorder %s59, 0
      %p208 = por %p206, %p207
      %s209 = ssub.s32 %s61, %s68
      %p210 = scmp.eq.s32.totalorder %s209, 0
      %s212 = sadd.s32 %s211, 1
      %s213 = scalar_select %p210, %s211, %s212
      %p216 = pneg %p210
      %p217 = scmp.eq.s32.totalorder %s53, 3
      %p218 = por %p216, %p217
      %p219 = scmp.ne.s32.totalorder %s211, %s214
      %p220 = scmp.eq.s32.totalorder %s53, 0
      %p221 = por %p219, %p220
      %p222 = scmp.ne.s32.totalorder %s211, %s214
      %p223 = scmp.eq.s32.totalorder %s58, 3
      %p224 = por %p222, %p223
      %p225 = scmp.ne.s32.totalorder %s214, %s215
      %p226 = scmp.eq.s32.totalorder %s58, 0
      %p227 = por %p225, %p226
      %p228 = scmp.ne.s32.totalorder %s214, %s215
      %p229 = scmp.eq.s32.totalorder %s59, 3
      %p230 = por %p228, %p229
      %p232 = scmp.ne.s32.totalorder %s215, %s231
      %p233 = scmp.eq.s32.totalorder %s59, 0
      %p234 = por %p232, %p233
      %s235 = ssub.s32 %s61, %s68
      %p236 = scmp.eq.s32.totalorder %s235, 0
      %s238 = sadd.s32 %s237, 1
      %s239 = scalar_select %p236, %s237, %s238
      %p242 = pneg %p236
      %p243 = scmp.eq.s32.totalorder %s53, 3
      %p244 = por %p242, %p243
      %p245 = scmp.ne.s32.totalorder %s237, %s240
      %p246 = scmp.eq.s32.totalorder %s53, 0
      %p247 = por %p245, %p246
      %p248 = scmp.ne.s32.totalorder %s237, %s240
      %p249 = scmp.eq.s32.totalorder %s58, 3
      %p250 = por %p248, %p249
      %p251 = scmp.ne.s32.totalorder %s240, %s241
      %p252 = scmp.eq.s32.totalorder %s58, 0
      %p253 = por %p251, %p252
      %p254 = scmp.ne.s32.totalorder %s240, %s241
      %p255 = scmp.eq.s32.totalorder %s59, 3
      %p256 = por %p254, %p255
      %p258 = scmp.ne.s32.totalorder %s241, %s257
      %p259 = scmp.eq.s32.totalorder %s59, 0
      %p260 = por %p258, %p259
      %s261 = ssub.s32 %s61, %s68
      %p262 = scmp.eq.s32.totalorder %s261, 0
      %s264 = sadd.s32 %s263, 1
      %s265 = scalar_select %p262, %s263, %s264
      %p268 = pneg %p262
      %p269 = scmp.eq.s32.totalorder %s53, 3
      %p270 = por %p268, %p269
      %p271 = scmp.ne.s32.totalorder %s263, %s266
      %p272 = scmp.eq.s32.totalorder %s53, 0
      %p273 = por %p271, %p272
      %p274 = scmp.ne.s32.totalorder %s263, %s266
      %p275 = scmp.eq.s32.totalorder %s58, 3
      %p276 = por %p274, %p275
      %p277 = scmp.ne.s32.totalorder %s266, %s267
      %p278 = scmp.eq.s32.totalorder %s58, 0
      %p279 = por %p277, %p278
      %p280 = scmp.ne.s32.totalorder %s266, %s267
      %p281 = scmp.eq.s32.totalorder %s59, 3
      %p282 = por %p280, %p281
      %p284 = scmp.ne.s32.totalorder %s267, %s283
      %p285 = scmp.eq.s32.totalorder %s59, 0
      %p286 = por %p284, %p285
      %s287 = ssub.s32 %s61, %s68
      %p288 = scmp.eq.s32.totalorder %s287, 0
      %s290 = sadd.s32 %s289, 1
      %s291 = scalar_select %p288, %s289, %s290
      %p294 = pneg %p288
      %p295 = scmp.eq.s32.totalorder %s53, 3
      %p296 = por %p294, %p295
      %p297 = scmp.ne.s32.totalorder %s289, %s292
      %p298 = scmp.eq.s32.totalorder %s53, 0
      %p299 = por %p297, %p298
      %p300 = scmp.ne.s32.totalorder %s289, %s292
      %p301 = scmp.eq.s32.totalorder %s58, 3
      %p302 = por %p300, %p301
      %p303 = scmp.ne.s32.totalorder %s292, %s293
      %p304 = scmp.eq.s32.totalorder %s58, 0
      %p305 = por %p303, %p304
      %p306 = scmp.ne.s32.totalorder %s292, %s293
      %p307 = scmp.eq.s32.totalorder %s59, 3
      %p308 = por %p306, %p307
      %p310 = scmp.ne.s32.totalorder %s293, %s309
      %p311 = scmp.eq.s32.totalorder %s59, 0
      %p312 = por %p310, %p311
      %s313 = ssub.s32 %s61, %s68
      %p314 = scmp.eq.s32.totalorder %s313, 0
      %s316 = sadd.s32 %s315, 1
      %s317 = scalar_select %p314, %s315, %s316
      %p320 = pneg %p314
      %p321 = scmp.eq.s32.totalorder %s53, 3
      %p322 = por %p320, %p321
      %p323 = scmp.ne.s32.totalorder %s315, %s318
      %p324 = scmp.eq.s32.totalorder %s53, 0
      %p325 = por %p323, %p324
      %p326 = scmp.ne.s32.totalorder %s315, %s318
      %p327 = scmp.eq.s32.totalorder %s58, 3
      %p328 = por %p326, %p327
      %p329 = scmp.ne.s32.totalorder %s318, %s319
      %p330 = scmp.eq.s32.totalorder %s58, 0
      %p331 = por %p329, %p330
      %p332 = scmp.ne.s32.totalorder %s318, %s319
      %p333 = scmp.eq.s32.totalorder %s59, 3
      %p334 = por %p332, %p333
      %p336 = scmp.ne.s32.totalorder %s319, %s335
      %p337 = scmp.eq.s32.totalorder %s59, 0
      %p338 = por %p336, %p337
      %s339 = ssub.s32 %s61, %s68
      %p340 = scmp.eq.s32.totalorder %s339, 0
      %s342 = sadd.s32 %s341, 1
      %s343 = scalar_select %p340, %s341, %s342
      %p346 = pneg %p340
      %p347 = scmp.eq.s32.totalorder %s53, 3
      %p348 = por %p346, %p347
      %p349 = scmp.ne.s32.totalorder %s341, %s344
      %p350 = scmp.eq.s32.totalorder %s53, 0
      %p351 = por %p349, %p350
      %p352 = scmp.ne.s32.totalorder %s341, %s344
      %p353 = scmp.eq.s32.totalorder %s58, 3
      %p354 = por %p352, %p353
      %p355 = scmp.ne.s32.totalorder %s344, %s345
      %p356 = scmp.eq.s32.totalorder %s58, 0
      %p357 = por %p355, %p356
      %p358 = scmp.ne.s32.totalorder %s344, %s345
      %p359 = scmp.eq.s32.totalorder %s59, 3
      %p360 = por %p358, %p359
      %p362 = scmp.ne.s32.totalorder %s345, %s361
      %p363 = scmp.eq.s32.totalorder %s59, 0
      %p364 = por %p362, %p363
      %s365 = ssub.s32 %s61, %s68
      %p366 = scmp.eq.s32.totalorder %s365, 0
      %s368 = sadd.s32 %s367, 1
      %s369 = scalar_select %p366, %s367, %s368
      %p372 = pneg %p366
      %p373 = scmp.eq.s32.totalorder %s53, 3
      %p374 = por %p372, %p373
      %p375 = scmp.ne.s32.totalorder %s367, %s370
      %p376 = scmp.eq.s32.totalorder %s53, 0
      %p377 = por %p375, %p376
      %p378 = scmp.ne.s32.totalorder %s367, %s370
      %p379 = scmp.eq.s32.totalorder %s58, 3
      %p380 = por %p378, %p379
      %p381 = scmp.ne.s32.totalorder %s370, %s371
      %p382 = scmp.eq.s32.totalorder %s58, 0
      %p383 = por %p381, %p382
      %p384 = scmp.ne.s32.totalorder %s370, %s371
      %p385 = scmp.eq.s32.totalorder %s59, 3
      %p386 = por %p384, %p385
      %p388 = scmp.ne.s32.totalorder %s371, %s387
      %p389 = scmp.eq.s32.totalorder %s59, 0
      %p390 = por %p388, %p389
      %s391 = ssub.s32 %s61, %s68
      %p392 = scmp.eq.s32.totalorder %s391, 0
      %s394 = sadd.s32 %s393, 1
      %s395 = scalar_select %p392, %s393, %s394
      %p398 = pneg %p392
      %p399 = scmp.eq.s32.totalorder %s53, 3
      %p400 = por %p398, %p399
      %p401 = scmp.ne.s32.totalorder %s393, %s396
      %p402 = scmp.eq.s32.totalorder %s53, 0
      %p403 = por %p401, %p402
      %p404 = scmp.ne.s32.totalorder %s393, %s396
      %p405 = scmp.eq.s32.totalorder %s58, 3
      %p406 = por %p404, %p405
      %p407 = scmp.ne.s32.totalorder %s396, %s397
      %p408 = scmp.eq.s32.totalorder %s58, 0
      %p409 = por %p407, %p408
      %p410 = scmp.ne.s32.totalorder %s396, %s397
      %p411 = scmp.eq.s32.totalorder %s59, 3
      %p412 = por %p410, %p411
      %p414 = scmp.ne.s32.totalorder %s397, %s413
      %p415 = scmp.eq.s32.totalorder %s59, 0
      %p416 = por %p414, %p415
      %s417 = ssub.s32 %s61, %s68
      %p418 = scmp.eq.s32.totalorder %s417, 0
      %s420 = sadd.s32 %s419, 1
      %s421 = scalar_select %p418, %s419, %s420
      %p424 = pneg %p418
      %p425 = scmp.eq.s32.totalorder %s53, 3
      %p426 = por %p424, %p425
      %p427 = scmp.ne.s32.totalorder %s419, %s422
      %p428 = scmp.eq.s32.totalorder %s53, 0
      %p429 = por %p427, %p428
      %p430 = scmp.ne.s32.totalorder %s419, %s422
      %p431 = scmp.eq.s32.totalorder %s58, 3
      %p432 = por %p430, %p431
      %p433 = scmp.ne.s32.totalorder %s422, %s423
      %p434 = scmp.eq.s32.totalorder %s58, 0
      %p435 = por %p433, %p434
      %p436 = scmp.ne.s32.totalorder %s422, %s423
      %p437 = scmp.eq.s32.totalorder %s59, 3
      %p438 = por %p436, %p437
      %p440 = scmp.ne.s32.totalorder %s423, %s439
      %p441 = scmp.eq.s32.totalorder %s59, 0
      %p442 = por %p440, %p441
      %s443 = ssub.s32 %s61, %s68
      %p444 = scmp.eq.s32.totalorder %s443, 0
      %s446 = sadd.s32 %s445, 1
      %s447 = scalar_select %p444, %s445, %s446
      %p450 = pneg %p444
      %p451 = scmp.eq.s32.totalorder %s53, 3
      %p452 = por %p450, %p451
      %p453 = scmp.ne.s32.totalorder %s445, %s448
      %p454 = scmp.eq.s32.totalorder %s53, 0
      %p455 = por %p453, %p454
      %p456 = scmp.ne.s32.totalorder %s445, %s448
      %p457 = scmp.eq.s32.totalorder %s58, 3
      %p458 = por %p456, %p457
      %p459 = scmp.ne.s32.totalorder %s448, %s449
      %p460 = scmp.eq.s32.totalorder %s58, 0
      %p461 = por %p459, %p460
      %p462 = scmp.ne.s32.totalorder %s448, %s449
      %p463 = scmp.eq.s32.totalorder %s59, 3
      %p464 = por %p462, %p463
      %p466 = scmp.ne.s32.totalorder %s449, %s465
      %p467 = scmp.eq.s32.totalorder %s59, 0
      %p468 = por %p466, %p467
      %s469 = ssub.s32 %s61, %s68
      %p470 = scmp.eq.s32.totalorder %s469, 0
      %s472 = sadd.s32 %s471, 1
      %s473 = scalar_select %p470, %s471, %s472
      %p476 = pneg %p470
      %p477 = scmp.eq.s32.totalorder %s53, 3
      %p478 = por %p476, %p477
      %p479 = scmp.ne.s32.totalorder %s471, %s474
      %p480 = scmp.eq.s32.totalorder %s53, 0
      %p481 = por %p479, %p480
      %p482 = scmp.ne.s32.totalorder %s471, %s474
      %p483 = scmp.eq.s32.totalorder %s58, 3
      %p484 = por %p482, %p483
      %p485 = scmp.ne.s32.totalorder %s474, %s475
      %p486 = scmp.eq.s32.totalorder %s58, 0
      %p487 = por %p485, %p486
      %p488 = scmp.ne.s32.totalorder %s474, %s475
      %p489 = scmp.eq.s32.totalorder %s59, 3
      %p490 = por %p488, %p489
      %p492 = scmp.ne.s32.totalorder %s475, %s491
      %p493 = scmp.eq.s32.totalorder %s59, 0
      %p494 = por %p492, %p493
      %s496 = sadd.s32 %s495, 1
      %p499 = scmp.eq.s32.totalorder %s53, 3
      %p500 = scmp.ne.s32.totalorder %s495, %s497
      %p501 = scmp.eq.s32.totalorder %s53, 0
      %p502 = por %p500, %p501
      %p503 = scmp.ne.s32.totalorder %s495, %s497
      %p504 = scmp.eq.s32.totalorder %s58, 3
      %p505 = por %p503, %p504
      %p506 = scmp.ne.s32.totalorder %s497, %s498
      %p507 = scmp.eq.s32.totalorder %s58, 0
      %p508 = por %p506, %p507
      %p509 = scmp.ne.s32.totalorder %s497, %s498
      %p510 = scmp.eq.s32.totalorder %s59, 3
      %p511 = por %p509, %p510
      %p513 = scmp.ne.s32.totalorder %s498, %s512
      %p514 = scmp.eq.s32.totalorder %s59, 0
      %p515 = por %p513, %p514
      %s517 = sadd.s32 %s516, 1
      %p520 = scmp.eq.s32.totalorder %s53, 3
      %p521 = scmp.ne.s32.totalorder %s516, %s518
      %p522 = scmp.eq.s32.totalorder %s53, 0
      %p523 = por %p521, %p522
      %p524 = scmp.ne.s32.totalorder %s516, %s518
      %p525 = scmp.eq.s32.totalorder %s58, 3
      %p526 = por %p524, %p525
      %p527 = scmp.ne.s32.totalorder %s518, %s519
      %p528 = scmp.eq.s32.totalorder %s58, 0
      %p529 = por %p527, %p528
      %p530 = scmp.ne.s32.totalorder %s518, %s519
      %p531 = scmp.eq.s32.totalorder %s59, 3
      %p532 = por %p530, %p531
      %p534 = scmp.ne.s32.totalorder %s519, %s533
      %p535 = scmp.eq.s32.totalorder %s59, 0
      %p536 = por %p534, %p535
      %s538 = sadd.s32 %s537, 1
      %p541 = scmp.eq.s32.totalorder %s53, 3
      %p542 = scmp.ne.s32.totalorder %s537, %s539
      %p543 = scmp.eq.s32.totalorder %s53, 0
      %p544 = por %p542, %p543
      %p545 = scmp.ne.s32.totalorder %s537, %s539
      %p546 = scmp.eq.s32.totalorder %s58, 3
      %p547 = por %p545, %p546
      %p548 = scmp.ne.s32.totalorder %s539, %s540
      %p549 = scmp.eq.s32.totalorder %s58, 0
      %p550 = por %p548, %p549
      %p551 = scmp.ne.s32.totalorder %s539, %s540
      %p552 = scmp.eq.s32.totalorder %s59, 3
      %p553 = por %p551, %p552
      %p555 = scmp.ne.s32.totalorder %s540, %s554
      %p556 = scmp.eq.s32.totalorder %s59, 0
      %p557 = por %p555, %p556
      %s559 = sadd.s32 %s558, 1
      %p562 = scmp.eq.s32.totalorder %s53, 3
      %p563 = scmp.ne.s32.totalorder %s558, %s560
      %p564 = scmp.eq.s32.totalorder %s53, 0
      %p565 = por %p563, %p564
      %p566 = scmp.ne.s32.totalorder %s558, %s560
      %p567 = scmp.eq.s32.totalorder %s58, 3
      %p568 = por %p566, %p567
      %p569 = scmp.ne.s32.totalorder %s560, %s561
      %p570 = scmp.eq.s32.totalorder %s58, 0
      %p571 = por %p569, %p570
      %p572 = scmp.ne.s32.totalorder %s560, %s561
      %p573 = scmp.eq.s32.totalorder %s59, 3
      %p574 = por %p572, %p573
      %p576 = scmp.ne.s32.totalorder %s561, %s575
      %p577 = scmp.eq.s32.totalorder %s59, 0
      %p578 = por %p576, %p577
      %s580 = sadd.s32 %s579, 1
      %p583 = scmp.eq.s32.totalorder %s53, 3
      %p584 = scmp.ne.s32.totalorder %s579, %s581
      %p585 = scmp.eq.s32.totalorder %s53, 0
      %p586 = por %p584, %p585
      %p587 = scmp.ne.s32.totalorder %s579, %s581
      %p588 = scmp.eq.s32.totalorder %s58, 3
      %p589 = por %p587, %p588
      %p590 = scmp.ne.s32.totalorder %s581, %s582
      %p591 = scmp.eq.s32.totalorder %s58, 0
      %p592 = por %p590, %p591
      %p593 = scmp.ne.s32.totalorder %s581, %s582
      %p594 = scmp.eq.s32.totalorder %s59, 3
      %p595 = por %p593, %p594
      %p597 = scmp.ne.s32.totalorder %s582, %s596
      %p598 = scmp.eq.s32.totalorder %s59, 0
      %p599 = por %p597, %p598
      %s601 = sadd.s32 %s600, 1
      %p604 = scmp.eq.s32.totalorder %s53, 3
      %p605 = scmp.ne.s32.totalorder %s600, %s602
      %p606 = scmp.eq.s32.totalorder %s53, 0
      %p607 = por %p605, %p606
      %p608 = scmp.ne.s32.totalorder %s600, %s602
      %p609 = scmp.eq.s32.totalorder %s58, 3
      %p610 = por %p608, %p609
      %p611 = scmp.ne.s32.totalorder %s602, %s603
      %p612 = scmp.eq.s32.totalorder %s58, 0
      %p613 = por %p611, %p612
      %p614 = scmp.ne.s32.totalorder %s602, %s603
      %p615 = scmp.eq.s32.totalorder %s59, 3
      %p616 = por %p614, %p615
      %p618 = scmp.ne.s32.totalorder %s603, %s617
      %p619 = scmp.eq.s32.totalorder %s59, 0
      %p620 = por %p618, %p619
      %s622 = sadd.s32 %s621, 1
      %p625 = scmp.eq.s32.totalorder %s53, 3
      %p626 = scmp.ne.s32.totalorder %s621, %s623
      %p627 = scmp.eq.s32.totalorder %s53, 0
      %p628 = por %p626, %p627
      %p629 = scmp.ne.s32.totalorder %s621, %s623
      %p630 = scmp.eq.s32.totalorder %s58, 3
      %p631 = por %p629, %p630
      %p632 = scmp.ne.s32.totalorder %s623, %s624
      %p633 = scmp.eq.s32.totalorder %s58, 0
      %p634 = por %p632, %p633
      %p635 = scmp.ne.s32.totalorder %s623, %s624
      %p636 = scmp.eq.s32.totalorder %s59, 3
      %p637 = por %p635, %p636
      %p639 = scmp.ne.s32.totalorder %s624, %s638
      %p640 = scmp.eq.s32.totalorder %s59, 0
      %p641 = por %p639, %p640
      %s643 = sadd.s32 %s642, 1
      %p646 = scmp.eq.s32.totalorder %s53, 3
      %p647 = scmp.ne.s32.totalorder %s642, %s644
      %p648 = scmp.eq.s32.totalorder %s53, 0
      %p649 = por %p647, %p648
      %p650 = scmp.ne.s32.totalorder %s642, %s644
      %p651 = scmp.eq.s32.totalorder %s58, 3
      %p652 = por %p650, %p651
      %p653 = scmp.ne.s32.totalorder %s644, %s645
      %p654 = scmp.eq.s32.totalorder %s58, 0
      %p655 = por %p653, %p654
      %p656 = scmp.ne.s32.totalorder %s644, %s645
      %p657 = scmp.eq.s32.totalorder %s59, 3
      %p658 = por %p656, %p657
      %p660 = scmp.ne.s32.totalorder %s645, %s659
      %p661 = scmp.eq.s32.totalorder %s59, 0
      %p662 = por %p660, %p661
      %s663 = ssub.s32 %s60, %s72
      %p664 = scmp.eq.s32.totalorder %s663, 0
      %s666 = sadd.s32 %s665, 1
      %s667 = scalar_select %p664, %s665, %s666
      %p670 = pneg %p664
      %p671 = scmp.eq.s32.totalorder %s53, 3
      %p672 = por %p670, %p671
      %p673 = scmp.ne.s32.totalorder %s665, %s668
      %p674 = scmp.eq.s32.totalorder %s53, 0
      %p675 = por %p673, %p674
      %p676 = scmp.ne.s32.totalorder %s665, %s668
      %p677 = scmp.eq.s32.totalorder %s58, 3
      %p678 = por %p676, %p677
      %p679 = scmp.ne.s32.totalorder %s668, %s669
      %p680 = scmp.eq.s32.totalorder %s58, 0
      %p681 = por %p679, %p680
      %p682 = scmp.ne.s32.totalorder %s668, %s669
      %p683 = scmp.eq.s32.totalorder %s59, 3
      %p684 = por %p682, %p683
      %p686 = scmp.ne.s32.totalorder %s669, %s685
      %p687 = scmp.eq.s32.totalorder %s59, 0
      %p688 = por %p686, %p687
      %p689 = scmp.le.s32.totalorder 1, %s53
      %p690 = scmp.lt.s32.totalorder %s53, 5
      %p691 = pnand %p689, %p690
      %p692 = pneg %p691
      // Predicated region
      $region9: #{frt_clip_vit_forward.1} parent=5 // pred_check
        _
      $region10: #{frt_clip_vit_forward.1} parent=5 // pred_check_branch
        %694 = sbr.rel (%p691) target = $region12
      $region11: #{frt_clip_vit_forward.1} parent=5 // pred_region
        %s695 = ssub.s32 %s53, 1
        // Predicated region
        $region13: #{frt_clip_vit_forward.1} parent=11 // pred_check
          %p696 = pneg %p112
        $region14: #{frt_clip_vit_forward.1} parent=11 // pred_check_branch
          %698 = sbr.rel (%p696) target = $region16
        $region15: #{frt_clip_vit_forward.1} parent=11 // pred_region
          %s700 = ssub.s32 1536, 1536
          %701 = vsyncadd [#allocation4], %s700
          %s702 = sshll.u32 [#allocation3], 4
          %s703 = int_to_ptr.vmem [resolvable:$true] %s702
          %708 = dma.hbm_to_vmem [thread:$0]  %s1, 1536, %s703, [#allocation4], 64, 64, 4
        $region16: #{frt_clip_vit_forward.1} parent=11 // pred_fallthru
          _
        // Predicated region
        $region17: #{frt_clip_vit_forward.1} parent=11 // pred_check
          %p709 = pneg %p133
        $region18: #{frt_clip_vit_forward.1} parent=11 // pred_check_branch
          %711 = sbr.rel (%p709) target = $region20
        $region19: #{frt_clip_vit_forward.1} parent=11 // pred_region
          _
        $region20: #{frt_clip_vit_forward.1} parent=11 // pred_fallthru
          _
        // Predicated region
        $region21: #{frt_clip_vit_forward.1} parent=11 // pred_check
          %p712 = pneg %p154
        $region22: #{frt_clip_vit_forward.1} parent=11 // pred_check_branch
          %714 = sbr.rel (%p712) target = $region24
        $region23: #{frt_clip_vit_forward.1} parent=11 // pred_region
          _
        $region24: #{frt_clip_vit_forward.1} parent=11 // pred_fallthru
          _
        // Predicated region
        $region25: #{frt_clip_vit_forward.1} parent=11 // pred_check
          %p715 = pneg %p175
        $region26: #{frt_clip_vit_forward.1} parent=11 // pred_check_branch
          %717 = sbr.rel (%p715) target = $region28
        $region27: #{frt_clip_vit_forward.1} parent=11 // pred_region
          _
        $region28: #{frt_clip_vit_forward.1} parent=11 // pred_fallthru
          _
        // Predicated region
        $region29: #{frt_clip_vit_forward.1} parent=11 // pred_check
          %p718 = pneg %p508
        $region30: #{frt_clip_vit_forward.1} parent=11 // pred_check_branch
          %720 = sbr.rel (%p718) target = $region32
        $region31: #{frt_clip_vit_forward.1} parent=11 // pred_region
          %s722 = ssub.s32 16, 16
          %723 = vsyncadd [#allocation19], %s722
          %s725 = sshll.u32 [#allocation20], 4
          %s726 = int_to_ptr.vmem [resolvable:$true] %s725
          %728 = dma.hbm_to_vmem [thread:$0]  %s17, 16, %s726, [#allocation19]
        $region32: #{frt_clip_vit_forward.1} parent=11 // pred_fallthru
          _
        // Predicated region
        $region33: #{frt_clip_vit_forward.1} parent=11 // pred_check
          %p729 = pneg %p529
        $region34: #{frt_clip_vit_forward.1} parent=11 // pred_check_branch
          %731 = sbr.rel (%p729) target = $region36
        $region35: #{frt_clip_vit_forward.1} parent=11 // pred_region
          %s733 = ssub.s32 16, 16
          %734 = vsyncadd [#allocation22], %s733
          %s736 = sshll.u32 [#allocation21], 4
          %s737 = int_to_ptr.vmem [resolvable:$true] %s736
          %739 = dma.hbm_to_vmem [thread:$0]  %s18, 16, %s737, [#allocation22]
        $region36: #{frt_clip_vit_forward.1} parent=11 // pred_fallthru
          _
        // Predicated region
        $region37: #{frt_clip_vit_forward.1} parent=11 // pred_check
          %p740 = pneg %p550
        $region38: #{frt_clip_vit_forward.1} parent=11 // pred_check_branch
          %742 = sbr.rel (%p740) target = $region40
        $region39: #{frt_clip_vit_forward.1} parent=11 // pred_region
          %s744 = ssub.s32 16, 16
          %745 = vsyncadd [#allocation22], %s744
          %s747 = sshll.u32 [#allocation23], 4
          %s748 = int_to_ptr.vmem [resolvable:$true] %s747
          %750 = dma.hbm_to_vmem [thread:$0]  %s19, 16, %s748, [#allocation22]
        $region40: #{frt_clip_vit_forward.1} parent=11 // pred_fallthru
          _
        // Predicated region
        $region41: #{frt_clip_vit_forward.1} parent=11 // pred_check
          %p751 = pneg %p571
        $region42: #{frt_clip_vit_forward.1} parent=11 // pred_check_branch
          %753 = sbr.rel (%p751) target = $region44
        $region43: #{frt_clip_vit_forward.1} parent=11 // pred_region
          %s755 = ssub.s32 16, 16
          %756 = vsyncadd [#allocation25], %s755
          %s758 = sshll.u32 [#allocation24], 4
          %s759 = int_to_ptr.vmem [resolvable:$true] %s758
          %761 = dma.hbm_to_vmem [thread:$0]  %s20, 16, %s759, [#allocation25]
        $region44: #{frt_clip_vit_forward.1} parent=11 // pred_fallthru
          _
        // Predicated region
        $region45: #{frt_clip_vit_forward.1} parent=11 // pred_check
          %p762 = pneg %p592
        $region46: #{frt_clip_vit_forward.1} parent=11 // pred_check_branch
          %764 = sbr.rel (%p762) target = $region48
        $region47: #{frt_clip_vit_forward.1} parent=11 // pred_region
          %s766 = ssub.s32 16, 16
          %767 = vsyncadd [#allocation25], %s766
          %s769 = sshll.u32 [#allocation26], 4
          %s770 = int_to_ptr.vmem [resolvable:$true] %s769
          %772 = dma.hbm_to_vmem [thread:$0]  %s21, 16, %s770, [#allocation25]
        $region48: #{frt_clip_vit_forward.1} parent=11 // pred_fallthru
          _
        // Predicated region
        $region49: #{frt_clip_vit_forward.1} parent=11 // pred_check
          %p773 = pneg %p613
        $region50: #{frt_clip_vit_forward.1} parent=11 // pred_check_branch
          %775 = sbr.rel (%p773) target = $region52
        $region51: #{frt_clip_vit_forward.1} parent=11 // pred_region
          %s777 = ssub.s32 16, 16
          %778 = vsyncadd [#allocation28], %s777
          %s780 = sshll.u32 [#allocation27], 4
          %s781 = int_to_ptr.vmem [resolvable:$true] %s780
          %783 = dma.hbm_to_vmem [thread:$0]  %s22, 16, %s781, [#allocation28]
        $region52: #{frt_clip_vit_forward.1} parent=11 // pred_fallthru
          _
        // Predicated region
        $region53: #{frt_clip_vit_forward.1} parent=11 // pred_check
          %p784 = pneg %p634
        $region54: #{frt_clip_vit_forward.1} parent=11 // pred_check_branch
          %786 = sbr.rel (%p784) target = $region56
        $region55: #{frt_clip_vit_forward.1} parent=11 // pred_region
          _
        $region56: #{frt_clip_vit_forward.1} parent=11 // pred_fallthru
          _
        // Predicated region
        $region57: #{frt_clip_vit_forward.1} parent=11 // pred_check
          %p787 = pneg %p655
        $region58: #{frt_clip_vit_forward.1} parent=11 // pred_check_branch
          %789 = sbr.rel (%p787) target = $region60
        $region59: #{frt_clip_vit_forward.1} parent=11 // pred_region
          %s791 = ssub.s32 16, 16
          %792 = vsyncadd [#allocation28], %s791
          %s794 = sshll.u32 [#allocation29], 4
          %s795 = int_to_ptr.vmem [resolvable:$true] %s794
          %797 = dma.hbm_to_vmem [thread:$0]  %s24, 16, %s795, [#allocation28]
        $region60: #{frt_clip_vit_forward.1} parent=11 // pred_fallthru
          _
      $region12: #{frt_clip_vit_forward.1} parent=5 // pred_fallthru
        _
      %p798 = scmp.lt.s32.totalorder %s53, 4
      // Predicated region
      $region61: #{frt_clip_vit_forward.1} parent=5 // pred_check
        %p799 = pneg %p798
      $region62: #{frt_clip_vit_forward.1} parent=5 // pred_check_branch
        %801 = sbr.rel (%p799) target = $region64
      $region63: #{frt_clip_vit_forward.1} parent=5 // pred_region
        // Predicated region
        $region65: #{frt_clip_vit_forward.1} parent=63 // pred_check
          %p802 = pneg %p85
        $region66: #{frt_clip_vit_forward.1} parent=63 // pred_check_branch
          %804 = sbr.rel (%p802) target = $region68
        $region67: #{frt_clip_vit_forward.1} parent=63 // pred_region
          %p805 = scmp.lt.s32.totalorder %s60, 1
          %s806 = scalar_select %p805, %s60, 1
          %s807 = smul.addr %s806, 2
          %s808 = smul.addr %s807, 4
          %s809 = scalar_lea.vmem %s0, %s808
        $region68: #{frt_clip_vit_forward.1} parent=63 // pred_fallthru
          _
        // Predicated region
        $region69: #{frt_clip_vit_forward.1} parent=63 // pred_check
          %p810 = pneg %p195
        $region70: #{frt_clip_vit_forward.1} parent=63 // pred_check_branch
          %812 = sbr.rel (%p810) target = $region72
        $region71: #{frt_clip_vit_forward.1} parent=63 // pred_region
          %s813 = sand.u32 %s53, 1
          %s814 = scalar_lea.sflag [#allocation7], %s813
          %s815 = sand.u32 %s185, 1
          %s816 = scalar_lea.vmem [#allocation6], %s815
          %s818 = ssub.s32 16, 16
          %819 = vsyncadd %s814, %s818
          %s820 = smul.addr %s61, 16
          %s821 = scalar_lea.hbm %s5, %s820
          %s823 = sshll.u32 %s816, 4
          %s824 = int_to_ptr.vmem [resolvable:$true] %s823
          %826 = dma.hbm_to_vmem [thread:$0]  %s821, 16, %s824, %s814
        $region72: #{frt_clip_vit_forward.1} parent=63 // pred_fallthru
          _
        // Predicated region
        $region73: #{frt_clip_vit_forward.1} parent=63 // pred_check
          %p827 = pneg %p221
        $region74: #{frt_clip_vit_forward.1} parent=63 // pred_check_branch
          %829 = sbr.rel (%p827) target = $region76
        $region75: #{frt_clip_vit_forward.1} parent=63 // pred_region
          %s830 = sand.u32 %s53, 1
          %s831 = scalar_lea.sflag [#allocation7], %s830
          %s832 = sand.u32 %s211, 1
          %s833 = scalar_lea.vmem [#allocation8], %s832
          %s835 = ssub.s32 16, 16
          %836 = vsyncadd %s831, %s835
          %s837 = smul.addr %s61, 16
          %s838 = scalar_lea.hbm %s6, %s837
          %s840 = sshll.u32 %s833, 4
          %s841 = int_to_ptr.vmem [resolvable:$true] %s840
          %843 = dma.hbm_to_vmem [thread:$0]  %s838, 16, %s841, %s831
        $region76: #{frt_clip_vit_forward.1} parent=63 // pred_fallthru
          _
        // Predicated region
        $region77: #{frt_clip_vit_forward.1} parent=63 // pred_check
          %p844 = pneg %p247
        $region78: #{frt_clip_vit_forward.1} parent=63 // pred_check_branch
          %846 = sbr.rel (%p844) target = $region80
        $region79: #{frt_clip_vit_forward.1} parent=63 // pred_region
          %s847 = sand.u32 %s53, 1
          %s848 = scalar_lea.sflag [#allocation10], %s847
          %s849 = sand.u32 %s237, 1
          %s850 = smul.addr %s849, 192
          %s851 = scalar_lea.vmem [#allocation9], %s850
          %s853 = ssub.s32 3072, 3072
          %854 = vsyncadd %s848, %s853
          %s855 = smul.addr %s61, 48
          %s856 = smul.addr %s855, 64
          %s857 = scalar_lea.hbm %s7, %s856
          %s858 = sshll.u32 %s851, 4
          %s859 = int_to_ptr.vmem [resolvable:$true] %s858
          %864 = dma.hbm_to_vmem [thread:$0]  %s857, 3072, %s859, %s848, 192, 192, 12
        $region80: #{frt_clip_vit_forward.1} parent=63 // pred_fallthru
          _
        // Predicated region
        $region81: #{frt_clip_vit_forward.1} parent=63 // pred_check
          %p865 = pneg %p273
        $region82: #{frt_clip_vit_forward.1} parent=63 // pred_check_branch
          %867 = sbr.rel (%p865) target = $region84
        $region83: #{frt_clip_vit_forward.1} parent=63 // pred_region
          %s868 = sand.u32 %s53, 1
          %s869 = scalar_lea.sflag [#allocation10], %s868
          %s870 = sand.u32 %s263, 1
          %s871 = smul.addr %s870, 3
          %s872 = scalar_lea.vmem [#allocation11], %s871
          %s874 = ssub.s32 48, 48
          %875 = vsyncadd %s869, %s874
          %s876 = smul.addr %s61, 3
          %s877 = smul.addr %s876, 16
          %s878 = scalar_lea.hbm %s8, %s877
          %s880 = sshll.u32 %s872, 4
          %s881 = int_to_ptr.vmem [resolvable:$true] %s880
          %883 = dma.hbm_to_vmem [thread:$0]  %s878, 48, %s881, %s869
        $region84: #{frt_clip_vit_forward.1} parent=63 // pred_fallthru
          _
        // Predicated region
        $region85: #{frt_clip_vit_forward.1} parent=63 // pred_check
          %p884 = pneg %p299
        $region86: #{frt_clip_vit_forward.1} parent=63 // pred_check_branch
          %886 = sbr.rel (%p884) target = $region88
        $region87: #{frt_clip_vit_forward.1} parent=63 // pred_region
          %s887 = sand.u32 %s53, 1
          %s888 = scalar_lea.sflag [#allocation13], %s887
          %s889 = sand.u32 %s289, 1
          %s890 = smul.addr %s889, 64
          %s891 = scalar_lea.vmem [#allocation12], %s890
          %s893 = ssub.s32 1024, 1024
          %894 = vsyncadd %s888, %s893
          %s895 = smul.addr %s61, 16
          %s896 = smul.addr %s895, 64
          %s897 = scalar_lea.hbm %s9, %s896
          %s898 = sshll.u32 %s891, 4
          %s899 = int_to_ptr.vmem [resolvable:$true] %s898
          %904 = dma.hbm_to_vmem [thread:$0]  %s897, 1024, %s899, %s888, 64, 64, 4
        $region88: #{frt_clip_vit_forward.1} parent=63 // pred_fallthru
          _
        // Predicated region
        $region89: #{frt_clip_vit_forward.1} parent=63 // pred_check
          %p905 = pneg %p325
        $region90: #{frt_clip_vit_forward.1} parent=63 // pred_check_branch
          %907 = sbr.rel (%p905) target = $region92
        $region91: #{frt_clip_vit_forward.1} parent=63 // pred_region
          %s908 = sand.u32 %s53, 1
          %s909 = scalar_lea.sflag [#allocation13], %s908
          %s910 = sand.u32 %s315, 1
          %s911 = scalar_lea.vmem [#allocation14], %s910
          %s913 = ssub.s32 16, 16
          %914 = vsyncadd %s909, %s913
          %s915 = smul.addr %s61, 16
          %s916 = scalar_lea.hbm %s10, %s915
          %s918 = sshll.u32 %s911, 4
          %s919 = int_to_ptr.vmem [resolvable:$true] %s918
          %921 = dma.hbm_to_vmem [thread:$0]  %s916, 16, %s919, %s909
        $region92: #{frt_clip_vit_forward.1} parent=63 // pred_fallthru
          _
        // Predicated region
        $region93: #{frt_clip_vit_forward.1} parent=63 // pred_check
          %p922 = pneg %p351
        $region94: #{frt_clip_vit_forward.1} parent=63 // pred_check_branch
          %924 = sbr.rel (%p922) target = $region96
        $region95: #{frt_clip_vit_forward.1} parent=63 // pred_region
          %s925 = sand.u32 %s53, 1
          %s926 = scalar_lea.sflag [#allocation16], %s925
          %s927 = sand.u32 %s341, 1
          %s928 = scalar_lea.vmem [#allocation15], %s927
          %s930 = ssub.s32 16, 16
          %931 = vsyncadd %s926, %s930
          %s932 = smul.addr %s61, 16
          %s933 = scalar_lea.hbm %s11, %s932
          %s935 = sshll.u32 %s928, 4
          %s936 = int_to_ptr.vmem [resolvable:$true] %s935
          %938 = dma.hbm_to_vmem [thread:$0]  %s933, 16, %s936, %s926
        $region96: #{frt_clip_vit_forward.1} parent=63 // pred_fallthru
          _
        // Predicated region
        $region97: #{frt_clip_vit_forward.1} parent=63 // pred_check
          %p939 = pneg %p377
        $region98: #{frt_clip_vit_forward.1} parent=63 // pred_check_branch
          %941 = sbr.rel (%p939) target = $region100
        $region99: #{frt_clip_vit_forward.1} parent=63 // pred_region
          %s942 = sand.u32 %s53, 1
          %s943 = scalar_lea.sflag [#allocation16], %s942
          %s944 = sand.u32 %s367, 1
          %s945 = scalar_lea.vmem [#allocation17], %s944
          %s947 = ssub.s32 16, 16
          %948 = vsyncadd %s943, %s947
          %s949 = smul.addr %s61, 16
          %s950 = scalar_lea.hbm %s12, %s949
          %s952 = sshll.u32 %s945, 4
          %s953 = int_to_ptr.vmem [resolvable:$true] %s952
          %955 = dma.hbm_to_vmem [thread:$0]  %s950, 16, %s953, %s943
        $region100: #{frt_clip_vit_forward.1} parent=63 // pred_fallthru
          _
        // Predicated region
        $region101: #{frt_clip_vit_forward.1} parent=63 // pred_check
          %p956 = pneg %p403
        $region102: #{frt_clip_vit_forward.1} parent=63 // pred_check_branch
          %958 = sbr.rel (%p956) target = $region104
        $region103: #{frt_clip_vit_forward.1} parent=63 // pred_region
          %p959 = scmp.lt.s32.totalorder %s61, 1
          %s960 = scalar_select %p959, %s61, 1
          %s961 = smul.addr %s960, 64
          %s962 = smul.addr %s961, 4
          %s963 = scalar_lea.vmem %s13, %s962
        $region104: #{frt_clip_vit_forward.1} parent=63 // pred_fallthru
          _
        // Predicated region
        $region105: #{frt_clip_vit_forward.1} parent=63 // pred_check
          %p964 = pneg %p429
        $region106: #{frt_clip_vit_forward.1} parent=63 // pred_check_branch
          %966 = sbr.rel (%p964) target = $region108
        $region107: #{frt_clip_vit_forward.1} parent=63 // pred_region
          %p967 = scmp.lt.s32.totalorder %s61, 1
          %s968 = scalar_select %p967, %s61, 1
          %s969 = smul.addr %s968, 4
          %s970 = scalar_lea.vmem %s14, %s969
        $region108: #{frt_clip_vit_forward.1} parent=63 // pred_fallthru
          _
        // Predicated region
        $region109: #{frt_clip_vit_forward.1} parent=63 // pred_check
          %p971 = pneg %p455
        $region110: #{frt_clip_vit_forward.1} parent=63 // pred_check_branch
          %973 = sbr.rel (%p971) target = $region112
        $region111: #{frt_clip_vit_forward.1} parent=63 // pred_region
          %p974 = scmp.lt.s32.totalorder %s61, 1
          %s975 = scalar_select %p974, %s61, 1
          %s976 = smul.addr %s975, 64
          %s977 = smul.addr %s976, 4
          %s978 = scalar_lea.vmem %s15, %s977
        $region112: #{frt_clip_vit_forward.1} parent=63 // pred_fallthru
          _
        // Predicated region
        $region113: #{frt_clip_vit_forward.1} parent=63 // pred_check
          %p979 = pneg %p481
        $region114: #{frt_clip_vit_forward.1} parent=63 // pred_check_branch
          %981 = sbr.rel (%p979) target = $region116
        $region115: #{frt_clip_vit_forward.1} parent=63 // pred_region
          %s982 = sand.u32 %s53, 1
          %s983 = scalar_lea.sflag [#allocation19], %s982
          %s984 = sand.u32 %s471, 1
          %s985 = scalar_lea.vmem [#allocation18], %s984
          %s987 = ssub.s32 16, 16
          %988 = vsyncadd %s983, %s987
          %s989 = smul.addr %s61, 16
          %s990 = scalar_lea.hbm %s16, %s989
          %s992 = sshll.u32 %s985, 4
          %s993 = int_to_ptr.vmem [resolvable:$true] %s992
          %995 = dma.hbm_to_vmem [thread:$0]  %s990, 16, %s993, %s983
        $region116: #{frt_clip_vit_forward.1} parent=63 // pred_fallthru
          _
      $region64: #{frt_clip_vit_forward.1} parent=5 // pred_fallthru
        _
      %p996 = scmp.le.s32.totalorder 1, %s53
      %p997 = scmp.lt.s32.totalorder %s53, 5
      %p998 = pnand %p996, %p997
      %p999 = pneg %p998
      // Predicated region
      $region117: #{frt_clip_vit_forward.1} parent=5 // pred_check
        _
      $region118: #{frt_clip_vit_forward.1} parent=5 // pred_check_branch
        %1001 = sbr.rel (%p998) target = $region120
      $region119: #{frt_clip_vit_forward.1} parent=5 // pred_region
        %s1002 = ssub.s32 %s53, 1
        // Predicated region
        $region121: #{frt_clip_vit_forward.1} parent=119 // pred_check
          %p1003 = pneg %p112
        $region122: #{frt_clip_vit_forward.1} parent=119 // pred_check_branch
          %1005 = sbr.rel (%p1003) target = $region124
        $region123: #{frt_clip_vit_forward.1} parent=119 // pred_region
          %1006 = dma.done [#allocation4], 1536
        $region124: #{frt_clip_vit_forward.1} parent=119 // pred_fallthru
          _
        %s1007 = sand.u32 %s58, 1
        %s1008 = scalar_lea.sflag [#allocation7], %s1007
        %s1009 = sand.u32 %s188, 1
        %s1010 = scalar_lea.vmem [#allocation6], %s1009
        // Predicated region
        $region125: #{frt_clip_vit_forward.1} parent=119 // pred_check
          %p1011 = pneg %p201
        $region126: #{frt_clip_vit_forward.1} parent=119 // pred_check_branch
          %1013 = sbr.rel (%p1011) target = $region128
        $region127: #{frt_clip_vit_forward.1} parent=119 // pred_region
          %1014 = dma.done %s1008, 16
        $region128: #{frt_clip_vit_forward.1} parent=119 // pred_fallthru
          _
        %s1015 = sand.u32 %s58, 1
        %s1016 = scalar_lea.sflag [#allocation7], %s1015
        %s1017 = sand.u32 %s214, 1
        %s1018 = scalar_lea.vmem [#allocation8], %s1017
        // Predicated region
        $region129: #{frt_clip_vit_forward.1} parent=119 // pred_check
          %p1019 = pneg %p227
        $region130: #{frt_clip_vit_forward.1} parent=119 // pred_check_branch
          %1021 = sbr.rel (%p1019) target = $region132
        $region131: #{frt_clip_vit_forward.1} parent=119 // pred_region
          %1022 = dma.done %s1016, 16
        $region132: #{frt_clip_vit_forward.1} parent=119 // pred_fallthru
          _
        %s1023 = sand.u32 %s58, 1
        %s1024 = scalar_lea.sflag [#allocation10], %s1023
        %s1025 = sand.u32 %s240, 1
        %s1026 = smul.addr %s1025, 192
        %s1027 = scalar_lea.vmem [#allocation9], %s1026
        // Predicated region
        $region133: #{frt_clip_vit_forward.1} parent=119 // pred_check
          %p1028 = pneg %p253
        $region134: #{frt_clip_vit_forward.1} parent=119 // pred_check_branch
          %1030 = sbr.rel (%p1028) target = $region136
        $region135: #{frt_clip_vit_forward.1} parent=119 // pred_region
          %1031 = dma.done %s1024, 3072
        $region136: #{frt_clip_vit_forward.1} parent=119 // pred_fallthru
          _
        %s1032 = sand.u32 %s58, 1
        %s1033 = scalar_lea.sflag [#allocation10], %s1032
        %s1034 = sand.u32 %s266, 1
        %s1035 = smul.addr %s1034, 3
        %s1036 = scalar_lea.vmem [#allocation11], %s1035
        // Predicated region
        $region137: #{frt_clip_vit_forward.1} parent=119 // pred_check
          %p1037 = pneg %p279
        $region138: #{frt_clip_vit_forward.1} parent=119 // pred_check_branch
          %1039 = sbr.rel (%p1037) target = $region140
        $region139: #{frt_clip_vit_forward.1} parent=119 // pred_region
          %1040 = dma.done %s1033, 48
        $region140: #{frt_clip_vit_forward.1} parent=119 // pred_fallthru
          _
        %s1041 = sand.u32 %s58, 1
        %s1042 = scalar_lea.sflag [#allocation13], %s1041
        %s1043 = sand.u32 %s292, 1
        %s1044 = smul.addr %s1043, 64
        %s1045 = scalar_lea.vmem [#allocation12], %s1044
        // Predicated region
        $region141: #{frt_clip_vit_forward.1} parent=119 // pred_check
          %p1046 = pneg %p305
        $region142: #{frt_clip_vit_forward.1} parent=119 // pred_check_branch
          %1048 = sbr.rel (%p1046) target = $region144
        $region143: #{frt_clip_vit_forward.1} parent=119 // pred_region
          %1049 = dma.done %s1042, 1024
        $region144: #{frt_clip_vit_forward.1} parent=119 // pred_fallthru
          _
        %s1050 = sand.u32 %s58, 1
        %s1051 = scalar_lea.sflag [#allocation13], %s1050
        %s1052 = sand.u32 %s318, 1
        %s1053 = scalar_lea.vmem [#allocation14], %s1052
        // Predicated region
        $region145: #{frt_clip_vit_forward.1} parent=119 // pred_check
          %p1054 = pneg %p331
        $region146: #{frt_clip_vit_forward.1} parent=119 // pred_check_branch
          %1056 = sbr.rel (%p1054) target = $region148
        $region147: #{frt_clip_vit_forward.1} parent=119 // pred_region
          %1057 = dma.done %s1051, 16
        $region148: #{frt_clip_vit_forward.1} parent=119 // pred_fallthru
          _
        %s1058 = sand.u32 %s58, 1
        %s1059 = scalar_lea.sflag [#allocation16], %s1058
        %s1060 = sand.u32 %s344, 1
        %s1061 = scalar_lea.vmem [#allocation15], %s1060
        // Predicated region
        $region149: #{frt_clip_vit_forward.1} parent=119 // pred_check
          %p1062 = pneg %p357
        $region150: #{frt_clip_vit_forward.1} parent=119 // pred_check_branch
          %1064 = sbr.rel (%p1062) target = $region152
        $region151: #{frt_clip_vit_forward.1} parent=119 // pred_region
          %1065 = dma.done %s1059, 16
        $region152: #{frt_clip_vit_forward.1} parent=119 // pred_fallthru
          _
        %s1066 = sand.u32 %s58, 1
        %s1067 = scalar_lea.sflag [#allocation16], %s1066
        %s1068 = sand.u32 %s370, 1
        %s1069 = scalar_lea.vmem [#allocation17], %s1068
        // Predicated region
        $region153: #{frt_clip_vit_forward.1} parent=119 // pred_check
          %p1070 = pneg %p383
        $region154: #{frt_clip_vit_forward.1} parent=119 // pred_check_branch
          %1072 = sbr.rel (%p1070) target = $region156
        $region155: #{frt_clip_vit_forward.1} parent=119 // pred_region
          %1073 = dma.done %s1067, 16
        $region156: #{frt_clip_vit_forward.1} parent=119 // pred_fallthru
          _
        %s1074 = sand.u32 %s58, 1
        %s1075 = scalar_lea.sflag [#allocation19], %s1074
        %s1076 = sand.u32 %s474, 1
        %s1077 = scalar_lea.vmem [#allocation18], %s1076
        // Predicated region
        $region157: #{frt_clip_vit_forward.1} parent=119 // pred_check
          %p1078 = pneg %p487
        $region158: #{frt_clip_vit_forward.1} parent=119 // pred_check_branch
          %1080 = sbr.rel (%p1078) target = $region160
        $region159: #{frt_clip_vit_forward.1} parent=119 // pred_region
          %1081 = dma.done %s1075, 16
        $region160: #{frt_clip_vit_forward.1} parent=119 // pred_fallthru
          _
        // Predicated region
        $region161: #{frt_clip_vit_forward.1} parent=119 // pred_check
          %p1082 = pneg %p508
        $region162: #{frt_clip_vit_forward.1} parent=119 // pred_check_branch
          %1084 = sbr.rel (%p1082) target = $region164
        $region163: #{frt_clip_vit_forward.1} parent=119 // pred_region
          %1085 = dma.done [#allocation19], 16
        $region164: #{frt_clip_vit_forward.1} parent=119 // pred_fallthru
          _
        // Predicated region
        $region165: #{frt_clip_vit_forward.1} parent=119 // pred_check
          %p1086 = pneg %p529
        $region166: #{frt_clip_vit_forward.1} parent=119 // pred_check_branch
          %1088 = sbr.rel (%p1086) target = $region168
        $region167: #{frt_clip_vit_forward.1} parent=119 // pred_region
          %1089 = dma.done [#allocation22], 16
        $region168: #{frt_clip_vit_forward.1} parent=119 // pred_fallthru
          _
        // Predicated region
        $region169: #{frt_clip_vit_forward.1} parent=119 // pred_check
          %p1090 = pneg %p550
        $region170: #{frt_clip_vit_forward.1} parent=119 // pred_check_branch
          %1092 = sbr.rel (%p1090) target = $region172
        $region171: #{frt_clip_vit_forward.1} parent=119 // pred_region
          %1093 = dma.done [#allocation22], 16
        $region172: #{frt_clip_vit_forward.1} parent=119 // pred_fallthru
          _
        // Predicated region
        $region173: #{frt_clip_vit_forward.1} parent=119 // pred_check
          %p1094 = pneg %p571
        $region174: #{frt_clip_vit_forward.1} parent=119 // pred_check_branch
          %1096 = sbr.rel (%p1094) target = $region176
        $region175: #{frt_clip_vit_forward.1} parent=119 // pred_region
          %1097 = dma.done [#allocation25], 16
        $region176: #{frt_clip_vit_forward.1} parent=119 // pred_fallthru
          _
        // Predicated region
        $region177: #{frt_clip_vit_forward.1} parent=119 // pred_check
          %p1098 = pneg %p592
        $region178: #{frt_clip_vit_forward.1} parent=119 // pred_check_branch
          %1100 = sbr.rel (%p1098) target = $region180
        $region179: #{frt_clip_vit_forward.1} parent=119 // pred_region
          %1101 = dma.done [#allocation25], 16
        $region180: #{frt_clip_vit_forward.1} parent=119 // pred_fallthru
          _
        // Predicated region
        $region181: #{frt_clip_vit_forward.1} parent=119 // pred_check
          %p1102 = pneg %p613
        $region182: #{frt_clip_vit_forward.1} parent=119 // pred_check_branch
          %1104 = sbr.rel (%p1102) target = $region184
        $region183: #{frt_clip_vit_forward.1} parent=119 // pred_region
          %1105 = dma.done [#allocation28], 16
        $region184: #{frt_clip_vit_forward.1} parent=119 // pred_fallthru
          _
        // Predicated region
        $region185: #{frt_clip_vit_forward.1} parent=119 // pred_check
          %p1106 = pneg %p655
        $region186: #{frt_clip_vit_forward.1} parent=119 // pred_check_branch
          %1108 = sbr.rel (%p1106) target = $region188
        $region187: #{frt_clip_vit_forward.1} parent=119 // pred_region
          %1109 = dma.done [#allocation28], 16
        $region188: #{frt_clip_vit_forward.1} parent=119 // pred_fallthru
          _
        %p1110 = scmp.lt.s32.totalorder %s62, 1
        %s1111 = scalar_select %p1110, %s62, 1
        %s1112 = smul.addr %s1111, 2
        %s1113 = smul.addr %s1112, 4
        %s1114 = scalar_lea.vmem %s0, %s1113
        %p1115 = pneg %p91
        %p1116 = pneg %p88
        %p1117 = pneg %p112
        %p1118 = pneg %p109
        %p1119 = pneg %p133
        %p1120 = pneg %p130
        %p1121 = pneg %p154
        %p1122 = pneg %p151
        %p1123 = pneg %p175
        %p1124 = pneg %p172
        %s1125 = sand.u32 %s58, 1
        %s1126 = scalar_lea.sflag [#allocation7], %s1125
        %s1127 = sand.u32 %s188, 1
        %s1128 = scalar_lea.vmem [#allocation6], %s1127
        %p1129 = pneg %p201
        %p1130 = pneg %p198
        %s1131 = sand.u32 %s58, 1
        %s1132 = scalar_lea.sflag [#allocation7], %s1131
        %s1133 = sand.u32 %s214, 1
        %s1134 = scalar_lea.vmem [#allocation8], %s1133
        %p1135 = pneg %p227
        %p1136 = pneg %p224
        %s1137 = sand.u32 %s58, 1
        %s1138 = scalar_lea.sflag [#allocation10], %s1137
        %s1139 = sand.u32 %s240, 1
        %s1140 = smul.addr %s1139, 192
        %s1141 = scalar_lea.vmem [#allocation9], %s1140
        %p1142 = pneg %p253
        %p1143 = pneg %p250
        %s1144 = sand.u32 %s58, 1
        %s1145 = scalar_lea.sflag [#allocation10], %s1144
        %s1146 = sand.u32 %s266, 1
        %s1147 = smul.addr %s1146, 3
        %s1148 = scalar_lea.vmem [#allocation11], %s1147
        %p1149 = pneg %p279
        %p1150 = pneg %p276
        %s1151 = sand.u32 %s58, 1
        %s1152 = scalar_lea.sflag [#allocation13], %s1151
        %s1153 = sand.u32 %s292, 1
        %s1154 = smul.addr %s1153, 64
        %s1155 = scalar_lea.vmem [#allocation12], %s1154
        %p1156 = pneg %p305
        %p1157 = pneg %p302
        %s1158 = sand.u32 %s58, 1
        %s1159 = scalar_lea.sflag [#allocation13], %s1158
        %s1160 = sand.u32 %s318, 1
        %s1161 = scalar_lea.vmem [#allocation14], %s1160
        %p1162 = pneg %p331
        %p1163 = pneg %p328
        %s1164 = sand.u32 %s58, 1
        %s1165 = scalar_lea.sflag [#allocation16], %s1164
        %s1166 = sand.u32 %s344, 1
        %s1167 = scalar_lea.vmem [#allocation15], %s1166
        %p1168 = pneg %p357
        %p1169 = pneg %p354
        %s1170 = sand.u32 %s58, 1
        %s1171 = scalar_lea.sflag [#allocation16], %s1170
        %s1172 = sand.u32 %s370, 1
        %s1173 = scalar_lea.vmem [#allocation17], %s1172
        %p1174 = pneg %p383
        %p1175 = pneg %p380
        %p1176 = scmp.lt.s32.totalorder %s63, 1
        %s1177 = scalar_select %p1176, %s63, 1
        %s1178 = smul.addr %s1177, 64
        %s1179 = smul.addr %s1178, 4
        %s1180 = scalar_lea.vmem %s13, %s1179
        %p1181 = pneg %p409
        %p1182 = pneg %p406
        %p1183 = scmp.lt.s32.totalorder %s63, 1
        %s1184 = scalar_select %p1183, %s63, 1
        %s1185 = smul.addr %s1184, 4
        %s1186 = scalar_lea.vmem %s14, %s1185
        %p1187 = pneg %p435
        %p1188 = pneg %p432
        %p1189 = scmp.lt.s32.totalorder %s63, 1
        %s1190 = scalar_select %p1189, %s63, 1
        %s1191 = smul.addr %s1190, 64
        %s1192 = smul.addr %s1191, 4
        %s1193 = scalar_lea.vmem %s15, %s1192
        %p1194 = pneg %p461
        %p1195 = pneg %p458
        %s1196 = sand.u32 %s58, 1
        %s1197 = scalar_lea.sflag [#allocation19], %s1196
        %s1198 = sand.u32 %s474, 1
        %s1199 = scalar_lea.vmem [#allocation18], %s1198
        %p1200 = pneg %p487
        %p1201 = pneg %p484
        %p1202 = pneg %p508
        %p1203 = pneg %p505
        %p1204 = pneg %p529
        %p1205 = pneg %p526
        %p1206 = pneg %p550
        %p1207 = pneg %p547
        %p1208 = pneg %p571
        %p1209 = pneg %p568
        %p1210 = pneg %p592
        %p1211 = pneg %p589
        %p1212 = pneg %p613
        %p1213 = pneg %p610
        %p1214 = pneg %p634
        %p1215 = pneg %p631
        %p1216 = pneg %p655
        %p1217 = pneg %p652
        %p1218 = pneg %p681
        %p1219 = pneg %p678
        %s1220 = sand.u32 %s668, 1
        %s1221 = scalar_lea.sflag [#allocation5], %s1220
        %s1222 = sand.u32 %s668, 1
        %s1223 = scalar_lea.vmem [#allocation30], %s1222
        %p1224 = scmp.lt.s32.totalorder %s62, 1
        %s1225 = scalar_select %p1224, %s62, 1
        %s1226 = smul.addr %s1225, 2
        %s1227 = smul.addr %s1226, 4
        %s1228 = scalar_lea.vmem %s0, %s1227
        %p1229 = scmp.lt.s32.totalorder %s63, 1
        %s1230 = scalar_select %p1229, %s63, 1
        %s1231 = smul.addr %s1230, 64
        %s1232 = smul.addr %s1231, 4
        %s1233 = scalar_lea.vmem %s13, %s1232
        %p1234 = scmp.lt.s32.totalorder %s63, 1
        %s1235 = scalar_select %p1234, %s63, 1
        %s1236 = smul.addr %s1235, 4
        %s1237 = scalar_lea.vmem %s14, %s1236
        %p1238 = scmp.lt.s32.totalorder %s63, 1
        %s1239 = scalar_select %p1238, %s63, 1
        %s1240 = smul.addr %s1239, 64
        %s1241 = smul.addr %s1240, 4
        %s1242 = scalar_lea.vmem %s15, %s1241
        %p1244 = scmp.eq.s32.totalorder %s63, 0
        // Predicated region
        $region189: #{frt_clip_vit_forward.1} parent=119 // pred_check
          %p1245 = pneg %p1244
        $region190: #{frt_clip_vit_forward.1} parent=119 // pred_check_branch
          %1247 = sbr.rel (%p1245) target = $region192
        $region191: #{frt_clip_vit_forward.1} parent=119 // pred_region
          %v1248 = vld [vmem:[%s1228] sm:$0xff]
          %v1249 = vld [vmem:[#allocation3] sm:$0xf]
          %v1250 = vld [vmem:[#allocation3 + $0x4] sm:$0xf]
          %v1251 = vld [vmem:[#allocation3 + $0x8] sm:$0xf]
          %v1252 = vld [vmem:[#allocation3 + $0xc] sm:$0xf]
          %v1253 = vld [vmem:[#allocation3 + $0x10] sm:$0xf]
          %v1254 = vld [vmem:[#allocation3 + $0x14] sm:$0xf]
          %v1255 = vld [vmem:[#allocation3 + $0x18] sm:$0xf]
          %v1256 = vld [vmem:[#allocation3 + $0x1c] sm:$0xf]
          %v1257 = vld [vmem:[#allocation3 + $0x20] sm:$0xf]
          %v1258 = vld [vmem:[#allocation3 + $0x24] sm:$0xf]
          %v1259 = vld [vmem:[#allocation3 + $0x28] sm:$0xf]
          %v1260 = vld [vmem:[#allocation3 + $0x2c] sm:$0xf]
          %v1261 = vld [vmem:[#allocation3 + $0x30] sm:$0xf]
          %v1262 = vld [vmem:[#allocation3 + $0x34] sm:$0xf]
          %v1263 = vld [vmem:[#allocation3 + $0x38] sm:$0xf]
          %v1264 = vld [vmem:[#allocation3 + $0x3c] sm:$0xf]
          %v1265 = vld [vmem:[#allocation3 + $0x40] sm:$0xf]
          %v1266 = vld [vmem:[#allocation3 + $0x44] sm:$0xf]
          %v1267 = vld [vmem:[#allocation3 + $0x48] sm:$0xf]
          %v1268 = vld [vmem:[#allocation3 + $0x4c] sm:$0xf]
          %v1269 = vld [vmem:[#allocation3 + $0x50] sm:$0xf]
          %v1270 = vld [vmem:[#allocation3 + $0x54] sm:$0xf]
          %v1271 = vld [vmem:[#allocation3 + $0x58] sm:$0xf]
          %v1272 = vld [vmem:[#allocation3 + $0x5c] sm:$0xf]
          %v1274 = vcombine.high %v1248, %v1248
          %v1276 = vpack.c.bf16 %v1248, %v1248
          %v1277 = vpack.c.bf16 %v1274, %v1274
          %v1278 = vld [vmem:[%s2] sm:$0x1]
          %v1280 = vlaneseq
          %v1281 = vshrl.u32 %v1280, 7
          %v1282 = vsub.s32 0, %v1281
          %v1283 = vrot.slane %v1278, %v1282
          %v1309 = vunpack.c.l.b16 %v1249
          %v1310 = vunpack.c.l.b16 %v1250
          %v1311 = vunpack.c.l.b16 %v1251
          %v1312 = vunpack.c.l.b16 %v1252
          %v1313 = vunpack.c.l.b16 %v1253
          %v1314 = vunpack.c.l.b16 %v1254
          %v1315 = vunpack.c.l.b16 %v1255
          %v1316 = vunpack.c.l.b16 %v1256
          %v1317 = vunpack.c.l.b16 %v1257
          %v1318 = vunpack.c.l.b16 %v1258
          %v1319 = vunpack.c.l.b16 %v1259
          %v1320 = vunpack.c.l.b16 %v1260
          %v1321 = vunpack.c.l.b16 %v1261
          %v1322 = vunpack.c.l.b16 %v1262
          %v1323 = vunpack.c.l.b16 %v1263
          %v1324 = vunpack.c.l.b16 %v1264
          %v1325 = vunpack.c.l.b16 %v1265
          %v1326 = vunpack.c.l.b16 %v1266
          %v1327 = vunpack.c.l.b16 %v1267
          %v1328 = vunpack.c.l.b16 %v1268
          %v1329 = vunpack.c.l.b16 %v1269
          %v1330 = vunpack.c.l.b16 %v1270
          %v1331 = vunpack.c.l.b16 %v1271
          %v1332 = vunpack.c.l.b16 %v1272
          %v1333 = vpack.c.b16 %v1310, %v1309
          %v1334 = vpack.c.b16 %v1312, %v1311
          %v1335 = vpack.c.b16 %v1314, %v1313
          %v1336 = vpack.c.b16 %v1316, %v1315
          %v1337 = vpack.c.b16 %v1318, %v1317
          %v1338 = vpack.c.b16 %v1320, %v1319
          %v1339 = vpack.c.b16 %v1322, %v1321
          %v1340 = vpack.c.b16 %v1324, %v1323
          %v1341 = vpack.c.b16 %v1326, %v1325
          %v1342 = vpack.c.b16 %v1328, %v1327
          %v1343 = vpack.c.b16 %v1330, %v1329
          %v1344 = vpack.c.b16 %v1332, %v1331
          %vm1357 = vcmask 523264
          %v1359 = vsel %vm1357, %v1277, 0
          %1361 = vmatprep.subr.bf16.mxu0 0
          %1362 = vmatpush1.bf16.msra.mxu0 %v1333
          %1363 = vmatprep.subr.bf16.mxu0 0
          %1364 = vmatpush1.bf16.msra.mxu0 %v1334
          %1365 = vmatprep.subr.bf16.mxu0 0
          %1366 = vmatpush1.bf16.msra.mxu0 %v1335
          %1367 = vmatprep.subr.bf16.mxu0 0
          %1368 = vmatpush1.bf16.msra.mxu0 %v1336
          %1369 = vmatprep.subr.bf16.mxu0 0
          %1370 = vmatpush1.bf16.msra.mxu0 %v1337
          %1371 = vmatprep.subr.bf16.mxu0 0
          %1372 = vmatpush1.bf16.msra.mxu0 %v1338
          %1373 = vmatprep.subr.bf16.mxu0 0
          %1374 = vmatpush1.bf16.msra.mxu0 %v1339
          %1375 = vmatprep.subr.bf16.mxu0 0
          %1376 = vmatpush1.bf16.msra.mxu0 %v1340
          %1377 = vmatprep.subr.bf16.mxu0 0
          %1378 = vmatpush1.bf16.msra.mxu0 %v1341
          %1379 = vmatprep.subr.bf16.mxu0 0
          %1380 = vmatpush1.bf16.msra.mxu0 %v1342
          %1381 = vmatprep.subr.bf16.mxu0 0
          %1382 = vmatpush1.bf16.msra.mxu0 %v1343
          %1383 = vmatprep.subr.bf16.mxu0 0
          %1384 = vmatpush1.bf16.msra.mxu0 %v1344
          %1385 = vmatprep.subr.bf16.mxu0 0
          %1386 = vmatpush1.bf16.msra.mxu0 0
          %1387 = vmatprep.subr.bf16.mxu0 0
          %1388 = vmatpush1.bf16.msra.mxu0 0
          %1389 = vmatprep.subr.bf16.mxu0 0
          %1390 = vmatpush1.bf16.msra.mxu0 0
          %1391 = vmatprep.subr.bf16.mxu0 0
          %1392 = vmatpush1.bf16.msra.mxu0 0
          %1393 = vmatprep.mubr.bf16.mxu0 %v1359
          %1394 = vmatmul.mubr.bf16.gmra.mrb[0].mxu0 %v1276
          %v1395 = vpop.f32.mrb[0].mxu0
          %v1396 = vadd.f32 %v1283, %v1395
          %v1397 = vpop.f32.mrb[0].mxu0
          %v1398 = vpop.f32.mrb[0].mxu0
          %v1399 = vpop.f32.mrb[0].mxu0
          %1400 = vdwg.mxu0
          %v1401 = vld [vmem:[%s4] sm:$0x1f]
          %v1402 = vld [vmem:[%s3] sm:$0x1]
          %v1403 = vadd.f32 %v1402, %v1401
          %1404 = vst [vmem:[#allocation2] sm:$0x1] %v1403
          %v1406 = vrot.slane %v1401, 1
          %v1408 = vadd.f32 %v1396, %v1406
          %1409 = vst [vmem:[#allocation2 + $0x1] sm:$0xf] %v1408
        $region192: #{frt_clip_vit_forward.1} parent=119 // pred_fallthru
          _
        %v1410 = vld [vmem:[#allocation2] sm:$0x1f]
        %v1411 = vld [vmem:[%s1010] sm:$0x1]
        %v1412 = vld [vmem:[%s1018] sm:$0x1]
        %vm1413 = vcmask 1044480
        %v1414 = vsel %vm1413, %v1410, 0.0
        %1415 = vadd.xlane.f32.xlu0 %v1414
        %v1416 = vpop.xlane.xlu0 %1415
        %v1417 = vrcp.pop 128.0
        %v1418 = vmul.f32 %v1416, %v1417
        %v1419 = vsub.f32 %v1410, %v1418
        %v1420 = vmul.f32 %v1419, %v1419
        %v1421 = vsel %vm1413, %v1420, 0.0
        %1422 = vadd.xlane.f32.xlu0 %v1421
        %v1423 = vpop.xlane.xlu0 %1422
        %v1424 = vmul.f32 %v1423, %v1417
        %v1425 = vadd.f32 %v1424, 1e-05
        %v1426 = vrsqrt.pop %v1425
        %v1427 = vmul.f32 %v1419, %v1426
        %v1429 = vlaneseq
        %v1430 = vshrl.u32 %v1429, 7
        %v1431 = vsub.s32 0, %v1430
        %v1432 = vrot.slane %v1411, %v1431
        %v1434 = vmul.f32 %v1427, %v1432
        %v1436 = vlaneseq
        %v1437 = vshrl.u32 %v1436, 7
        %v1438 = vsub.s32 0, %v1437
        %v1439 = vrot.slane %v1412, %v1438
        %v1441 = vadd.f32 %v1434, %v1439
        %v1442 = vld [vmem:[%s1027] sm:$0xff]
        %v1443 = vld [vmem:[%s1027 + $0x8] sm:$0xf]
        %v1444 = vld [vmem:[%s1027 + $0xc] sm:$0xff]
        %v1445 = vld [vmem:[%s1027 + $0x14] sm:$0xf]
        %v1446 = vld [vmem:[%s1027 + $0x18] sm:$0xff]
        %v1447 = vld [vmem:[%s1027 + $0x20] sm:$0xf]
        %v1448 = vld [vmem:[%s1027 + $0x24] sm:$0xff]
        %v1449 = vld [vmem:[%s1027 + $0x2c] sm:$0xf]
        %v1450 = vld [vmem:[%s1027 + $0x30] sm:$0xff]
        %v1451 = vld [vmem:[%s1027 + $0x38] sm:$0xf]
        %v1452 = vld [vmem:[%s1027 + $0x3c] sm:$0xff]
        %v1453 = vld [vmem:[%s1027 + $0x44] sm:$0xf]
        %v1454 = vld [vmem:[%s1027 + $0x48] sm:$0xff]
        %v1455 = vld [vmem:[%s1027 + $0x50] sm:$0xf]
        %v1456 = vld [vmem:[%s1027 + $0x54] sm:$0xff]
        %v1457 = vld [vmem:[%s1027 + $0x5c] sm:$0xf]
        %v1458 = vld [vmem:[%s1027 + $0x60] sm:$0xff]
        %v1459 = vld [vmem:[%s1027 + $0x68] sm:$0xf]
        %v1460 = vld [vmem:[%s1027 + $0x6c] sm:$0xff]
        %v1461 = vld [vmem:[%s1027 + $0x74] sm:$0xf]
        %v1462 = vld [vmem:[%s1027 + $0x78] sm:$0xff]
        %v1463 = vld [vmem:[%s1027 + $0x80] sm:$0xf]
        %v1464 = vld [vmem:[%s1027 + $0x84] sm:$0xff]
        %v1465 = vld [vmem:[%s1027 + $0x8c] sm:$0xf]
        %v1466 = vld [vmem:[%s1027 + $0x90] sm:$0xff]
        %v1467 = vld [vmem:[%s1027 + $0x98] sm:$0xf]
        %v1468 = vld [vmem:[%s1027 + $0x9c] sm:$0xff]
        %v1469 = vld [vmem:[%s1027 + $0xa4] sm:$0xf]
        %v1470 = vld [vmem:[%s1027 + $0xa8] sm:$0xff]
        %v1471 = vld [vmem:[%s1027 + $0xb0] sm:$0xf]
        %v1472 = vld [vmem:[%s1027 + $0xb4] sm:$0xff]
        %v1473 = vld [vmem:[%s1027 + $0xbc] sm:$0xf]
        %v1474 = vpack.c.bf16 %v1441, %v1441
        %v1475 = vld [vmem:[%s1036] sm:$0x7]
        %v1477 = vlaneseq
        %v1478 = vshrl.u32 %v1477, 7
        %v1479 = vsub.s32 0, %v1478
        %v1480 = vrot.slane %v1475, %v1479
        %v1481 = vlaneseq
        %v1482 = vshrl.u32 %v1481, 7
        %v1483 = vsub.s32 1, %v1482
        %v1484 = vrot.slane %v1475, %v1483
        %v1485 = vlaneseq
        %v1486 = vshrl.u32 %v1485, 7
        %v1487 = vsub.s32 2, %v1486
        %v1488 = vrot.slane %v1475, %v1487
        %v1524 = vunpack.c.l.b16 %v1442
        %v1525 = vunpack.c.h.b16 %v1442
        %v1526 = vunpack.c.l.b16 %v1443
        %v1527 = vunpack.c.l.b16 %v1444
        %v1528 = vunpack.c.h.b16 %v1444
        %v1529 = vunpack.c.l.b16 %v1445
        %v1530 = vunpack.c.l.b16 %v1446
        %v1531 = vunpack.c.h.b16 %v1446
        %v1532 = vunpack.c.l.b16 %v1447
        %v1533 = vunpack.c.l.b16 %v1448
        %v1534 = vunpack.c.h.b16 %v1448
        %v1535 = vunpack.c.l.b16 %v1449
        %v1536 = vunpack.c.l.b16 %v1450
        %v1537 = vunpack.c.h.b16 %v1450
        %v1538 = vunpack.c.l.b16 %v1451
        %v1539 = vunpack.c.l.b16 %v1452
        %v1540 = vunpack.c.h.b16 %v1452
        %v1541 = vunpack.c.l.b16 %v1453
        %v1542 = vunpack.c.l.b16 %v1454
        %v1543 = vunpack.c.h.b16 %v1454
        %v1544 = vunpack.c.l.b16 %v1455
        %v1545 = vunpack.c.l.b16 %v1456
        %v1546 = vunpack.c.h.b16 %v1456
        %v1547 = vunpack.c.l.b16 %v1457
        %v1548 = vunpack.c.l.b16 %v1458
        %v1549 = vunpack.c.h.b16 %v1458
        %v1550 = vunpack.c.l.b16 %v1459
        %v1551 = vunpack.c.l.b16 %v1460
        %v1552 = vunpack.c.h.b16 %v1460
        %v1553 = vunpack.c.l.b16 %v1461
        %v1554 = vunpack.c.l.b16 %v1462
        %v1555 = vunpack.c.h.b16 %v1462
        %v1556 = vunpack.c.l.b16 %v1463
        %v1557 = vunpack.c.l.b16 %v1464
        %v1558 = vunpack.c.h.b16 %v1464
        %v1559 = vunpack.c.l.b16 %v1465
        %v1560 = vunpack.c.l.b16 %v1466
        %v1561 = vunpack.c.h.b16 %v1466
        %v1562 = vunpack.c.l.b16 %v1467
        %v1563 = vunpack.c.l.b16 %v1468
        %v1564 = vunpack.c.h.b16 %v1468
        %v1565 = vunpack.c.l.b16 %v1469
        %v1566 = vunpack.c.l.b16 %v1470
        %v1567 = vunpack.c.h.b16 %v1470
        %v1568 = vunpack.c.l.b16 %v1471
        %v1569 = vunpack.c.l.b16 %v1472
        %v1570 = vunpack.c.h.b16 %v1472
        %v1571 = vunpack.c.l.b16 %v1473
        %v1572 = vpack.c.b16 %v1527, %v1524
        %v1573 = vpack.c.b16 %v1528, %v1525
        %v1574 = vpack.c.b16 %v1529, %v1526
        %v1575 = vpack.c.b16 %v1533, %v1530
        %v1576 = vpack.c.b16 %v1534, %v1531
        %v1577 = vpack.c.b16 %v1535, %v1532
        %v1578 = vpack.c.b16 %v1539, %v1536
        %v1579 = vpack.c.b16 %v1540, %v1537
        %v1580 = vpack.c.b16 %v1541, %v1538
        %v1581 = vpack.c.b16 %v1545, %v1542
        %v1582 = vpack.c.b16 %v1546, %v1543
        %v1583 = vpack.c.b16 %v1547, %v1544
        %v1584 = vpack.c.b16 %v1551, %v1548
        %v1585 = vpack.c.b16 %v1552, %v1549
        %v1586 = vpack.c.b16 %v1553, %v1550
        %v1587 = vpack.c.b16 %v1557, %v1554
        %v1588 = vpack.c.b16 %v1558, %v1555
        %v1589 = vpack.c.b16 %v1559, %v1556
        %v1590 = vpack.c.b16 %v1563, %v1560
        %v1591 = vpack.c.b16 %v1564, %v1561
        %v1592 = vpack.c.b16 %v1565, %v1562
        %v1593 = vpack.c.b16 %v1569, %v1566
        %v1594 = vpack.c.b16 %v1570, %v1567
        %v1595 = vpack.c.b16 %v1571, %v1568
        %1620 = vmatprep.subr.bf16.mxu0 %v1573
        %1621 = vmatpush1.bf16.msra.mxu0 %v1572
        %1622 = vmatprep.subr.bf16.mxu0 %v1576
        %1623 = vmatpush1.bf16.msra.mxu0 %v1575
        %1624 = vmatprep.subr.bf16.mxu0 %v1579
        %1625 = vmatpush1.bf16.msra.mxu0 %v1578
        %1626 = vmatprep.subr.bf16.mxu0 %v1582
        %1627 = vmatpush1.bf16.msra.mxu0 %v1581
        %1628 = vmatprep.subr.bf16.mxu0 %v1585
        %1629 = vmatpush1.bf16.msra.mxu0 %v1584
        %1630 = vmatprep.subr.bf16.mxu0 %v1588
        %1631 = vmatpush1.bf16.msra.mxu0 %v1587
        %1632 = vmatprep.subr.bf16.mxu0 %v1591
        %1633 = vmatpush1.bf16.msra.mxu0 %v1590
        %1634 = vmatprep.subr.bf16.mxu0 %v1594
        %1635 = vmatpush1.bf16.msra.mxu0 %v1593
        %1636 = vmatprep.subr.bf16.mxu0 0
        %1637 = vmatpush1.bf16.msra.mxu0 0
        %1638 = vmatprep.subr.bf16.mxu0 0
        %1639 = vmatpush1.bf16.msra.mxu0 0
        %1640 = vmatprep.subr.bf16.mxu0 0
        %1641 = vmatpush1.bf16.msra.mxu0 0
        %1642 = vmatprep.subr.bf16.mxu0 0
        %1643 = vmatpush1.bf16.msra.mxu0 0
        %1644 = vmatprep.subr.bf16.mxu0 0
        %1645 = vmatpush1.bf16.msra.mxu0 0
        %1646 = vmatprep.subr.bf16.mxu0 0
        %1647 = vmatpush1.bf16.msra.mxu0 0
        %1648 = vmatprep.subr.bf16.mxu0 0
        %1649 = vmatpush1.bf16.msra.mxu0 0
        %1650 = vmatprep.subr.bf16.mxu0 0
        %1651 = vmatpush1.bf16.msra.mxu0 0
        %1652 = vmatprep.mubr.bf16.mxu0 0
        %1653 = vmatmul.mubr.bf16.gmra.mrb[0].mxu0 %v1474
        %v1654 = vpop.f32.mrb[0].mxu0
        %v1655 = vadd.f32 %v1480, %v1654
        %v1656 = vpop.f32.mrb[0].mxu0
        %v1657 = vadd.f32 %v1484, %v1656
        %v1658 = vpop.f32.mrb[0].mxu0
        %v1659 = vpop.f32.mrb[0].mxu0
        %1660 = vdwg.mxu0
        %1661 = vmatprep.subr.bf16.mxu0 0
        %1662 = vmatpush1.bf16.msra.mxu0 %v1574
        %1663 = vmatprep.subr.bf16.mxu0 0
        %1664 = vmatpush1.bf16.msra.mxu0 %v1577
        %1665 = vmatprep.subr.bf16.mxu0 0
        %1666 = vmatpush1.bf16.msra.mxu0 %v1580
        %1667 = vmatprep.subr.bf16.mxu0 0
        %1668 = vmatpush1.bf16.msra.mxu0 %v1583
        %1669 = vmatprep.subr.bf16.mxu0 0
        %1670 = vmatpush1.bf16.msra.mxu0 %v1586
        %1671 = vmatprep.subr.bf16.mxu0 0
        %1672 = vmatpush1.bf16.msra.mxu0 %v1589
        %1673 = vmatprep.subr.bf16.mxu0 0
        %1674 = vmatpush1.bf16.msra.mxu0 %v1592
        %1675 = vmatprep.subr.bf16.mxu0 0
        %1676 = vmatpush1.bf16.msra.mxu0 %v1595
        %1677 = vmatprep.subr.bf16.mxu0 0
        %1678 = vmatpush1.bf16.msra.mxu0 0
        %1679 = vmatprep.subr.bf16.mxu0 0
        %1680 = vmatpush1.bf16.msra.mxu0 0
        %1681 = vmatprep.subr.bf16.mxu0 0
        %1682 = vmatpush1.bf16.msra.mxu0 0
        %1683 = vmatprep.subr.bf16.mxu0 0
        %1684 = vmatpush1.bf16.msra.mxu0 0
        %1685 = vmatprep.subr.bf16.mxu0 0
        %1686 = vmatpush1.bf16.msra.mxu0 0
        %1687 = vmatprep.subr.bf16.mxu0 0
        %1688 = vmatpush1.bf16.msra.mxu0 0
        %1689 = vmatprep.subr.bf16.mxu0 0
        %1690 = vmatpush1.bf16.msra.mxu0 0
        %1691 = vmatprep.subr.bf16.mxu0 0
        %1692 = vmatpush1.bf16.msra.mxu0 0
        %1693 = vmatprep.mubr.bf16.mxu0 0
        %1694 = vmatmul.mubr.bf16.gmra.mrb[0].mxu0 %v1474
        %v1695 = vpop.f32.mrb[0].mxu0
        %v1696 = vadd.f32 %v1488, %v1695
        %v1697 = vpop.f32.mrb[0].mxu0
        %v1698 = vpop.f32.mrb[0].mxu0
        %v1699 = vpop.f32.mrb[0].mxu0
        %1700 = vdwg.mxu0
        %v1701 = vpack.c.bf16 %v1655, %v1655
        %v1702 = vpack.c.bf16 %v1657, %v1657
        %v1703 = vpack.c.bf16 %v1696, %v1696
        %vm1704 = vcmask 523264
        %v1706 = vsel %vm1704, %v1701, 0
        %v1709 = vsel %vm1704, %v1702, 0
        %1711 = vmatprep.subr.bf16.mxu0 0
        %1712 = vmatpush1.bf16.xpose.msra.mxu0 %v1709
        %1713 = vmatprep.subr.bf16.mxu0 0
        %1714 = vmatpush1.bf16.xpose.msra.mxu0 0
        %1715 = vmatprep.subr.bf16.mxu0 0
        %1716 = vmatpush1.bf16.xpose.msra.mxu0 0
        %1717 = vmatprep.subr.bf16.mxu0 0
        %1718 = vmatpush1.bf16.xpose.msra.mxu0 0
        %1719 = vmatprep.subr.bf16.mxu0 0
        %1720 = vmatpush1.bf16.xpose.msra.mxu0 0
        %1721 = vmatprep.subr.bf16.mxu0 0
        %1722 = vmatpush1.bf16.xpose.msra.mxu0 0
        %1723 = vmatprep.subr.bf16.mxu0 0
        %1724 = vmatpush1.bf16.xpose.msra.mxu0 0
        %1725 = vmatprep.subr.bf16.mxu0 0
        %1726 = vmatpush1.bf16.xpose.msra.mxu0 0
        %1727 = vmatprep.subr.bf16.mxu0 0
        %1728 = vmatpush1.bf16.xpose.msra.mxu0 0
        %1729 = vmatprep.subr.bf16.mxu0 0
        %1730 = vmatpush1.bf16.xpose.msra.mxu0 0
        %1731 = vmatprep.subr.bf16.mxu0 0
        %1732 = vmatpush1.bf16.xpose.msra.mxu0 0
        %1733 = vmatprep.subr.bf16.mxu0 0
        %1734 = vmatpush1.bf16.xpose.msra.mxu0 0
        %1735 = vmatprep.subr.bf16.mxu0 0
        %1736 = vmatpush1.bf16.xpose.msra.mxu0 0
        %1737 = vmatprep.subr.bf16.mxu0 0
        %1738 = vmatpush1.bf16.xpose.msra.mxu0 0
        %1739 = vmatprep.subr.bf16.mxu0 0
        %1740 = vmatpush1.bf16.xpose.msra.mxu0 0
        %1741 = vmatprep.subr.bf16.mxu0 0
        %1742 = vmatpush1.bf16.xpose.msra.mxu0 0
        %1743 = vmatprep.mubr.bf16.mxu0 0
        %1744 = vmatmul.mubr.bf16.gmra.mrb[0].mxu0 %v1706
        %v1745 = vpop.f32.mrb[0].mxu0
        %v1746 = vadd.f32 0.0, %v1745
        %v1747 = vpop.f32.mrb[0].mxu0
        %v1748 = vpop.f32.mrb[0].mxu0
        %v1749 = vpop.f32.mrb[0].mxu0
        %1750 = vdwg.mxu0
        %v1751 = vmul.f32 %v1746, 0.125
        %vm1752 = vcmask 36864
        %v1753 = vsel %vm1752, %v1751, -inf
        %1754 = vmax.xlane.f32.xlu0 %v1753
        %v1755 = vpop.xlane.xlu0 %1754
        %v1756 = vsub.f32 %v1751, %v1755
        %v1757 = vmul.f32 %v1756, 1.442695
        %v1758 = vpow.pop %v1757
        %v1759 = vsel %vm1752, %v1758, 0.0
        %1760 = vadd.xlane.f32.xlu0 %v1759
        %v1761 = vpop.xlane.xlu0 %1760
        %v1762 = vrcp.pop %v1761
        %v1763 = vmul.f32 %v1758, %v1762
        %v1764 = vpack.c.bf16 %v1763, %v1763
        %vm1765 = vcmask 39936
        %v1767 = vsel %vm1765, %v1764, 0
        %vm1769 = vcmask 1041408
        %vm1770 = vcmask 1042432
        %v1771 = vsel %vm1769, 4294967295, 65535
        %v1772 = vsel %vm1770, %v1771, 0
        %v1774 = vand.u32 %v1703, %v1772
        %1776 = vmatprep.subr.bf16.mxu0 0
        %1777 = vmatpush1.bf16.msra.mxu0 %v1774
        %1778 = vmatprep.subr.bf16.mxu0 0
        %1779 = vmatpush1.bf16.msra.mxu0 0
        %1780 = vmatprep.subr.bf16.mxu0 0
        %1781 = vmatpush1.bf16.msra.mxu0 0
        %1782 = vmatprep.subr.bf16.mxu0 0
        %1783 = vmatpush1.bf16.msra.mxu0 0
        %1784 = vmatprep.subr.bf16.mxu0 0
        %1785 = vmatpush1.bf16.msra.mxu0 0
        %1786 = vmatprep.subr.bf16.mxu0 0
        %1787 = vmatpush1.bf16.msra.mxu0 0
        %1788 = vmatprep.subr.bf16.mxu0 0
        %1789 = vmatpush1.bf16.msra.mxu0 0
        %1790 = vmatprep.subr.bf16.mxu0 0
        %1791 = vmatpush1.bf16.msra.mxu0 0
        %1792 = vmatprep.subr.bf16.mxu0 0
        %1793 = vmatpush1.bf16.msra.mxu0 0
        %1794 = vmatprep.subr.bf16.mxu0 0
        %1795 = vmatpush1.bf16.msra.mxu0 0
        %1796 = vmatprep.subr.bf16.mxu0 0
        %1797 = vmatpush1.bf16.msra.mxu0 0
        %1798 = vmatprep.subr.bf16.mxu0 0
        %1799 = vmatpush1.bf16.msra.mxu0 0
        %1800 = vmatprep.subr.bf16.mxu0 0
        %1801 = vmatpush1.bf16.msra.mxu0 0
        %1802 = vmatprep.subr.bf16.mxu0 0
        %1803 = vmatpush1.bf16.msra.mxu0 0
        %1804 = vmatprep.subr.bf16.mxu0 0
        %1805 = vmatpush1.bf16.msra.mxu0 0
        %1806 = vmatprep.subr.bf16.mxu0 0
        %1807 = vmatpush1.bf16.msra.mxu0 0
        %1808 = vmatprep.mubr.bf16.mxu0 0
        %1809 = vmatmul.mubr.bf16.gmra.mrb[0].mxu0 %v1767
        %v1810 = vpop.f32.mrb[0].mxu0
        %v1811 = vadd.f32 0.0, %v1810
        %v1812 = vpop.f32.mrb[0].mxu0
        %v1813 = vpop.f32.mrb[0].mxu0
        %v1814 = vpop.f32.mrb[0].mxu0
        %1815 = vdwg.mxu0
        %v1816 = vld [vmem:[%s1045] sm:$0xf]
        %v1817 = vld [vmem:[%s1045 + $0x4] sm:$0xf]
        %v1818 = vld [vmem:[%s1045 + $0x8] sm:$0xf]
        %v1819 = vld [vmem:[%s1045 + $0xc] sm:$0xf]
        %v1820 = vld [vmem:[%s1045 + $0x10] sm:$0xf]
        %v1821 = vld [vmem:[%s1045 + $0x14] sm:$0xf]
        %v1822 = vld [vmem:[%s1045 + $0x18] sm:$0xf]
        %v1823 = vld [vmem:[%s1045 + $0x1c] sm:$0xf]
        %v1824 = vpack.c.bf16 %v1811, %v1811
        %1826 = vrot.lane.b32.xlu0 %v1701, 64
        %v1827 = vpop.permute.xlu0 %1826
        %1829 = vrot.lane.b32.xlu0 %v1702, 64
        %v1830 = vpop.permute.xlu0 %1829
        %v1832 = vsel %vm1704, %v1827, 0
        %v1835 = vsel %vm1704, %v1830, 0
        %1837 = vmatprep.subr.bf16.mxu0 0
        %1838 = vmatpush1.bf16.xpose.msra.mxu0 %v1835
        %1839 = vmatprep.subr.bf16.mxu0 0
        %1840 = vmatpush1.bf16.xpose.msra.mxu0 0
        %1841 = vmatprep.subr.bf16.mxu0 0
        %1842 = vmatpush1.bf16.xpose.msra.mxu0 0
        %1843 = vmatprep.subr.bf16.mxu0 0
        %1844 = vmatpush1.bf16.xpose.msra.mxu0 0
        %1845 = vmatprep.subr.bf16.mxu0 0
        %1846 = vmatpush1.bf16.xpose.msra.mxu0 0
        %1847 = vmatprep.subr.bf16.mxu0 0
        %1848 = vmatpush1.bf16.xpose.msra.mxu0 0
        %1849 = vmatprep.subr.bf16.mxu0 0
        %1850 = vmatpush1.bf16.xpose.msra.mxu0 0
        %1851 = vmatprep.subr.bf16.mxu0 0
        %1852 = vmatpush1.bf16.xpose.msra.mxu0 0
        %1853 = vmatprep.subr.bf16.mxu0 0
        %1854 = vmatpush1.bf16.xpose.msra.mxu0 0
        %1855 = vmatprep.subr.bf16.mxu0 0
        %1856 = vmatpush1.bf16.xpose.msra.mxu0 0
        %1857 = vmatprep.subr.bf16.mxu0 0
        %1858 = vmatpush1.bf16.xpose.msra.mxu0 0
        %1859 = vmatprep.subr.bf16.mxu0 0
        %1860 = vmatpush1.bf16.xpose.msra.mxu0 0
        %1861 = vmatprep.subr.bf16.mxu0 0
        %1862 = vmatpush1.bf16.xpose.msra.mxu0 0
        %1863 = vmatprep.subr.bf16.mxu0 0
        %1864 = vmatpush1.bf16.xpose.msra.mxu0 0
        %1865 = vmatprep.subr.bf16.mxu0 0
        %1866 = vmatpush1.bf16.xpose.msra.mxu0 0
        %1867 = vmatprep.subr.bf16.mxu0 0
        %1868 = vmatpush1.bf16.xpose.msra.mxu0 0
        %1869 = vmatprep.mubr.bf16.mxu0 0
        %1870 = vmatmul.mubr.bf16.gmra.mrb[0].mxu0 %v1832
        %v1871 = vpop.f32.mrb[0].mxu0
        %v1872 = vadd.f32 0.0, %v1871
        %v1873 = vpop.f32.mrb[0].mxu0
        %v1874 = vpop.f32.mrb[0].mxu0
        %v1875 = vpop.f32.mrb[0].mxu0
        %1876 = vdwg.mxu0
        %v1877 = vmul.f32 %v1872, 0.125
        %v1878 = vsel %vm1752, %v1877, -inf
        %1879 = vmax.xlane.f32.xlu0 %v1878
        %v1880 = vpop.xlane.xlu0 %1879
        %v1881 = vsub.f32 %v1877, %v1880
        %v1882 = vmul.f32 %v1881, 1.442695
        %v1883 = vpow.pop %v1882
        %v1884 = vsel %vm1752, %v1883, 0.0
        %1885 = vadd.xlane.f32.xlu0 %v1884
        %v1886 = vpop.xlane.xlu0 %1885
        %v1887 = vrcp.pop %v1886
        %v1888 = vmul.f32 %v1883, %v1887
        %v1889 = vpack.c.bf16 %v1888, %v1888
        %1891 = vrot.lane.b32.xlu0 %v1703, 64
        %v1892 = vpop.permute.xlu0 %1891
        %v1894 = vsel %vm1765, %v1889, 0
        %v1897 = vand.u32 %v1892, %v1772
        %1899 = vmatprep.subr.bf16.mxu0 0
        %1900 = vmatpush1.bf16.msra.mxu0 %v1897
        %1901 = vmatprep.subr.bf16.mxu0 0
        %1902 = vmatpush1.bf16.msra.mxu0 0
        %1903 = vmatprep.subr.bf16.mxu0 0
        %1904 = vmatpush1.bf16.msra.mxu0 0
        %1905 = vmatprep.subr.bf16.mxu0 0
        %1906 = vmatpush1.bf16.msra.mxu0 0
        %1907 = vmatprep.subr.bf16.mxu0 0
        %1908 = vmatpush1.bf16.msra.mxu0 0
        %1909 = vmatprep.subr.bf16.mxu0 0
        %1910 = vmatpush1.bf16.msra.mxu0 0
        %1911 = vmatprep.subr.bf16.mxu0 0
        %1912 = vmatpush1.bf16.msra.mxu0 0
        %1913 = vmatprep.subr.bf16.mxu0 0
        %1914 = vmatpush1.bf16.msra.mxu0 0
        %1915 = vmatprep.subr.bf16.mxu0 0
        %1916 = vmatpush1.bf16.msra.mxu0 0
        %1917 = vmatprep.subr.bf16.mxu0 0
        %1918 = vmatpush1.bf16.msra.mxu0 0
        %1919 = vmatprep.subr.bf16.mxu0 0
        %1920 = vmatpush1.bf16.msra.mxu0 0
        %1921 = vmatprep.subr.bf16.mxu0 0
        %1922 = vmatpush1.bf16.msra.mxu0 0
        %1923 = vmatprep.subr.bf16.mxu0 0
        %1924 = vmatpush1.bf16.msra.mxu0 0
        %1925 = vmatprep.subr.bf16.mxu0 0
        %1926 = vmatpush1.bf16.msra.mxu0 0
        %1927 = vmatprep.subr.bf16.mxu0 0
        %1928 = vmatpush1.bf16.msra.mxu0 0
        %1929 = vmatprep.subr.bf16.mxu0 0
        %1930 = vmatpush1.bf16.msra.mxu0 0
        %1931 = vmatprep.mubr.bf16.mxu0 0
        %1932 = vmatmul.mubr.bf16.gmra.mrb[0].mxu0 %v1894
        %v1933 = vpop.f32.mrb[0].mxu0
        %v1934 = vadd.f32 0.0, %v1933
        %v1935 = vpop.f32.mrb[0].mxu0
        %v1936 = vpop.f32.mrb[0].mxu0
        %v1937 = vpop.f32.mrb[0].mxu0
        %1938 = vdwg.mxu0
        %v1939 = vld [vmem:[%s1045 + $0x20] sm:$0xf]
        %v1940 = vld [vmem:[%s1045 + $0x24] sm:$0xf]
        %v1941 = vld [vmem:[%s1045 + $0x28] sm:$0xf]
        %v1942 = vld [vmem:[%s1045 + $0x2c] sm:$0xf]
        %v1943 = vld [vmem:[%s1045 + $0x30] sm:$0xf]
        %v1944 = vld [vmem:[%s1045 + $0x34] sm:$0xf]
        %v1945 = vld [vmem:[%s1045 + $0x38] sm:$0xf]
        %v1946 = vld [vmem:[%s1045 + $0x3c] sm:$0xf]
        %v1947 = vpack.c.bf16 %v1934, %v1934
        %v1956 = vunpack.c.l.b16 %v1939
        %v1957 = vunpack.c.l.b16 %v1940
        %v1958 = vunpack.c.l.b16 %v1941
        %v1959 = vunpack.c.l.b16 %v1942
        %v1960 = vunpack.c.l.b16 %v1943
        %v1961 = vunpack.c.l.b16 %v1944
        %v1962 = vunpack.c.l.b16 %v1945
        %v1963 = vunpack.c.l.b16 %v1946
        %v1964 = vpack.c.b16 %v1957, %v1956
        %v1965 = vpack.c.b16 %v1959, %v1958
        %v1966 = vpack.c.b16 %v1961, %v1960
        %v1967 = vpack.c.b16 %v1963, %v1962
        %v1973 = vsel %vm1704, %v1947, 0
        %1975 = vmatprep.subr.bf16.mxu0 0
        %1976 = vmatpush1.bf16.msra.mxu0 %v1964
        %1977 = vmatprep.subr.bf16.mxu0 0
        %1978 = vmatpush1.bf16.msra.mxu0 %v1965
        %1979 = vmatprep.subr.bf16.mxu0 0
        %1980 = vmatpush1.bf16.msra.mxu0 %v1966
        %1981 = vmatprep.subr.bf16.mxu0 0
        %1982 = vmatpush1.bf16.msra.mxu0 %v1967
        %1983 = vmatprep.subr.bf16.mxu0 0
        %1984 = vmatpush1.bf16.msra.mxu0 0
        %1985 = vmatprep.subr.bf16.mxu0 0
        %1986 = vmatpush1.bf16.msra.mxu0 0
        %1987 = vmatprep.subr.bf16.mxu0 0
        %1988 = vmatpush1.bf16.msra.mxu0 0
        %1989 = vmatprep.subr.bf16.mxu0 0
        %1990 = vmatpush1.bf16.msra.mxu0 0
        %1991 = vmatprep.subr.bf16.mxu0 0
        %1992 = vmatpush1.bf16.msra.mxu0 0
        %1993 = vmatprep.subr.bf16.mxu0 0
        %1994 = vmatpush1.bf16.msra.mxu0 0
        %1995 = vmatprep.subr.bf16.mxu0 0
        %1996 = vmatpush1.bf16.msra.mxu0 0
        %1997 = vmatprep.subr.bf16.mxu0 0
        %1998 = vmatpush1.bf16.msra.mxu0 0
        %1999 = vmatprep.subr.bf16.mxu0 0
        %2000 = vmatpush1.bf16.msra.mxu0 0
        %2001 = vmatprep.subr.bf16.mxu0 0
        %2002 = vmatpush1.bf16.msra.mxu0 0
        %2003 = vmatprep.subr.bf16.mxu0 0
        %2004 = vmatpush1.bf16.msra.mxu0 0
        %2005 = vmatprep.subr.bf16.mxu0 0
        %2006 = vmatpush1.bf16.msra.mxu0 0
        %2007 = vmatprep.mubr.bf16.mxu0 0
        %2008 = vmatmul.mubr.bf16.gmra.mrb[0].mxu0 %v1973
        %v2009 = vpop.f32.mrb[0].mxu0
        %v2010 = vadd.f32 0.0, %v2009
        %v2011 = vpop.f32.mrb[0].mxu0
        %v2012 = vpop.f32.mrb[0].mxu0
        %v2013 = vpop.f32.mrb[0].mxu0
        %2014 = vdwg.mxu0
        %v2023 = vunpack.c.l.b16 %v1816
        %v2024 = vunpack.c.l.b16 %v1817
        %v2025 = vunpack.c.l.b16 %v1818
        %v2026 = vunpack.c.l.b16 %v1819
        %v2027 = vunpack.c.l.b16 %v1820
        %v2028 = vunpack.c.l.b16 %v1821
        %v2029 = vunpack.c.l.b16 %v1822
        %v2030 = vunpack.c.l.b16 %v1823
        %v2031 = vpack.c.b16 %v2024, %v2023
        %v2032 = vpack.c.b16 %v2026, %v2025
        %v2033 = vpack.c.b16 %v2028, %v2027
        %v2034 = vpack.c.b16 %v2030, %v2029
        %v2040 = vsel %vm1704, %v1824, 0
        %2042 = vmatprep.subr.bf16.mxu0 0
        %2043 = vmatpush1.bf16.msra.mxu0 %v2031
        %2044 = vmatprep.subr.bf16.mxu0 0
        %2045 = vmatpush1.bf16.msra.mxu0 %v2032
        %2046 = vmatprep.subr.bf16.mxu0 0
        %2047 = vmatpush1.bf16.msra.mxu0 %v2033
        %2048 = vmatprep.subr.bf16.mxu0 0
        %2049 = vmatpush1.bf16.msra.mxu0 %v2034
        %2050 = vmatprep.subr.bf16.mxu0 0
        %2051 = vmatpush1.bf16.msra.mxu0 0
        %2052 = vmatprep.subr.bf16.mxu0 0
        %2053 = vmatpush1.bf16.msra.mxu0 0
        %2054 = vmatprep.subr.bf16.mxu0 0
        %2055 = vmatpush1.bf16.msra.mxu0 0
        %2056 = vmatprep.subr.bf16.mxu0 0
        %2057 = vmatpush1.bf16.msra.mxu0 0
        %2058 = vmatprep.subr.bf16.mxu0 0
        %2059 = vmatpush1.bf16.msra.mxu0 0
        %2060 = vmatprep.subr.bf16.mxu0 0
        %2061 = vmatpush1.bf16.msra.mxu0 0
        %2062 = vmatprep.subr.bf16.mxu0 0
        %2063 = vmatpush1.bf16.msra.mxu0 0
        %2064 = vmatprep.subr.bf16.mxu0 0
        %2065 = vmatpush1.bf16.msra.mxu0 0
        %2066 = vmatprep.subr.bf16.mxu0 0
        %2067 = vmatpush1.bf16.msra.mxu0 0
        %2068 = vmatprep.subr.bf16.mxu0 0
        %2069 = vmatpush1.bf16.msra.mxu0 0
        %2070 = vmatprep.subr.bf16.mxu0 0
        %2071 = vmatpush1.bf16.msra.mxu0 0
        %2072 = vmatprep.subr.bf16.mxu0 0
        %2073 = vmatpush1.bf16.msra.mxu0 0
        %2074 = vmatprep.mubr.bf16.mxu0 0
        %2075 = vmatmul.mubr.bf16.gmra.mrb[0].mxu0 %v2040
        %v2076 = vpop.f32.mrb[0].mxu0
        %v2077 = vadd.f32 %v2010, %v2076
        %v2078 = vpop.f32.mrb[0].mxu0
        %v2079 = vpop.f32.mrb[0].mxu0
        %v2080 = vpop.f32.mrb[0].mxu0
        %2081 = vdwg.mxu0
        %v2082 = vadd.f32 %v1410, %v2077
        %v2083 = vld [vmem:[%s1053] sm:$0x1]
        %v2085 = vlaneseq
        %v2086 = vshrl.u32 %v2085, 7
        %v2087 = vsub.s32 0, %v2086
        %v2088 = vrot.slane %v2083, %v2087
        %v2090 = vadd.f32 %v2082, %v2088
        %v2091 = vld [vmem:[%s1061] sm:$0x1]
        %v2092 = vld [vmem:[%s1069] sm:$0x1]
        %v2093 = vsel %vm1413, %v2090, 0.0
        %2094 = vadd.xlane.f32.xlu0 %v2093
        %v2095 = vpop.xlane.xlu0 %2094
        %v2096 = vmul.f32 %v2095, %v1417
        %v2097 = vsub.f32 %v2090, %v2096
        %v2098 = vmul.f32 %v2097, %v2097
        %v2099 = vsel %vm1413, %v2098, 0.0
        %2100 = vadd.xlane.f32.xlu0 %v2099
        %v2101 = vpop.xlane.xlu0 %2100
        %v2102 = vmul.f32 %v2101, %v1417
        %v2103 = vadd.f32 %v2102, 1e-05
        %v2104 = vrsqrt.pop %v2103
        %v2105 = vmul.f32 %v2097, %v2104
        %v2107 = vlaneseq
        %v2108 = vshrl.u32 %v2107, 7
        %v2109 = vsub.s32 0, %v2108
        %v2110 = vrot.slane %v2091, %v2109
        %v2112 = vmul.f32 %v2105, %v2110
        %v2114 = vlaneseq
        %v2115 = vshrl.u32 %v2114, 7
        %v2116 = vsub.s32 0, %v2115
        %v2117 = vrot.slane %v2092, %v2116
        %v2119 = vadd.f32 %v2112, %v2117
        %v2120 = vld [vmem:[%s1233] sm:$0xff]
        %v2121 = vld [vmem:[%s1233 + $0x8] sm:$0xff]
        %v2122 = vld [vmem:[%s1233 + $0x10] sm:$0xff]
        %v2123 = vld [vmem:[%s1233 + $0x18] sm:$0xff]
        %v2124 = vld [vmem:[%s1233 + $0x20] sm:$0xff]
        %v2125 = vld [vmem:[%s1233 + $0x28] sm:$0xff]
        %v2126 = vld [vmem:[%s1233 + $0x30] sm:$0xff]
        %v2127 = vld [vmem:[%s1233 + $0x38] sm:$0xff]
        %v2128 = vld [vmem:[%s1233 + $0x40] sm:$0xff]
        %v2129 = vld [vmem:[%s1233 + $0x48] sm:$0xff]
        %v2130 = vld [vmem:[%s1233 + $0x50] sm:$0xff]
        %v2131 = vld [vmem:[%s1233 + $0x58] sm:$0xff]
        %v2132 = vld [vmem:[%s1233 + $0x60] sm:$0xff]
        %v2133 = vld [vmem:[%s1233 + $0x68] sm:$0xff]
        %v2134 = vld [vmem:[%s1233 + $0x70] sm:$0xff]
        %v2135 = vld [vmem:[%s1233 + $0x78] sm:$0xff]
        %v2136 = vld [vmem:[%s1233 + $0x80] sm:$0xff]
        %v2137 = vld [vmem:[%s1233 + $0x88] sm:$0xff]
        %v2138 = vld [vmem:[%s1233 + $0x90] sm:$0xff]
        %v2139 = vld [vmem:[%s1233 + $0x98] sm:$0xff]
        %v2140 = vld [vmem:[%s1233 + $0xa0] sm:$0xff]
        %v2141 = vld [vmem:[%s1233 + $0xa8] sm:$0xff]
        %v2142 = vld [vmem:[%s1233 + $0xb0] sm:$0xff]
        %v2143 = vld [vmem:[%s1233 + $0xb8] sm:$0xff]
        %v2144 = vld [vmem:[%s1233 + $0xc0] sm:$0xff]
        %v2145 = vld [vmem:[%s1233 + $0xc8] sm:$0xff]
        %v2146 = vld [vmem:[%s1233 + $0xd0] sm:$0xff]
        %v2147 = vld [vmem:[%s1233 + $0xd8] sm:$0xff]
        %v2148 = vld [vmem:[%s1233 + $0xe0] sm:$0xff]
        %v2149 = vld [vmem:[%s1233 + $0xe8] sm:$0xff]
        %v2150 = vld [vmem:[%s1233 + $0xf0] sm:$0xff]
        %v2151 = vld [vmem:[%s1233 + $0xf8] sm:$0xff]
        %v2152 = vpack.c.bf16 %v2119, %v2119
        %v2153 = vld [vmem:[%s1237] sm:$0xf]
        %v2155 = vlaneseq
        %v2156 = vshrl.u32 %v2155, 7
        %v2157 = vsub.s32 0, %v2156
        %v2158 = vrot.slane %v2153, %v2157
        %v2159 = vlaneseq
        %v2160 = vshrl.u32 %v2159, 7
        %v2161 = vsub.s32 1, %v2160
        %v2162 = vrot.slane %v2153, %v2161
        %v2163 = vlaneseq
        %v2164 = vshrl.u32 %v2163, 7
        %v2165 = vsub.s32 2, %v2164
        %v2166 = vrot.slane %v2153, %v2165
        %v2167 = vlaneseq
        %v2168 = vshrl.u32 %v2167, 7
        %v2169 = vsub.s32 3, %v2168
        %v2170 = vrot.slane %v2153, %v2169
        %v2207 = vunpack.c.l.b16 %v2120
        %v2208 = vunpack.c.h.b16 %v2120
        %v2209 = vunpack.c.l.b16 %v2121
        %v2210 = vunpack.c.h.b16 %v2121
        %v2211 = vunpack.c.l.b16 %v2122
        %v2212 = vunpack.c.h.b16 %v2122
        %v2213 = vunpack.c.l.b16 %v2123
        %v2214 = vunpack.c.h.b16 %v2123
        %v2215 = vunpack.c.l.b16 %v2124
        %v2216 = vunpack.c.h.b16 %v2124
        %v2217 = vunpack.c.l.b16 %v2125
        %v2218 = vunpack.c.h.b16 %v2125
        %v2219 = vunpack.c.l.b16 %v2126
        %v2220 = vunpack.c.h.b16 %v2126
        %v2221 = vunpack.c.l.b16 %v2127
        %v2222 = vunpack.c.h.b16 %v2127
        %v2223 = vunpack.c.l.b16 %v2128
        %v2224 = vunpack.c.h.b16 %v2128
        %v2225 = vunpack.c.l.b16 %v2129
        %v2226 = vunpack.c.h.b16 %v2129
        %v2227 = vunpack.c.l.b16 %v2130
        %v2228 = vunpack.c.h.b16 %v2130
        %v2229 = vunpack.c.l.b16 %v2131
        %v2230 = vunpack.c.h.b16 %v2131
        %v2231 = vunpack.c.l.b16 %v2132
        %v2232 = vunpack.c.h.b16 %v2132
        %v2233 = vunpack.c.l.b16 %v2133
        %v2234 = vunpack.c.h.b16 %v2133
        %v2235 = vunpack.c.l.b16 %v2134
        %v2236 = vunpack.c.h.b16 %v2134
        %v2237 = vunpack.c.l.b16 %v2135
        %v2238 = vunpack.c.h.b16 %v2135
        %v2239 = vunpack.c.l.b16 %v2136
        %v2240 = vunpack.c.h.b16 %v2136
        %v2241 = vunpack.c.l.b16 %v2137
        %v2242 = vunpack.c.h.b16 %v2137
        %v2243 = vunpack.c.l.b16 %v2138
        %v2244 = vunpack.c.h.b16 %v2138
        %v2245 = vunpack.c.l.b16 %v2139
        %v2246 = vunpack.c.h.b16 %v2139
        %v2247 = vunpack.c.l.b16 %v2140
        %v2248 = vunpack.c.h.b16 %v2140
        %v2249 = vunpack.c.l.b16 %v2141
        %v2250 = vunpack.c.h.b16 %v2141
        %v2251 = vunpack.c.l.b16 %v2142
        %v2252 = vunpack.c.h.b16 %v2142
        %v2253 = vunpack.c.l.b16 %v2143
        %v2254 = vunpack.c.h.b16 %v2143
        %v2255 = vunpack.c.l.b16 %v2144
        %v2256 = vunpack.c.h.b16 %v2144
        %v2257 = vunpack.c.l.b16 %v2145
        %v2258 = vunpack.c.h.b16 %v2145
        %v2259 = vunpack.c.l.b16 %v2146
        %v2260 = vunpack.c.h.b16 %v2146
        %v2261 = vunpack.c.l.b16 %v2147
        %v2262 = vunpack.c.h.b16 %v2147
        %v2263 = vunpack.c.l.b16 %v2148
        %v2264 = vunpack.c.h.b16 %v2148
        %v2265 = vunpack.c.l.b16 %v2149
        %v2266 = vunpack.c.h.b16 %v2149
        %v2267 = vunpack.c.l.b16 %v2150
        %v2268 = vunpack.c.h.b16 %v2150
        %v2269 = vunpack.c.l.b16 %v2151
        %v2270 = vunpack.c.h.b16 %v2151
        %v2271 = vpack.c.b16 %v2211, %v2207
        %v2272 = vpack.c.b16 %v2212, %v2208
        %v2273 = vpack.c.b16 %v2213, %v2209
        %v2274 = vpack.c.b16 %v2214, %v2210
        %v2275 = vpack.c.b16 %v2219, %v2215
        %v2276 = vpack.c.b16 %v2220, %v2216
        %v2277 = vpack.c.b16 %v2221, %v2217
        %v2278 = vpack.c.b16 %v2222, %v2218
        %v2279 = vpack.c.b16 %v2227, %v2223
        %v2280 = vpack.c.b16 %v2228, %v2224
        %v2281 = vpack.c.b16 %v2229, %v2225
        %v2282 = vpack.c.b16 %v2230, %v2226
        %v2283 = vpack.c.b16 %v2235, %v2231
        %v2284 = vpack.c.b16 %v2236, %v2232
        %v2285 = vpack.c.b16 %v2237, %v2233
        %v2286 = vpack.c.b16 %v2238, %v2234
        %v2287 = vpack.c.b16 %v2243, %v2239
        %v2288 = vpack.c.b16 %v2244, %v2240
        %v2289 = vpack.c.b16 %v2245, %v2241
        %v2290 = vpack.c.b16 %v2246, %v2242
        %v2291 = vpack.c.b16 %v2251, %v2247
        %v2292 = vpack.c.b16 %v2252, %v2248
        %v2293 = vpack.c.b16 %v2253, %v2249
        %v2294 = vpack.c.b16 %v2254, %v2250
        %v2295 = vpack.c.b16 %v2259, %v2255
        %v2296 = vpack.c.b16 %v2260, %v2256
        %v2297 = vpack.c.b16 %v2261, %v2257
        %v2298 = vpack.c.b16 %v2262, %v2258
        %v2299 = vpack.c.b16 %v2267, %v2263
        %v2300 = vpack.c.b16 %v2268, %v2264
        %v2301 = vpack.c.b16 %v2269, %v2265
        %v2302 = vpack.c.b16 %v2270, %v2266
        %2335 = vmatprep.subr.bf16.mxu0 %v2272
        %2336 = vmatpush1.bf16.msra.mxu0 %v2271
        %2337 = vmatprep.subr.bf16.mxu0 %v2276
        %2338 = vmatpush1.bf16.msra.mxu0 %v2275
        %2339 = vmatprep.subr.bf16.mxu0 %v2280
        %2340 = vmatpush1.bf16.msra.mxu0 %v2279
        %2341 = vmatprep.subr.bf16.mxu0 %v2284
        %2342 = vmatpush1.bf16.msra.mxu0 %v2283
        %2343 = vmatprep.subr.bf16.mxu0 %v2288
        %2344 = vmatpush1.bf16.msra.mxu0 %v2287
        %2345 = vmatprep.subr.bf16.mxu0 %v2292
        %2346 = vmatpush1.bf16.msra.mxu0 %v2291
        %2347 = vmatprep.subr.bf16.mxu0 %v2296
        %2348 = vmatpush1.bf16.msra.mxu0 %v2295
        %2349 = vmatprep.subr.bf16.mxu0 %v2300
        %2350 = vmatpush1.bf16.msra.mxu0 %v2299
        %2351 = vmatprep.subr.bf16.mxu0 0
        %2352 = vmatpush1.bf16.msra.mxu0 0
        %2353 = vmatprep.subr.bf16.mxu0 0
        %2354 = vmatpush1.bf16.msra.mxu0 0
        %2355 = vmatprep.subr.bf16.mxu0 0
        %2356 = vmatpush1.bf16.msra.mxu0 0
        %2357 = vmatprep.subr.bf16.mxu0 0
        %2358 = vmatpush1.bf16.msra.mxu0 0
        %2359 = vmatprep.subr.bf16.mxu0 0
        %2360 = vmatpush1.bf16.msra.mxu0 0
        %2361 = vmatprep.subr.bf16.mxu0 0
        %2362 = vmatpush1.bf16.msra.mxu0 0
        %2363 = vmatprep.subr.bf16.mxu0 0
        %2364 = vmatpush1.bf16.msra.mxu0 0
        %2365 = vmatprep.subr.bf16.mxu0 0
        %2366 = vmatpush1.bf16.msra.mxu0 0
        %2367 = vmatprep.mubr.bf16.mxu0 0
        %2368 = vmatmul.mubr.bf16.gmra.mrb[0].mxu0 %v2152
        %v2369 = vpop.f32.mrb[0].mxu0
        %v2370 = vadd.f32 %v2158, %v2369
        %v2371 = vpop.f32.mrb[0].mxu0
        %v2372 = vadd.f32 %v2162, %v2371
        %v2373 = vpop.f32.mrb[0].mxu0
        %v2374 = vpop.f32.mrb[0].mxu0
        %2375 = vdwg.mxu0
        %2376 = vmatprep.subr.bf16.mxu0 %v2274
        %2377 = vmatpush1.bf16.msra.mxu0 %v2273
        %2378 = vmatprep.subr.bf16.mxu0 %v2278
        %2379 = vmatpush1.bf16.msra.mxu0 %v2277
        %2380 = vmatprep.subr.bf16.mxu0 %v2282
        %2381 = vmatpush1.bf16.msra.mxu0 %v2281
        %2382 = vmatprep.subr.bf16.mxu0 %v2286
        %2383 = vmatpush1.bf16.msra.mxu0 %v2285
        %2384 = vmatprep.subr.bf16.mxu0 %v2290
        %2385 = vmatpush1.bf16.msra.mxu0 %v2289
        %2386 = vmatprep.subr.bf16.mxu0 %v2294
        %2387 = vmatpush1.bf16.msra.mxu0 %v2293
        %2388 = vmatprep.subr.bf16.mxu0 %v2298
        %2389 = vmatpush1.bf16.msra.mxu0 %v2297
        %2390 = vmatprep.subr.bf16.mxu0 %v2302
        %2391 = vmatpush1.bf16.msra.mxu0 %v2301
        %2392 = vmatprep.subr.bf16.mxu0 0
        %2393 = vmatpush1.bf16.msra.mxu0 0
        %2394 = vmatprep.subr.bf16.mxu0 0
        %2395 = vmatpush1.bf16.msra.mxu0 0
        %2396 = vmatprep.subr.bf16.mxu0 0
        %2397 = vmatpush1.bf16.msra.mxu0 0
        %2398 = vmatprep.subr.bf16.mxu0 0
        %2399 = vmatpush1.bf16.msra.mxu0 0
        %2400 = vmatprep.subr.bf16.mxu0 0
        %2401 = vmatpush1.bf16.msra.mxu0 0
        %2402 = vmatprep.subr.bf16.mxu0 0
        %2403 = vmatpush1.bf16.msra.mxu0 0
        %2404 = vmatprep.subr.bf16.mxu0 0
        %2405 = vmatpush1.bf16.msra.mxu0 0
        %2406 = vmatprep.subr.bf16.mxu0 0
        %2407 = vmatpush1.bf16.msra.mxu0 0
        %2408 = vmatprep.mubr.bf16.mxu0 0
        %2409 = vmatmul.mubr.bf16.gmra.mrb[0].mxu0 %v2152
        %v2410 = vpop.f32.mrb[0].mxu0
        %v2411 = vadd.f32 %v2166, %v2410
        %v2412 = vpop.f32.mrb[0].mxu0
        %v2413 = vadd.f32 %v2170, %v2412
        %v2414 = vpop.f32.mrb[0].mxu0
        %v2415 = vpop.f32.mrb[0].mxu0
        %2416 = vdwg.mxu0
        %v2417 = vmul.f32 %v2370, 0.5
        %v2418 = vmul.f32 %v2372, 0.5
        %v2419 = vmul.f32 %v2411, 0.5
        %v2420 = vmul.f32 %v2413, 0.5
        %v2421 = vmul.f32 %v2370, 0.70710677
        %v2422 = vmul.f32 %v2372, 0.70710677
        %v2423 = vmul.f32 %v2411, 0.70710677
        %v2424 = vmul.f32 %v2413, 0.70710677
        %v2425 = vand.u32 2147483647, %v2421
        %v2426 = vand.u32 2147483647, %v2422
        %v2427 = vand.u32 2147483647, %v2423
        %v2428 = vand.u32 2147483647, %v2424
        %v2429 = vmul.f32 %v2425, 0.3275911
        %v2430 = vmul.f32 %v2426, 0.3275911
        %v2431 = vmul.f32 %v2427, 0.3275911
        %v2432 = vmul.f32 %v2428, 0.3275911
        %v2433 = vadd.f32 %v2429, 1.0
        %v2434 = vadd.f32 %v2430, 1.0
        %v2435 = vadd.f32 %v2431, 1.0
        %v2436 = vadd.f32 %v2432, 1.0
        %v2437 = vrcp.pop %v2433
        %v2438 = vmul.f32 1.0, %v2437
        %v2439 = vrcp.pop %v2434
        %v2440 = vmul.f32 1.0, %v2439
        %v2441 = vrcp.pop %v2435
        %v2442 = vmul.f32 1.0, %v2441
        %v2443 = vrcp.pop %v2436
        %v2444 = vmul.f32 1.0, %v2443
        %v2445 = vmul.f32 %v2438, 1.0614054
        %v2446 = vmul.f32 %v2440, 1.0614054
        %v2447 = vmul.f32 %v2442, 1.0614054
        %v2448 = vmul.f32 %v2444, 1.0614054
        %v2449 = vsub.f32 %v2445, 1.4531521
        %v2450 = vsub.f32 %v2446, 1.4531521
        %v2451 = vsub.f32 %v2447, 1.4531521
        %v2452 = vsub.f32 %v2448, 1.4531521
        %v2453 = vmul.f32 %v2449, %v2438
        %v2454 = vmul.f32 %v2450, %v2440
        %v2455 = vmul.f32 %v2451, %v2442
        %v2456 = vmul.f32 %v2452, %v2444
        %v2457 = vadd.f32 %v2453, 1.4214138
        %v2458 = vadd.f32 %v2454, 1.4214138
        %v2459 = vadd.f32 %v2455, 1.4214138
        %v2460 = vadd.f32 %v2456, 1.4214138
        %v2461 = vmul.f32 %v2457, %v2438
        %v2462 = vmul.f32 %v2458, %v2440
        %v2463 = vmul.f32 %v2459, %v2442
        %v2464 = vmul.f32 %v2460, %v2444
        %v2465 = vsub.f32 %v2461, 0.28449672
        %v2466 = vsub.f32 %v2462, 0.28449672
        %v2467 = vsub.f32 %v2463, 0.28449672
        %v2468 = vsub.f32 %v2464, 0.28449672
        %v2469 = vmul.f32 %v2465, %v2438
        %v2470 = vmul.f32 %v2466, %v2440
        %v2471 = vmul.f32 %v2467, %v2442
        %v2472 = vmul.f32 %v2468, %v2444
        %v2473 = vadd.f32 %v2469, 0.2548296
        %v2474 = vadd.f32 %v2470, 0.2548296
        %v2475 = vadd.f32 %v2471, 0.2548296
        %v2476 = vadd.f32 %v2472, 0.2548296
        %v2477 = vmul.f32 %v2473, %v2438
        %v2478 = vmul.f32 %v2474, %v2440
        %v2479 = vmul.f32 %v2475, %v2442
        %v2480 = vmul.f32 %v2476, %v2444
        %v2481 = vsub.f32 0.0, %v2425
        %v2482 = vsub.f32 0.0, %v2426
        %v2483 = vsub.f32 0.0, %v2427
        %v2484 = vsub.f32 0.0, %v2428
        %v2485 = vmul.f32 %v2481, %v2425
        %v2486 = vmul.f32 %v2482, %v2426
        %v2487 = vmul.f32 %v2483, %v2427
        %v2488 = vmul.f32 %v2484, %v2428
        %v2489 = vmul.f32 %v2485, 1.442695
        %v2490 = vpow.pop %v2489
        %v2491 = vmul.f32 %v2486, 1.442695
        %v2492 = vpow.pop %v2491
        %v2493 = vmul.f32 %v2487, 1.442695
        %v2494 = vpow.pop %v2493
        %v2495 = vmul.f32 %v2488, 1.442695
        %v2496 = vpow.pop %v2495
        %v2497 = vmul.f32 %v2477, %v2490
        %v2498 = vmul.f32 %v2478, %v2492
        %v2499 = vmul.f32 %v2479, %v2494
        %v2500 = vmul.f32 %v2480, %v2496
        %v2501 = vsub.f32 1.0, %v2497
        %v2502 = vsub.f32 1.0, %v2498
        %v2503 = vsub.f32 1.0, %v2499
        %v2504 = vsub.f32 1.0, %v2500
        %vm2505 = vcmp.lt.f32.partialorder %v2421, 0.0
        %vm2506 = vcmp.lt.f32.partialorder %v2422, 0.0
        %vm2507 = vcmp.lt.f32.partialorder %v2423, 0.0
        %vm2508 = vcmp.lt.f32.partialorder %v2424, 0.0
        %v2509 = vsub.f32 0.0, %v2501
        %v2510 = vsub.f32 0.0, %v2502
        %v2511 = vsub.f32 0.0, %v2503
        %v2512 = vsub.f32 0.0, %v2504
        %v2513 = vsel %vm2505, %v2509, %v2501
        %v2514 = vsel %vm2506, %v2510, %v2502
        %v2515 = vsel %vm2507, %v2511, %v2503
        %v2516 = vsel %vm2508, %v2512, %v2504
        %v2517 = vadd.f32 %v2513, 1.0
        %v2518 = vadd.f32 %v2514, 1.0
        %v2519 = vadd.f32 %v2515, 1.0
        %v2520 = vadd.f32 %v2516, 1.0
        %v2521 = vmul.f32 %v2417, %v2517
        %v2522 = vmul.f32 %v2418, %v2518
        %v2523 = vmul.f32 %v2419, %v2519
        %v2524 = vmul.f32 %v2420, %v2520
        %v2525 = vld [vmem:[%s1242] sm:$0xf]
        %v2526 = vld [vmem:[%s1242 + $0x4] sm:$0xf]
        %v2527 = vld [vmem:[%s1242 + $0x8] sm:$0xf]
        %v2528 = vld [vmem:[%s1242 + $0xc] sm:$0xf]
        %v2529 = vld [vmem:[%s1242 + $0x10] sm:$0xf]
        %v2530 = vld [vmem:[%s1242 + $0x14] sm:$0xf]
        %v2531 = vld [vmem:[%s1242 + $0x18] sm:$0xf]
        %v2532 = vld [vmem:[%s1242 + $0x1c] sm:$0xf]
        %v2533 = vld [vmem:[%s1242 + $0x20] sm:$0xf]
        %v2534 = vld [vmem:[%s1242 + $0x24] sm:$0xf]
        %v2535 = vld [vmem:[%s1242 + $0x28] sm:$0xf]
        %v2536 = vld [vmem:[%s1242 + $0x2c] sm:$0xf]
        %v2537 = vld [vmem:[%s1242 + $0x30] sm:$0xf]
        %v2538 = vld [vmem:[%s1242 + $0x34] sm:$0xf]
        %v2539 = vld [vmem:[%s1242 + $0x38] sm:$0xf]
        %v2540 = vld [vmem:[%s1242 + $0x3c] sm:$0xf]
        %v2541 = vld [vmem:[%s1242 + $0x40] sm:$0xf]
        %v2542 = vld [vmem:[%s1242 + $0x44] sm:$0xf]
        %v2543 = vld [vmem:[%s1242 + $0x48] sm:$0xf]
        %v2544 = vld [vmem:[%s1242 + $0x4c] sm:$0xf]
        %v2545 = vld [vmem:[%s1242 + $0x50] sm:$0xf]
        %v2546 = vld [vmem:[%s1242 + $0x54] sm:$0xf]
        %v2547 = vld [vmem:[%s1242 + $0x58] sm:$0xf]
        %v2548 = vld [vmem:[%s1242 + $0x5c] sm:$0xf]
        %v2549 = vld [vmem:[%s1242 + $0x60] sm:$0xf]
        %v2550 = vld [vmem:[%s1242 + $0x64] sm:$0xf]
        %v2551 = vld [vmem:[%s1242 + $0x68] sm:$0xf]
        %v2552 = vld [vmem:[%s1242 + $0x6c] sm:$0xf]
        %v2553 = vld [vmem:[%s1242 + $0x70] sm:$0xf]
        %v2554 = vld [vmem:[%s1242 + $0x74] sm:$0xf]
        %v2555 = vld [vmem:[%s1242 + $0x78] sm:$0xf]
        %v2556 = vld [vmem:[%s1242 + $0x7c] sm:$0xf]
        %v2557 = vld [vmem:[%s1242 + $0x80] sm:$0xf]
        %v2558 = vld [vmem:[%s1242 + $0x84] sm:$0xf]
        %v2559 = vld [vmem:[%s1242 + $0x88] sm:$0xf]
        %v2560 = vld [vmem:[%s1242 + $0x8c] sm:$0xf]
        %v2561 = vld [vmem:[%s1242 + $0x90] sm:$0xf]
        %v2562 = vld [vmem:[%s1242 + $0x94] sm:$0xf]
        %v2563 = vld [vmem:[%s1242 + $0x98] sm:$0xf]
        %v2564 = vld [vmem:[%s1242 + $0x9c] sm:$0xf]
        %v2565 = vld [vmem:[%s1242 + $0xa0] sm:$0xf]
        %v2566 = vld [vmem:[%s1242 + $0xa4] sm:$0xf]
        %v2567 = vld [vmem:[%s1242 + $0xa8] sm:$0xf]
        %v2568 = vld [vmem:[%s1242 + $0xac] sm:$0xf]
        %v2569 = vld [vmem:[%s1242 + $0xb0] sm:$0xf]
        %v2570 = vld [vmem:[%s1242 + $0xb4] sm:$0xf]
        %v2571 = vld [vmem:[%s1242 + $0xb8] sm:$0xf]
        %v2572 = vld [vmem:[%s1242 + $0xbc] sm:$0xf]
        %v2573 = vld [vmem:[%s1242 + $0xc0] sm:$0xf]
        %v2574 = vld [vmem:[%s1242 + $0xc4] sm:$0xf]
        %v2575 = vld [vmem:[%s1242 + $0xc8] sm:$0xf]
        %v2576 = vld [vmem:[%s1242 + $0xcc] sm:$0xf]
        %v2577 = vld [vmem:[%s1242 + $0xd0] sm:$0xf]
        %v2578 = vld [vmem:[%s1242 + $0xd4] sm:$0xf]
        %v2579 = vld [vmem:[%s1242 + $0xd8] sm:$0xf]
        %v2580 = vld [vmem:[%s1242 + $0xdc] sm:$0xf]
        %v2581 = vld [vmem:[%s1242 + $0xe0] sm:$0xf]
        %v2582 = vld [vmem:[%s1242 + $0xe4] sm:$0xf]
        %v2583 = vld [vmem:[%s1242 + $0xe8] sm:$0xf]
        %v2584 = vld [vmem:[%s1242 + $0xec] sm:$0xf]
        %v2585 = vld [vmem:[%s1242 + $0xf0] sm:$0xf]
        %v2586 = vld [vmem:[%s1242 + $0xf4] sm:$0xf]
        %v2587 = vld [vmem:[%s1242 + $0xf8] sm:$0xf]
        %v2588 = vld [vmem:[%s1242 + $0xfc] sm:$0xf]
        %v2589 = vpack.c.bf16 %v2521, %v2521
        %v2590 = vpack.c.bf16 %v2522, %v2522
        %v2591 = vpack.c.bf16 %v2523, %v2523
        %v2592 = vpack.c.bf16 %v2524, %v2524
        %v2593 = vld [vmem:[%s1077] sm:$0x1]
        %v2595 = vlaneseq
        %v2596 = vshrl.u32 %v2595, 7
        %v2597 = vsub.s32 0, %v2596
        %v2598 = vrot.slane %v2593, %v2597
        %v2664 = vunpack.c.l.b16 %v2525
        %v2665 = vunpack.c.l.b16 %v2526
        %v2666 = vunpack.c.l.b16 %v2527
        %v2667 = vunpack.c.l.b16 %v2528
        %v2668 = vunpack.c.l.b16 %v2529
        %v2669 = vunpack.c.l.b16 %v2530
        %v2670 = vunpack.c.l.b16 %v2531
        %v2671 = vunpack.c.l.b16 %v2532
        %v2672 = vunpack.c.l.b16 %v2533
        %v2673 = vunpack.c.l.b16 %v2534
        %v2674 = vunpack.c.l.b16 %v2535
        %v2675 = vunpack.c.l.b16 %v2536
        %v2676 = vunpack.c.l.b16 %v2537
        %v2677 = vunpack.c.l.b16 %v2538
        %v2678 = vunpack.c.l.b16 %v2539
        %v2679 = vunpack.c.l.b16 %v2540
        %v2680 = vunpack.c.l.b16 %v2541
        %v2681 = vunpack.c.l.b16 %v2542
        %v2682 = vunpack.c.l.b16 %v2543
        %v2683 = vunpack.c.l.b16 %v2544
        %v2684 = vunpack.c.l.b16 %v2545
        %v2685 = vunpack.c.l.b16 %v2546
        %v2686 = vunpack.c.l.b16 %v2547
        %v2687 = vunpack.c.l.b16 %v2548
        %v2688 = vunpack.c.l.b16 %v2549
        %v2689 = vunpack.c.l.b16 %v2550
        %v2690 = vunpack.c.l.b16 %v2551
        %v2691 = vunpack.c.l.b16 %v2552
        %v2692 = vunpack.c.l.b16 %v2553
        %v2693 = vunpack.c.l.b16 %v2554
        %v2694 = vunpack.c.l.b16 %v2555
        %v2695 = vunpack.c.l.b16 %v2556
        %v2696 = vunpack.c.l.b16 %v2557
        %v2697 = vunpack.c.l.b16 %v2558
        %v2698 = vunpack.c.l.b16 %v2559
        %v2699 = vunpack.c.l.b16 %v2560
        %v2700 = vunpack.c.l.b16 %v2561
        %v2701 = vunpack.c.l.b16 %v2562
        %v2702 = vunpack.c.l.b16 %v2563
        %v2703 = vunpack.c.l.b16 %v2564
        %v2704 = vunpack.c.l.b16 %v2565
        %v2705 = vunpack.c.l.b16 %v2566
        %v2706 = vunpack.c.l.b16 %v2567
        %v2707 = vunpack.c.l.b16 %v2568
        %v2708 = vunpack.c.l.b16 %v2569
        %v2709 = vunpack.c.l.b16 %v2570
        %v2710 = vunpack.c.l.b16 %v2571
        %v2711 = vunpack.c.l.b16 %v2572
        %v2712 = vunpack.c.l.b16 %v2573
        %v2713 = vunpack.c.l.b16 %v2574
        %v2714 = vunpack.c.l.b16 %v2575
        %v2715 = vunpack.c.l.b16 %v2576
        %v2716 = vunpack.c.l.b16 %v2577
        %v2717 = vunpack.c.l.b16 %v2578
        %v2718 = vunpack.c.l.b16 %v2579
        %v2719 = vunpack.c.l.b16 %v2580
        %v2720 = vunpack.c.l.b16 %v2581
        %v2721 = vunpack.c.l.b16 %v2582
        %v2722 = vunpack.c.l.b16 %v2583
        %v2723 = vunpack.c.l.b16 %v2584
        %v2724 = vunpack.c.l.b16 %v2585
        %v2725 = vunpack.c.l.b16 %v2586
        %v2726 = vunpack.c.l.b16 %v2587
        %v2727 = vunpack.c.l.b16 %v2588
        %v2728 = vpack.c.b16 %v2665, %v2664
        %v2729 = vpack.c.b16 %v2667, %v2666
        %v2730 = vpack.c.b16 %v2669, %v2668
        %v2731 = vpack.c.b16 %v2671, %v2670
        %v2732 = vpack.c.b16 %v2673, %v2672
        %v2733 = vpack.c.b16 %v2675, %v2674
        %v2734 = vpack.c.b16 %v2677, %v2676
        %v2735 = vpack.c.b16 %v2679, %v2678
        %v2736 = vpack.c.b16 %v2681, %v2680
        %v2737 = vpack.c.b16 %v2683, %v2682
        %v2738 = vpack.c.b16 %v2685, %v2684
        %v2739 = vpack.c.b16 %v2687, %v2686
        %v2740 = vpack.c.b16 %v2689, %v2688
        %v2741 = vpack.c.b16 %v2691, %v2690
        %v2742 = vpack.c.b16 %v2693, %v2692
        %v2743 = vpack.c.b16 %v2695, %v2694
        %v2744 = vpack.c.b16 %v2697, %v2696
        %v2745 = vpack.c.b16 %v2699, %v2698
        %v2746 = vpack.c.b16 %v2701, %v2700
        %v2747 = vpack.c.b16 %v2703, %v2702
        %v2748 = vpack.c.b16 %v2705, %v2704
        %v2749 = vpack.c.b16 %v2707, %v2706
        %v2750 = vpack.c.b16 %v2709, %v2708
        %v2751 = vpack.c.b16 %v2711, %v2710
        %v2752 = vpack.c.b16 %v2713, %v2712
        %v2753 = vpack.c.b16 %v2715, %v2714
        %v2754 = vpack.c.b16 %v2717, %v2716
        %v2755 = vpack.c.b16 %v2719, %v2718
        %v2756 = vpack.c.b16 %v2721, %v2720
        %v2757 = vpack.c.b16 %v2723, %v2722
        %v2758 = vpack.c.b16 %v2725, %v2724
        %v2759 = vpack.c.b16 %v2727, %v2726
        %2792 = vmatprep.subr.bf16.mxu0 0
        %2793 = vmatpush1.bf16.msra.mxu0 %v2728
        %2794 = vmatprep.subr.bf16.mxu0 0
        %2795 = vmatpush1.bf16.msra.mxu0 %v2729
        %2796 = vmatprep.subr.bf16.mxu0 0
        %2797 = vmatpush1.bf16.msra.mxu0 %v2730
        %2798 = vmatprep.subr.bf16.mxu0 0
        %2799 = vmatpush1.bf16.msra.mxu0 %v2731
        %2800 = vmatprep.subr.bf16.mxu0 0
        %2801 = vmatpush1.bf16.msra.mxu0 %v2732
        %2802 = vmatprep.subr.bf16.mxu0 0
        %2803 = vmatpush1.bf16.msra.mxu0 %v2733
        %2804 = vmatprep.subr.bf16.mxu0 0
        %2805 = vmatpush1.bf16.msra.mxu0 %v2734
        %2806 = vmatprep.subr.bf16.mxu0 0
        %2807 = vmatpush1.bf16.msra.mxu0 %v2735
        %2808 = vmatprep.subr.bf16.mxu0 0
        %2809 = vmatpush1.bf16.msra.mxu0 %v2736
        %2810 = vmatprep.subr.bf16.mxu0 0
        %2811 = vmatpush1.bf16.msra.mxu0 %v2737
        %2812 = vmatprep.subr.bf16.mxu0 0
        %2813 = vmatpush1.bf16.msra.mxu0 %v2738
        %2814 = vmatprep.subr.bf16.mxu0 0
        %2815 = vmatpush1.bf16.msra.mxu0 %v2739
        %2816 = vmatprep.subr.bf16.mxu0 0
        %2817 = vmatpush1.bf16.msra.mxu0 %v2740
        %2818 = vmatprep.subr.bf16.mxu0 0
        %2819 = vmatpush1.bf16.msra.mxu0 %v2741
        %2820 = vmatprep.subr.bf16.mxu0 0
        %2821 = vmatpush1.bf16.msra.mxu0 %v2742
        %2822 = vmatprep.subr.bf16.mxu0 0
        %2823 = vmatpush1.bf16.msra.mxu0 %v2743
        %2824 = vmatprep.mubr.bf16.mxu0 %v2590
        %2825 = vmatmul.mubr.bf16.gmra.mrb[0].mxu0 %v2589
        %v2826 = vpop.f32.mrb[0].mxu0
        %v2827 = vadd.f32 %v2598, %v2826
        %v2828 = vpop.f32.mrb[0].mxu0
        %v2829 = vpop.f32.mrb[0].mxu0
        %v2830 = vpop.f32.mrb[0].mxu0
        %2831 = vdwg.mxu0
        %2832 = vmatprep.subr.bf16.mxu0 0
        %2833 = vmatpush1.bf16.msra.mxu0 %v2744
        %2834 = vmatprep.subr.bf16.mxu0 0
        %2835 = vmatpush1.bf16.msra.mxu0 %v2745
        %2836 = vmatprep.subr.bf16.mxu0 0
        %2837 = vmatpush1.bf16.msra.mxu0 %v2746
        %2838 = vmatprep.subr.bf16.mxu0 0
        %2839 = vmatpush1.bf16.msra.mxu0 %v2747
        %2840 = vmatprep.subr.bf16.mxu0 0
        %2841 = vmatpush1.bf16.msra.mxu0 %v2748
        %2842 = vmatprep.subr.bf16.mxu0 0
        %2843 = vmatpush1.bf16.msra.mxu0 %v2749
        %2844 = vmatprep.subr.bf16.mxu0 0
        %2845 = vmatpush1.bf16.msra.mxu0 %v2750
        %2846 = vmatprep.subr.bf16.mxu0 0
        %2847 = vmatpush1.bf16.msra.mxu0 %v2751
        %2848 = vmatprep.subr.bf16.mxu0 0
        %2849 = vmatpush1.bf16.msra.mxu0 %v2752
        %2850 = vmatprep.subr.bf16.mxu0 0
        %2851 = vmatpush1.bf16.msra.mxu0 %v2753
        %2852 = vmatprep.subr.bf16.mxu0 0
        %2853 = vmatpush1.bf16.msra.mxu0 %v2754
        %2854 = vmatprep.subr.bf16.mxu0 0
        %2855 = vmatpush1.bf16.msra.mxu0 %v2755
        %2856 = vmatprep.subr.bf16.mxu0 0
        %2857 = vmatpush1.bf16.msra.mxu0 %v2756
        %2858 = vmatprep.subr.bf16.mxu0 0
        %2859 = vmatpush1.bf16.msra.mxu0 %v2757
        %2860 = vmatprep.subr.bf16.mxu0 0
        %2861 = vmatpush1.bf16.msra.mxu0 %v2758
        %2862 = vmatprep.subr.bf16.mxu0 0
        %2863 = vmatpush1.bf16.msra.mxu0 %v2759
        %2864 = vmatprep.mubr.bf16.mxu0 %v2592
        %2865 = vmatmul.mubr.bf16.gmra.mrb[0].mxu0 %v2591
        %v2866 = vpop.f32.mrb[0].mxu0
        %v2867 = vadd.f32 %v2827, %v2866
        %v2868 = vpop.f32.mrb[0].mxu0
        %v2869 = vpop.f32.mrb[0].mxu0
        %v2870 = vpop.f32.mrb[0].mxu0
        %2871 = vdwg.mxu0
        %v2872 = vadd.f32 %v2090, %v2867
        %2873 = vst [vmem:[#allocation2] sm:$0x1f] %v2872
        %p2874 = scmp.eq.s32.totalorder %s63, 1
        // Predicated region
        $region193: #{frt_clip_vit_forward.1} parent=119 // pred_check
          %p2875 = pneg %p2874
        $region194: #{frt_clip_vit_forward.1} parent=119 // pred_check_branch
          %2877 = sbr.rel (%p2875) target = $region196
        $region195: #{frt_clip_vit_forward.1} parent=119 // pred_region
          %v2878 = vld [vmem:[#allocation20] sm:$0x1]
          %v2879 = vld [vmem:[#allocation21] sm:$0x1]
          %v2880 = vsel %vm1413, %v2872, 0.0
          %2881 = vadd.xlane.f32.xlu0 %v2880
          %v2882 = vpop.xlane.xlu0 %2881
          %v2883 = vmul.f32 %v2882, %v1417
          %v2884 = vsub.f32 %v2872, %v2883
          %v2885 = vmul.f32 %v2884, %v2884
          %v2886 = vsel %vm1413, %v2885, 0.0
          %2887 = vadd.xlane.f32.xlu0 %v2886
          %v2888 = vpop.xlane.xlu0 %2887
          %v2889 = vmul.f32 %v2888, %v1417
          %v2890 = vadd.f32 %v2889, 1e-05
          %v2891 = vrsqrt.pop %v2890
          %v2892 = vmul.f32 %v2884, %v2891
          %v2894 = vlaneseq
          %v2895 = vshrl.u32 %v2894, 7
          %v2896 = vsub.s32 0, %v2895
          %v2897 = vrot.slane %v2878, %v2896
          %v2899 = vmul.f32 %v2892, %v2897
          %v2901 = vlaneseq
          %v2902 = vshrl.u32 %v2901, 7
          %v2903 = vsub.s32 0, %v2902
          %v2904 = vrot.slane %v2879, %v2903
          %v2906 = vadd.f32 %v2899, %v2904
          %v2907 = vld [vmem:[#allocation23] sm:$0x1]
          %v2908 = vld [vmem:[#allocation24] sm:$0x1]
          %vm2909 = vcmask 1044481
          %v2910 = vsel %vm2909, %v2906, 0.0
          %2911 = vadd.xlane.f32.xlu0 %v2910
          %v2912 = vpop.xlane.xlu0 %2911
          %v2913 = vmul.f32 %v2912, %v1417
          %v2914 = vsub.f32 %v2906, %v2913
          %v2915 = vmul.f32 %v2914, %v2914
          %v2916 = vsel %vm2909, %v2915, 0.0
          %2917 = vadd.xlane.f32.xlu0 %v2916
          %v2918 = vpop.xlane.xlu0 %2917
          %v2919 = vmul.f32 %v2918, %v1417
          %v2920 = vadd.f32 %v2919, 1e-05
          %v2921 = vrsqrt.pop %v2920
          %v2922 = vmul.f32 %v2914, %v2921
          %v2924 = vlaneseq
          %v2925 = vshrl.u32 %v2924, 7
          %v2926 = vsub.s32 0, %v2925
          %v2927 = vrot.slane %v2907, %v2926
          %v2929 = vmul.f32 %v2922, %v2927
          %v2931 = vlaneseq
          %v2932 = vshrl.u32 %v2931, 7
          %v2933 = vsub.s32 0, %v2932
          %v2934 = vrot.slane %v2908, %v2933
          %v2936 = vadd.f32 %v2929, %v2934
          %v2937 = vld [vmem:[#allocation26] sm:$0x1]
          %v2938 = vld [vmem:[#allocation27] sm:$0x1]
          %v2939 = vsel %vm2909, %v2936, 0.0
          %2940 = vadd.xlane.f32.xlu0 %v2939
          %v2941 = vpop.xlane.xlu0 %2940
          %v2942 = vmul.f32 %v2941, %v1417
          %v2943 = vsub.f32 %v2936, %v2942
          %v2944 = vmul.f32 %v2943, %v2943
          %v2945 = vsel %vm2909, %v2944, 0.0
          %2946 = vadd.xlane.f32.xlu0 %v2945
          %v2947 = vpop.xlane.xlu0 %2946
          %v2948 = vmul.f32 %v2947, %v1417
          %v2949 = vadd.f32 %v2948, 1e-05
          %v2950 = vrsqrt.pop %v2949
          %v2951 = vmul.f32 %v2943, %v2950
          %v2953 = vlaneseq
          %v2954 = vshrl.u32 %v2953, 7
          %v2955 = vsub.s32 0, %v2954
          %v2956 = vrot.slane %v2937, %v2955
          %v2958 = vmul.f32 %v2951, %v2956
          %v2960 = vlaneseq
          %v2961 = vshrl.u32 %v2960, 7
          %v2962 = vsub.s32 0, %v2961
          %v2963 = vrot.slane %v2938, %v2962
          %v2965 = vadd.f32 %v2958, %v2963
          %v2967 = vrot.slane %v2965, 1
          %vm2969 = vcmask 1043456
          %v2970 = vsel %vm2969, %v2967, 0.0
          %v2971 = vrot.slane %v2970, 4
          %v2972 = vadd.f32 %v2970, %v2971
          %v2973 = vrot.slane %v2972, 2
          %v2974 = vadd.f32 %v2972, %v2973
          %v2975 = vrot.slane %v2974, 1
          %v2976 = vadd.f32 %v2974, %v2975
          %v2977 = vmul.f32 %v2976, 0.25
          %v2978 = vld [vmem:[%s23] sm:$0xf]
          %v2979 = vld [vmem:[%s23 + $0x4] sm:$0xf]
          %v2980 = vld [vmem:[%s23 + $0x8] sm:$0xf]
          %v2981 = vld [vmem:[%s23 + $0xc] sm:$0xf]
          %v2982 = vld [vmem:[%s23 + $0x10] sm:$0xf]
          %v2983 = vld [vmem:[%s23 + $0x14] sm:$0xf]
          %v2984 = vld [vmem:[%s23 + $0x18] sm:$0xf]
          %v2985 = vld [vmem:[%s23 + $0x1c] sm:$0xf]
          %v2986 = vld [vmem:[%s23 + $0x20] sm:$0xf]
          %v2987 = vld [vmem:[%s23 + $0x24] sm:$0xf]
          %v2988 = vld [vmem:[%s23 + $0x28] sm:$0xf]
          %v2989 = vld [vmem:[%s23 + $0x2c] sm:$0xf]
          %v2990 = vld [vmem:[%s23 + $0x30] sm:$0xf]
          %v2991 = vld [vmem:[%s23 + $0x34] sm:$0xf]
          %v2992 = vld [vmem:[%s23 + $0x38] sm:$0xf]
          %v2993 = vld [vmem:[%s23 + $0x3c] sm:$0xf]
          %v2994 = vpack.c.bf16 %v2977, %v2977
          %v2995 = vld [vmem:[#allocation29] sm:$0x1]
          %v3012 = vunpack.c.l.b16 %v2978
          %v3013 = vunpack.c.l.b16 %v2979
          %v3014 = vunpack.c.l.b16 %v2980
          %v3015 = vunpack.c.l.b16 %v2981
          %v3016 = vunpack.c.l.b16 %v2982
          %v3017 = vunpack.c.l.b16 %v2983
          %v3018 = vunpack.c.l.b16 %v2984
          %v3019 = vunpack.c.l.b16 %v2985
          %v3020 = vunpack.c.l.b16 %v2986
          %v3021 = vunpack.c.l.b16 %v2987
          %v3022 = vunpack.c.l.b16 %v2988
          %v3023 = vunpack.c.l.b16 %v2989
          %v3024 = vunpack.c.l.b16 %v2990
          %v3025 = vunpack.c.l.b16 %v2991
          %v3026 = vunpack.c.l.b16 %v2992
          %v3027 = vunpack.c.l.b16 %v2993
          %v3028 = vpack.c.b16 %v3013, %v3012
          %v3029 = vpack.c.b16 %v3015, %v3014
          %v3030 = vpack.c.b16 %v3017, %v3016
          %v3031 = vpack.c.b16 %v3019, %v3018
          %v3032 = vpack.c.b16 %v3021, %v3020
          %v3033 = vpack.c.b16 %v3023, %v3022
          %v3034 = vpack.c.b16 %v3025, %v3024
          %v3035 = vpack.c.b16 %v3027, %v3026
          %3044 = vmatprep.subr.bf16.mxu0 0
          %3045 = vmatpush1.bf16.msra.mxu0 %v3028
          %3046 = vmatprep.subr.bf16.mxu0 0
          %3047 = vmatpush1.bf16.msra.mxu0 %v3029
          %3048 = vmatprep.subr.bf16.mxu0 0
          %3049 = vmatpush1.bf16.msra.mxu0 %v3030
          %3050 = vmatprep.subr.bf16.mxu0 0
          %3051 = vmatpush1.bf16.msra.mxu0 %v3031
          %3052 = vmatprep.subr.bf16.mxu0 0
          %3053 = vmatpush1.bf16.msra.mxu0 %v3032
          %3054 = vmatprep.subr.bf16.mxu0 0
          %3055 = vmatpush1.bf16.msra.mxu0 %v3033
          %3056 = vmatprep.subr.bf16.mxu0 0
          %3057 = vmatpush1.bf16.msra.mxu0 %v3034
          %3058 = vmatprep.subr.bf16.mxu0 0
          %3059 = vmatpush1.bf16.msra.mxu0 %v3035
          %3060 = vmatprep.subr.bf16.mxu0 0
          %3061 = vmatpush1.bf16.msra.mxu0 0
          %3062 = vmatprep.subr.bf16.mxu0 0
          %3063 = vmatpush1.bf16.msra.mxu0 0
          %3064 = vmatprep.subr.bf16.mxu0 0
          %3065 = vmatpush1.bf16.msra.mxu0 0
          %3066 = vmatprep.subr.bf16.mxu0 0
          %3067 = vmatpush1.bf16.msra.mxu0 0
          %3068 = vmatprep.subr.bf16.mxu0 0
          %3069 = vmatpush1.bf16.msra.mxu0 0
          %3070 = vmatprep.subr.bf16.mxu0 0
          %3071 = vmatpush1.bf16.msra.mxu0 0
          %3072 = vmatprep.subr.bf16.mxu0 0
          %3073 = vmatpush1.bf16.msra.mxu0 0
          %3074 = vmatprep.subr.bf16.mxu0 0
          %3075 = vmatpush1.bf16.msra.mxu0 0
          %3076 = vmatprep.mubr.bf16.mxu0 0
          %3077 = vmatmul.mubr.bf16.gmra.mrb[0].mxu0 %v2994
          %v3078 = vpop.f32.mrb[0].mxu0
          %v3079 = vadd.f32 %v2995, %v3078
          %v3080 = vpop.f32.mrb[0].mxu0
          %v3081 = vpop.f32.mrb[0].mxu0
          %v3082 = vpop.f32.mrb[0].mxu0
          %3083 = vdwg.mxu0
          %vm3084 = vcmask 73728
          %3085 = vst.msk [vmem:[%s1223] sm:$0x1] %vm3084, %v3079
        $region196: #{frt_clip_vit_forward.1} parent=119 // pred_fallthru
          _
        %s3086 = sand.u32 %s668, 1
        %s3087 = scalar_lea.sflag [#allocation5], %s3086
        %s3088 = sand.u32 %s668, 1
        %s3089 = scalar_lea.vmem [#allocation30], %s3088
        // Predicated region
        $region197: #{frt_clip_vit_forward.1} parent=119 // pred_check
          %p3090 = pneg %p678
        $region198: #{frt_clip_vit_forward.1} parent=119 // pred_check_branch
          %3092 = sbr.rel (%p3090) target = $region200
        $region199: #{frt_clip_vit_forward.1} parent=119 // pred_region
          %s3094 = ssub.s32 16, 16
          %3095 = vsyncadd %s3087, %s3094
          %s3096 = smul.addr %s62, 16
          %s3097 = scalar_lea.hbm %s25, %s3096
          %s3099 = sshll.u32 %s3089, 4
          %s3100 = int_to_ptr.vmem [resolvable:$true] %s3099
          %3102 = dma.vmem_to_hbm [thread:$0]  %s3100, 16, %s3097, %s3087
        $region200: #{frt_clip_vit_forward.1} parent=119 // pred_fallthru
          _
      $region120: #{frt_clip_vit_forward.1} parent=5 // pred_fallthru
        _
      %p3103 = scmp.le.s32.totalorder 2, %s53
      // Predicated region
      $region201: #{frt_clip_vit_forward.1} parent=5 // pred_check
        %p3104 = pneg %p3103
      $region202: #{frt_clip_vit_forward.1} parent=5 // pred_check_branch
        %3106 = sbr.rel (%p3104) target = $region204
      $region203: #{frt_clip_vit_forward.1} parent=5 // pred_region
        %s3107 = ssub.s32 %s53, 2
        // Predicated region
        $region205: #{frt_clip_vit_forward.1} parent=203 // pred_check
          %p3108 = pneg %p684
        $region206: #{frt_clip_vit_forward.1} parent=203 // pred_check_branch
          %3110 = sbr.rel (%p3108) target = $region208
        $region207: #{frt_clip_vit_forward.1} parent=203 // pred_region
          %s3111 = sand.u32 %s669, 1
          %s3112 = scalar_lea.sflag [#allocation5], %s3111
          %s3113 = sand.u32 %s669, 1
          %s3114 = scalar_lea.vmem [#allocation30], %s3113
          %3115 = dma.done %s3112, 16
        $region208: #{frt_clip_vit_forward.1} parent=203 // pred_fallthru
          _
      $region204: #{frt_clip_vit_forward.1} parent=5 // pred_fallthru
        _
    $region6: #{frt_clip_vit_forward.1} parent=1 // loop_footer
      %s57 = sadd.s32 1, %s53
    $region7: #{frt_clip_vit_forward.1} parent=1 // loop_footer_branch
      %52 = sbr.rel target = $region3
    $region8: #{frt_clip_vit_forward.1} parent=1 // loop_exit
      _
    %3116 = vsyncpa [#allocation4], 1
    %s3117 = scalar_lea.sflag [#allocation4], 1
    %3118 = vsyncpa %s3117, 1
    %3119 = vsyncpa [#allocation7], 1
    %s3120 = scalar_lea.sflag [#allocation7], 1
    %3121 = vsyncpa %s3120, 1
    %3122 = vsyncpa [#allocation10], 1
    %s3123 = scalar_lea.sflag [#allocation10], 1
    %3124 = vsyncpa %s3123, 1
    %3125 = vsyncpa [#allocation13], 1
    %s3126 = scalar_lea.sflag [#allocation13], 1
    %3127 = vsyncpa %s3126, 1
    %3128 = vsyncpa [#allocation16], 1
    %s3129 = scalar_lea.sflag [#allocation16], 1
    %3130 = vsyncpa %s3129, 1
    %3131 = vsyncpa [#allocation19], 1
    %s3132 = scalar_lea.sflag [#allocation19], 1
    %3133 = vsyncpa %s3132, 1
    %3134 = vsyncpa [#allocation22], 1
    %3135 = vsyncpa [#allocation25], 1
    %3136 = vsyncpa [#allocation28], 1
    %3137 = vsyncpa [#allocation5], 1
    %s3138 = scalar_lea.sflag [#allocation5], 1
    %3139 = vsyncpa %s3138, 1

</llo_original>
